<compile_context>
chip_gen: v7x
topology: tpu7x:2x2x1
jax: 0.10.0
libtpu: 0.0.40
codegen_flags: <defaults>
</compile_context>

<pallas_src>
import math

import jax
import jax.numpy as jnp
import numpy as np
from jax.experimental import pallas as pl
from jax.experimental.pallas import tpu as pltpu

NUM_ACTIONS = 9
OUT_PAD = 128   # lane-dense padded width of the final head
CP = 128        # lane-padded channel count used for all conv activations


# --------------------------- fused Pallas kernel -----------------------------

def _fused_net_kernel(p1_ref, w1_ref, b1_ref, w2_ref, b2_ref, w3_ref, b3_ref,
                      wfc1_ref, bfc1_ref, wout_ref, bout_ref, o_ref):
    """Whole forward pass for one batch block; every ref lives in VMEM."""
    TB = p1_ref.shape[0]

    # ---- conv1: single im2col dot, K=27 (1/255 folded into w1) --------------
    p1 = p1_ref[...].reshape(TB * 64, 27)                       # bf16
    h = jnp.dot(p1, w1_ref[...], preferred_element_type=jnp.float32) + b1_ref[...]
    h = jnp.maximum(h, 0.0).astype(jnp.bfloat16).reshape(TB, 8, 8, CP)

    # ---- conv2 / conv3: 3 accumulating dots per layer (dx taps merged on K) -
    def conv3x3_relu(x, w_ref, b_ref):
        # x: (TB, H, W, 128) bf16; w_ref: (3, 384, 128) bf16; b_ref: (1, 128) f32
        _, H, W, _ = x.shape
        Ho, Wo = H - 2, W - 2
        acc = jnp.zeros((TB * Ho * Wo, CP), jnp.float32)
        for dy in range(3):
            row = x[:, dy:dy + Ho, :, :]                        # (TB, Ho, W, 128)
            # 128-lane pieces -> vreg-aligned concat along the contraction dim.
            patch = jnp.concatenate(
                [row[:, :, dx:dx + Wo, :] for dx in range(3)],
                axis=-1).reshape(TB * Ho * Wo, 3 * CP)
            acc = acc + jnp.dot(patch, w_ref[dy],
                                preferred_element_type=jnp.float32)
        y = jnp.maximum(acc + b_ref[...], 0.0).astype(jnp.bfloat16)
        return y.reshape(TB, Ho, Wo, CP)

    h = conv3x3_relu(h, w2_ref, b2_ref)          # (TB, 6, 6, 128)
    h = conv3x3_relu(h, w3_ref, b3_ref)          # (TB, 4, 4, 128)

    # ---- fc1: 4 accumulating dots of K=512 (ww taps concatenated on lanes) --
    # wfc1 rows were pre-permuted at init from torch (c,h,w) order to (h,(w,c)).
    acc = jnp.zeros((TB, 256), jnp.float32)
    for hh in range(4):
        v = jnp.concatenate([h[:, hh, ww, :] for ww in range(4)], axis=-1)
        acc = acc + jnp.dot(v, wfc1_ref[hh], preferred_element_type=jnp.float32)
    fc1 = jnp.maximum(acc + bfc1_ref[...], 0.0).astype(jnp.bfloat16)

    # ---- head: lane-dense (padded to 128 outputs) ----------------------------
    o_ref[...] = jnp.dot(fc1, wout_ref[...],
                         preferred_element_type=jnp.float32) + bout_ref[...]
    # TODO(synk): if batch blocks grow large enough to create vreg pressure,
    # switch the unrolled dy/hh Python loops to lax.fori_loop(..., unroll=True).


# ------------------------------ wrapper ---------------------------------------

def net_forward(params, x_nchw, num_actions=NUM_ACTIONS, tb=256):
    B, C, H, W = x_nchw.shape
    assert C == 3 and H == 10 and W == 10, "net assumes 3x10x10 inputs (-> 4x4 after convs)"

    # NHWC + conv1 im2col in the wrapper (cin=3): one (B, 64, 27) bf16 operand,
    # row order (dy, dx, c) matching the packed w1.
    x = jnp.transpose(x_nchw, (0, 2, 3, 1)).astype(jnp.float32)
    cols = [x[:, dy:dy + 8, dx:dx + 8, :] for dy in range(3) for dx in range(3)]
    p1 = jnp.concatenate(cols, axis=-1).reshape(B, 64, 27).astype(jnp.bfloat16)

    # Batch-parallel grid; weights stay resident via constant index maps.
    # TODO(synk): on v7x keep tb<=256-512 (64 MiB VMEM); v5e/v6e can use larger.
    TB = min(B, tb)
    grid = (pl.cdiv(B, TB),)

    def full(shape):
        return pl.BlockSpec(shape, lambda i: (0,) * len(shape))

    p = params
    out_padded = pl.pallas_call(
        _fused_net_kernel,
        out_shape=jax.ShapeDtypeStruct((B, OUT_PAD), jnp.float32),
        grid=grid,
        in_specs=[
            pl.BlockSpec((TB, 64, 27), lambda i: (i, 0, 0)),
            full(p["w1"].shape), full(p["b1"].shape),
            full(p["w2"].shape), full(p["b2"].shape),
            full(p["w3"].shape), full(p["b3"].shape),
            full(p["wfc1"].shape), full(p["bfc1"].shape),
            full(p["wout"].shape), full(p["bout"].shape),
        ],
        out_specs=pl.BlockSpec((TB, OUT_PAD), lambda i: (i, 0)),
        compiler_params=pltpu.CompilerParams(
            dimension_semantics=("parallel",),
            vmem_limit_bytes=64 * 1024 * 1024),
    )(p1, p["w1"], p["b1"], p["w2"], p["b2"], p["w3"], p["b3"],
      p["wfc1"], p["bfc1"], p["wout"], p["bout"])
    return out_padded[:, :num_actions]


net_forward_jit = jax.jit(net_forward, static_argnames=("num_actions", "tb"))


# --------------------------- parameter init -----------------------------------
# Weights are stored kernel-ready (no per-step reshape/transpose/cast):
#   conv1 w: (27, 128)      bf16, rows (dy,dx,c), 1/255 folded, cout padded 32->128
#   conv2 w: (3, 384, 128)  bf16, per-dy rows (dx, c_pad), cin/cout padded to 128
#   conv3 w: (3, 384, 128)  bf16, per-dy rows (dx, c_pad), cin padded to 128
#   fc1  w: (4, 512, 256)   bf16, rows permuted torch (c,h,w) -> (h,(w,c))
#   head w: (256, 128)      bf16, zero-padded from num_actions to 128 lanes
# Zero-padding channels is exact: padded columns get bias 0 -> relu -> 0, and the
# matching padded weight rows of the next layer are 0.

def init_params(key, num_actions=NUM_ACTIONS):
    assert num_actions <= OUT_PAD
    gain = math.sqrt(2.0)  # nn.init.calculate_gain('relu')
    ortho = jax.nn.initializers.orthogonal(scale=gain)
    ks = jax.random.split(key, 5)

    def conv_w(k_, cin, cout):
        # Mirror torch: orthogonal_ on (cout, cin*kh*kw) viewed as OIHW, then
        # re-order to (kh, kw, cin, cout).
        w = ortho(k_, (cout, cin * 9), jnp.float32).reshape(cout, cin, 3, 3)
        return jnp.transpose(w, (2, 3, 1, 0))

    def linear_wb(k_, fan_in, fan_out):
        # Deterministic stand-in for torch's default Linear init (+-1/sqrt(fan_in)).
        kw, kb = jax.random.split(k_)
        bound = 1.0 / math.sqrt(fan_in)
        w = jax.random.uniform(kw, (fan_in, fan_out), jnp.float32, -bound, bound)
        b = jax.random.uniform(kb, (fan_out,), jnp.float32, -bound, bound)
        return w, b

    C1, C2, C3 = 32, 64, 128

    w1 = conv_w(ks[0], 3, C1) / 255.0                      # fold inputs/255.0 (bf16-accurate)
    w1 = jnp.pad(w1, ((0, 0), (0, 0), (0, 0), (0, CP - C1))).reshape(27, CP)

    w2 = conv_w(ks[1], C1, C2)
    w2 = jnp.pad(w2, ((0, 0), (0, 0), (0, CP - C1), (0, CP - C2))).reshape(3, 3 * CP, CP)

    w3 = conv_w(ks[2], C2, C3)
    w3 = jnp.pad(w3, ((0, 0), (0, 0), (0, CP - C2), (0, 0))).reshape(3, 3 * CP, CP)

    wfc1, bfc1 = linear_wb(ks[3], C3 * 4 * 4, 256)         # rows in torch (c,h,w) order
    wfc1 = wfc1.reshape(C3, 4, 4, 256).transpose(1, 2, 0, 3).reshape(4, 4 * C3, 256)

    wout, bout = linear_wb(ks[4], 256, num_actions)
    wout = jnp.pad(wout, ((0, 0), (0, OUT_PAD - num_actions)))   # lane-dense head
    bout = jnp.pad(bout, ((0, OUT_PAD - num_actions),))

    bf = lambda a: a.astype(jnp.bfloat16)
    zeros = lambda n: jnp.zeros((1, n), jnp.float32)
    return dict(
        w1=bf(w1), b1=zeros(CP),
        w2=bf(w2), b2=zeros(CP),
        w3=bf(w3), b3=zeros(CP),
        wfc1=bf(wfc1), bfc1=bfc1.reshape(1, 256).astype(jnp.float32),
        wout=bf(wout), bout=bout.reshape(1, OUT_PAD).astype(jnp.float32),
    )
    # TODO(synk): dueling head (use_dueling=True) not implemented; default path only.


# -------------------------- pure-JAX reference --------------------------------

def net_reference(params, x_nchw, num_actions=NUM_ACTIONS):
    x = jnp.transpose(x_nchw, (0, 2, 3, 1)).astype(jnp.bfloat16)

    def conv(x, w_packed, b, cin):
        w = w_packed.reshape(3, 3, cin, CP)                 # HWIO
        y = jax.lax.conv_general_dilated(
            x, w, (1, 1), "VALID",
            dimension_numbers=("NHWC", "HWIO", "NHWC"),
            preferred_element_type=jnp.float32)
        return jnp.maximum(y + b.reshape(1, 1, 1, -1), 0.0).astype(jnp.bfloat16)

    h = conv(x, params["w1"], params["b1"], 3)
    h = conv(h, params["w2"], params["b2"], CP)
    h = conv(h, params["w3"], params["b3"], CP)
    B = h.shape[0]
    hf = h.reshape(B, 16 * CP)                              # (h, w, c) flatten order
    fc1 = jnp.maximum(
        jnp.dot(hf, params["wfc1"].reshape(16 * CP, 256),
                preferred_element_type=jnp.float32) + params["bfc1"], 0.0)
    out = jnp.dot(fc1.astype(jnp.bfloat16), params["wout"],
                  preferred_element_type=jnp.float32) + params["bout"]
    return out[:, :num_actions]


# ------------------------------- main ------------------------------------------

if __name__ == "__main__":
    key = jax.random.PRNGKey(0)
    kx, kp = jax.random.split(key)
    # batch=2, 3 channels, 10x10 spatial (-> 4x4 after three valid 3x3 convs)
    x = jax.random.uniform(kx, (2, 3, 10, 10), jnp.float32, 0.0, 255.0)
    params = init_params(kp, num_actions=NUM_ACTIONS)

    out = net_forward_jit(params, x, num_actions=NUM_ACTIONS)
    out = jax.block_until_ready(out)
    assert out.shape == (2, NUM_ACTIONS) and out.dtype == jnp.float32

    ref = net_reference(params, x, num_actions=NUM_ACTIONS)
    np.testing.assert_allclose(np.asarray(out), np.asarray(ref), rtol=2e-2, atol=2e-2)

    print("KERNEL_OK")
</pallas_src>

<mosaic_0001>
module attributes {stable_mosaic.version = 11 : i64} {
  func.func @_fused_net_kernel(%arg0: i32, %arg1: memref<2x64x27xbf16, #tpu.memory_space<vmem>>, %arg2: memref<27x128xbf16, #tpu.memory_space<vmem>>, %arg3: memref<1x128xf32, #tpu.memory_space<vmem>>, %arg4: memref<3x384x128xbf16, #tpu.memory_space<vmem>>, %arg5: memref<1x128xf32, #tpu.memory_space<vmem>>, %arg6: memref<3x384x128xbf16, #tpu.memory_space<vmem>>, %arg7: memref<1x128xf32, #tpu.memory_space<vmem>>, %arg8: memref<4x512x256xbf16, #tpu.memory_space<vmem>>, %arg9: memref<1x256xf32, #tpu.memory_space<vmem>>, %arg10: memref<256x128xbf16, #tpu.memory_space<vmem>>, %arg11: memref<1x128xf32, #tpu.memory_space<vmem>>, %arg12: memref<2x128xf32, #tpu.memory_space<vmem>>) attributes {dimension_semantics = [#tpu.dimension_semantics<parallel>], iteration_bounds = array<i64: 1>, scalar_prefetch = 0 : i64, scratch_operands = 0 : i64, tpu.core_type = #tpu.core_type<tc>, window_params = [{transform_indices = @transform_0, window_bounds = array<i64: 2, 64, 27>}, {pipeline_mode = #tpu.pipeline_mode<synchronous>, transform_indices = @transform_1, window_bounds = array<i64: 27, 128>}, {pipeline_mode = #tpu.pipeline_mode<synchronous>, transform_indices = @transform_2, window_bounds = array<i64: 1, 128>}, {pipeline_mode = #tpu.pipeline_mode<synchronous>, transform_indices = @transform_3, window_bounds = array<i64: 3, 384, 128>}, {pipeline_mode = #tpu.pipeline_mode<synchronous>, transform_indices = @transform_4, window_bounds = array<i64: 1, 128>}, {pipeline_mode = #tpu.pipeline_mode<synchronous>, transform_indices = @transform_5, window_bounds = array<i64: 3, 384, 128>}, {pipeline_mode = #tpu.pipeline_mode<synchronous>, transform_indices = @transform_6, window_bounds = array<i64: 1, 128>}, {pipeline_mode = #tpu.pipeline_mode<synchronous>, transform_indices = @transform_7, window_bounds = array<i64: 4, 512, 256>}, {pipeline_mode = #tpu.pipeline_mode<synchronous>, transform_indices = @transform_8, window_bounds = array<i64: 1, 256>}, {pipeline_mode = #tpu.pipeline_mode<synchronous>, transform_indices = @transform_9, window_bounds = array<i64: 256, 128>}, {pipeline_mode = #tpu.pipeline_mode<synchronous>, transform_indices = @transform_10, window_bounds = array<i64: 1, 128>}, {transform_indices = @transform_11, window_bounds = array<i64: 2, 128>}]} {
    %c0 = arith.constant 0 : index
    %c0_0 = arith.constant 0 : index
    %c0_1 = arith.constant 0 : index
    %0 = vector.load %arg1[%c0, %c0_0, %c0_1] : memref<2x64x27xbf16, #tpu.memory_space<vmem>>, vector<2x64x27xbf16>
    %1 = vector.shape_cast %0 : vector<2x64x27xbf16> to vector<128x27xbf16>
    %c0_2 = arith.constant 0 : index
    %c0_3 = arith.constant 0 : index
    %2 = vector.load %arg2[%c0_2, %c0_3] : memref<27x128xbf16, #tpu.memory_space<vmem>>, vector<27x128xbf16>
    %cst = arith.constant dense<0.000000e+00> : vector<128x128xf32>
    %3 = tpu.matmul %1, %2, %cst {dimension_numbers = #tpu.dot_dimension_numbers<[1], [0], [0], [1], [0, 0, 1, 1], [], []>} : vector<128x27xbf16>, vector<27x128xbf16>, vector<128x128xf32> -> vector<128x128xf32>
    %c0_4 = arith.constant 0 : index
    %c0_5 = arith.constant 0 : index
    %4 = vector.load %arg3[%c0_4, %c0_5] : memref<1x128xf32, #tpu.memory_space<vmem>>, vector<1x128xf32>
    %5 = vector.broadcast %4 : vector<1x128xf32> to vector<128x128xf32>
    %6 = arith.addf %3, %5 : vector<128x128xf32>
    %cst_6 = arith.constant 0.000000e+00 : f32
    %7 = vector.broadcast %cst_6 : f32 to vector<128x128xf32>
    %8 = arith.maximumf %6, %7 : vector<128x128xf32>
    %9 = arith.truncf %8 : vector<128x128xf32> to vector<128x128xbf16>
    %10 = vector.shape_cast %9 : vector<128x128xbf16> to vector<2x8x8x128xbf16>
    %cst_7 = arith.constant 0.000000e+00 : f32
    %11 = vector.broadcast %cst_7 : f32 to vector<72x128xf32>
    %12 = vector.extract_strided_slice %10 {offsets = [0, 0, 0, 0], sizes = [2, 6, 8, 128], strides = [1, 1, 1, 1]} : vector<2x8x8x128xbf16> to vector<2x6x8x128xbf16>
    %13 = vector.extract_strided_slice %12 {offsets = [0, 0, 0, 0], sizes = [2, 6, 6, 128], strides = [1, 1, 1, 1]} : vector<2x6x8x128xbf16> to vector<2x6x6x128xbf16>
    %14 = vector.extract_strided_slice %12 {offsets = [0, 0, 1, 0], sizes = [2, 6, 6, 128], strides = [1, 1, 1, 1]} : vector<2x6x8x128xbf16> to vector<2x6x6x128xbf16>
    %15 = vector.extract_strided_slice %12 {offsets = [0, 0, 2, 0], sizes = [2, 6, 6, 128], strides = [1, 1, 1, 1]} : vector<2x6x8x128xbf16> to vector<2x6x6x128xbf16>
    %16 = tpu.concatenate %13, %14, %15 in 3 : vector<2x6x6x128xbf16>, vector<2x6x6x128xbf16>, vector<2x6x6x128xbf16> -> vector<2x6x6x384xbf16>
    %17 = vector.shape_cast %16 : vector<2x6x6x384xbf16> to vector<72x384xbf16>
    %c0_8 = arith.constant 0 : index
    %c0_9 = arith.constant 0 : index
    %c0_10 = arith.constant 0 : index
    %18 = vector.load %arg4[%c0_8, %c0_9, %c0_10] : memref<3x384x128xbf16, #tpu.memory_space<vmem>>, vector<1x384x128xbf16>
    %19 = vector.shape_cast %18 : vector<1x384x128xbf16> to vector<384x128xbf16>
    %cst_11 = arith.constant dense<0.000000e+00> : vector<72x128xf32>
    %20 = tpu.matmul %17, %19, %cst_11 {dimension_numbers = #tpu.dot_dimension_numbers<[1], [0], [0], [1], [0, 0, 1, 1], [], []>} : vector<72x384xbf16>, vector<384x128xbf16>, vector<72x128xf32> -> vector<72x128xf32>
    %21 = arith.addf %11, %20 : vector<72x128xf32>
    %22 = vector.extract_strided_slice %10 {offsets = [0, 1, 0, 0], sizes = [2, 6, 8, 128], strides = [1, 1, 1, 1]} : vector<2x8x8x128xbf16> to vector<2x6x8x128xbf16>
    %23 = vector.extract_strided_slice %22 {offsets = [0, 0, 0, 0], sizes = [2, 6, 6, 128], strides = [1, 1, 1, 1]} : vector<2x6x8x128xbf16> to vector<2x6x6x128xbf16>
    %24 = vector.extract_strided_slice %22 {offsets = [0, 0, 1, 0], sizes = [2, 6, 6, 128], strides = [1, 1, 1, 1]} : vector<2x6x8x128xbf16> to vector<2x6x6x128xbf16>
    %25 = vector.extract_strided_slice %22 {offsets = [0, 0, 2, 0], sizes = [2, 6, 6, 128], strides = [1, 1, 1, 1]} : vector<2x6x8x128xbf16> to vector<2x6x6x128xbf16>
    %26 = tpu.concatenate %23, %24, %25 in 3 : vector<2x6x6x128xbf16>, vector<2x6x6x128xbf16>, vector<2x6x6x128xbf16> -> vector<2x6x6x384xbf16>
    %27 = vector.shape_cast %26 : vector<2x6x6x384xbf16> to vector<72x384xbf16>
    %c1 = arith.constant 1 : index
    %c0_12 = arith.constant 0 : index
    %c0_13 = arith.constant 0 : index
    %28 = vector.load %arg4[%c1, %c0_12, %c0_13] : memref<3x384x128xbf16, #tpu.memory_space<vmem>>, vector<1x384x128xbf16>
    %29 = vector.shape_cast %28 : vector<1x384x128xbf16> to vector<384x128xbf16>
    %cst_14 = arith.constant dense<0.000000e+00> : vector<72x128xf32>
    %30 = tpu.matmul %27, %29, %cst_14 {dimension_numbers = #tpu.dot_dimension_numbers<[1], [0], [0], [1], [0, 0, 1, 1], [], []>} : vector<72x384xbf16>, vector<384x128xbf16>, vector<72x128xf32> -> vector<72x128xf32>
    %31 = arith.addf %21, %30 : vector<72x128xf32>
    %32 = vector.extract_strided_slice %10 {offsets = [0, 2, 0, 0], sizes = [2, 6, 8, 128], strides = [1, 1, 1, 1]} : vector<2x8x8x128xbf16> to vector<2x6x8x128xbf16>
    %33 = vector.extract_strided_slice %32 {offsets = [0, 0, 0, 0], sizes = [2, 6, 6, 128], strides = [1, 1, 1, 1]} : vector<2x6x8x128xbf16> to vector<2x6x6x128xbf16>
    %34 = vector.extract_strided_slice %32 {offsets = [0, 0, 1, 0], sizes = [2, 6, 6, 128], strides = [1, 1, 1, 1]} : vector<2x6x8x128xbf16> to vector<2x6x6x128xbf16>
    %35 = vector.extract_strided_slice %32 {offsets = [0, 0, 2, 0], sizes = [2, 6, 6, 128], strides = [1, 1, 1, 1]} : vector<2x6x8x128xbf16> to vector<2x6x6x128xbf16>
    %36 = tpu.concatenate %33, %34, %35 in 3 : vector<2x6x6x128xbf16>, vector<2x6x6x128xbf16>, vector<2x6x6x128xbf16> -> vector<2x6x6x384xbf16>
    %37 = vector.shape_cast %36 : vector<2x6x6x384xbf16> to vector<72x384xbf16>
    %c2 = arith.constant 2 : index
    %c0_15 = arith.constant 0 : index
    %c0_16 = arith.constant 0 : index
    %38 = vector.load %arg4[%c2, %c0_15, %c0_16] : memref<3x384x128xbf16, #tpu.memory_space<vmem>>, vector<1x384x128xbf16>
    %39 = vector.shape_cast %38 : vector<1x384x128xbf16> to vector<384x128xbf16>
    %cst_17 = arith.constant dense<0.000000e+00> : vector<72x128xf32>
    %40 = tpu.matmul %37, %39, %cst_17 {dimension_numbers = #tpu.dot_dimension_numbers<[1], [0], [0], [1], [0, 0, 1, 1], [], []>} : vector<72x384xbf16>, vector<384x128xbf16>, vector<72x128xf32> -> vector<72x128xf32>
    %41 = arith.addf %31, %40 : vector<72x128xf32>
    %c0_18 = arith.constant 0 : index
    %c0_19 = arith.constant 0 : index
    %42 = vector.load %arg5[%c0_18, %c0_19] : memref<1x128xf32, #tpu.memory_space<vmem>>, vector<1x128xf32>
    %43 = vector.broadcast %42 : vector<1x128xf32> to vector<72x128xf32>
    %44 = arith.addf %41, %43 : vector<72x128xf32>
    %cst_20 = arith.constant 0.000000e+00 : f32
    %45 = vector.broadcast %cst_20 : f32 to vector<72x128xf32>
    %46 = arith.maximumf %44, %45 : vector<72x128xf32>
    %47 = arith.truncf %46 : vector<72x128xf32> to vector<72x128xbf16>
    %48 = vector.shape_cast %47 : vector<72x128xbf16> to vector<2x6x6x128xbf16>
    %cst_21 = arith.constant 0.000000e+00 : f32
    %49 = vector.broadcast %cst_21 : f32 to vector<32x128xf32>
    %50 = vector.extract_strided_slice %48 {offsets = [0, 0, 0, 0], sizes = [2, 4, 6, 128], strides = [1, 1, 1, 1]} : vector<2x6x6x128xbf16> to vector<2x4x6x128xbf16>
    %51 = vector.extract_strided_slice %50 {offsets = [0, 0, 0, 0], sizes = [2, 4, 4, 128], strides = [1, 1, 1, 1]} : vector<2x4x6x128xbf16> to vector<2x4x4x128xbf16>
    %52 = vector.extract_strided_slice %50 {offsets = [0, 0, 1, 0], sizes = [2, 4, 4, 128], strides = [1, 1, 1, 1]} : vector<2x4x6x128xbf16> to vector<2x4x4x128xbf16>
    %53 = vector.extract_strided_slice %50 {offsets = [0, 0, 2, 0], sizes = [2, 4, 4, 128], strides = [1, 1, 1, 1]} : vector<2x4x6x128xbf16> to vector<2x4x4x128xbf16>
    %54 = tpu.concatenate %51, %52, %53 in 3 : vector<2x4x4x128xbf16>, vector<2x4x4x128xbf16>, vector<2x4x4x128xbf16> -> vector<2x4x4x384xbf16>
    %55 = vector.shape_cast %54 : vector<2x4x4x384xbf16> to vector<32x384xbf16>
    %c0_22 = arith.constant 0 : index
    %c0_23 = arith.constant 0 : index
    %c0_24 = arith.constant 0 : index
    %56 = vector.load %arg6[%c0_22, %c0_23, %c0_24] : memref<3x384x128xbf16, #tpu.memory_space<vmem>>, vector<1x384x128xbf16>
    %57 = vector.shape_cast %56 : vector<1x384x128xbf16> to vector<384x128xbf16>
    %cst_25 = arith.constant dense<0.000000e+00> : vector<32x128xf32>
    %58 = tpu.matmul %55, %57, %cst_25 {dimension_numbers = #tpu.dot_dimension_numbers<[1], [0], [0], [1], [0, 0, 1, 1], [], []>} : vector<32x384xbf16>, vector<384x128xbf16>, vector<32x128xf32> -> vector<32x128xf32>
    %59 = arith.addf %49, %58 : vector<32x128xf32>
    %60 = vector.extract_strided_slice %48 {offsets = [0, 1, 0, 0], sizes = [2, 4, 6, 128], strides = [1, 1, 1, 1]} : vector<2x6x6x128xbf16> to vector<2x4x6x128xbf16>
    %61 = vector.extract_strided_slice %60 {offsets = [0, 0, 0, 0], sizes = [2, 4, 4, 128], strides = [1, 1, 1, 1]} : vector<2x4x6x128xbf16> to vector<2x4x4x128xbf16>
    %62 = vector.extract_strided_slice %60 {offsets = [0, 0, 1, 0], sizes = [2, 4, 4, 128], strides = [1, 1, 1, 1]} : vector<2x4x6x128xbf16> to vector<2x4x4x128xbf16>
    %63 = vector.extract_strided_slice %60 {offsets = [0, 0, 2, 0], sizes = [2, 4, 4, 128], strides = [1, 1, 1, 1]} : vector<2x4x6x128xbf16> to vector<2x4x4x128xbf16>
    %64 = tpu.concatenate %61, %62, %63 in 3 : vector<2x4x4x128xbf16>, vector<2x4x4x128xbf16>, vector<2x4x4x128xbf16> -> vector<2x4x4x384xbf16>
    %65 = vector.shape_cast %64 : vector<2x4x4x384xbf16> to vector<32x384xbf16>
    %c1_26 = arith.constant 1 : index
    %c0_27 = arith.constant 0 : index
    %c0_28 = arith.constant 0 : index
    %66 = vector.load %arg6[%c1_26, %c0_27, %c0_28] : memref<3x384x128xbf16, #tpu.memory_space<vmem>>, vector<1x384x128xbf16>
    %67 = vector.shape_cast %66 : vector<1x384x128xbf16> to vector<384x128xbf16>
    %cst_29 = arith.constant dense<0.000000e+00> : vector<32x128xf32>
    %68 = tpu.matmul %65, %67, %cst_29 {dimension_numbers = #tpu.dot_dimension_numbers<[1], [0], [0], [1], [0, 0, 1, 1], [], []>} : vector<32x384xbf16>, vector<384x128xbf16>, vector<32x128xf32> -> vector<32x128xf32>
    %69 = arith.addf %59, %68 : vector<32x128xf32>
    %70 = vector.extract_strided_slice %48 {offsets = [0, 2, 0, 0], sizes = [2, 4, 6, 128], strides = [1, 1, 1, 1]} : vector<2x6x6x128xbf16> to vector<2x4x6x128xbf16>
    %71 = vector.extract_strided_slice %70 {offsets = [0, 0, 0, 0], sizes = [2, 4, 4, 128], strides = [1, 1, 1, 1]} : vector<2x4x6x128xbf16> to vector<2x4x4x128xbf16>
    %72 = vector.extract_strided_slice %70 {offsets = [0, 0, 1, 0], sizes = [2, 4, 4, 128], strides = [1, 1, 1, 1]} : vector<2x4x6x128xbf16> to vector<2x4x4x128xbf16>
    %73 = vector.extract_strided_slice %70 {offsets = [0, 0, 2, 0], sizes = [2, 4, 4, 128], strides = [1, 1, 1, 1]} : vector<2x4x6x128xbf16> to vector<2x4x4x128xbf16>
    %74 = tpu.concatenate %71, %72, %73 in 3 : vector<2x4x4x128xbf16>, vector<2x4x4x128xbf16>, vector<2x4x4x128xbf16> -> vector<2x4x4x384xbf16>
    %75 = vector.shape_cast %74 : vector<2x4x4x384xbf16> to vector<32x384xbf16>
    %c2_30 = arith.constant 2 : index
    %c0_31 = arith.constant 0 : index
    %c0_32 = arith.constant 0 : index
    %76 = vector.load %arg6[%c2_30, %c0_31, %c0_32] : memref<3x384x128xbf16, #tpu.memory_space<vmem>>, vector<1x384x128xbf16>
    %77 = vector.shape_cast %76 : vector<1x384x128xbf16> to vector<384x128xbf16>
    %cst_33 = arith.constant dense<0.000000e+00> : vector<32x128xf32>
    %78 = tpu.matmul %75, %77, %cst_33 {dimension_numbers = #tpu.dot_dimension_numbers<[1], [0], [0], [1], [0, 0, 1, 1], [], []>} : vector<32x384xbf16>, vector<384x128xbf16>, vector<32x128xf32> -> vector<32x128xf32>
    %79 = arith.addf %69, %78 : vector<32x128xf32>
    %c0_34 = arith.constant 0 : index
    %c0_35 = arith.constant 0 : index
    %80 = vector.load %arg7[%c0_34, %c0_35] : memref<1x128xf32, #tpu.memory_space<vmem>>, vector<1x128xf32>
    %81 = vector.broadcast %80 : vector<1x128xf32> to vector<32x128xf32>
    %82 = arith.addf %79, %81 : vector<32x128xf32>
    %cst_36 = arith.constant 0.000000e+00 : f32
    %83 = vector.broadcast %cst_36 : f32 to vector<32x128xf32>
    %84 = arith.maximumf %82, %83 : vector<32x128xf32>
    %85 = arith.truncf %84 : vector<32x128xf32> to vector<32x128xbf16>
    %86 = vector.shape_cast %85 : vector<32x128xbf16> to vector<2x4x4x128xbf16>
    %cst_37 = arith.constant 0.000000e+00 : f32
    %87 = vector.broadcast %cst_37 : f32 to vector<2x256xf32>
    %88 = vector.extract_strided_slice %86 {offsets = [0, 0, 0, 0], sizes = [2, 1, 1, 128], strides = [1, 1, 1, 1]} : vector<2x4x4x128xbf16> to vector<2x1x1x128xbf16>
    %89 = vector.shape_cast %88 : vector<2x1x1x128xbf16> to vector<2x128xbf16>
    %90 = vector.extract_strided_slice %86 {offsets = [0, 0, 1, 0], sizes = [2, 1, 1, 128], strides = [1, 1, 1, 1]} : vector<2x4x4x128xbf16> to vector<2x1x1x128xbf16>
    %91 = vector.shape_cast %90 : vector<2x1x1x128xbf16> to vector<2x128xbf16>
    %92 = vector.extract_strided_slice %86 {offsets = [0, 0, 2, 0], sizes = [2, 1, 1, 128], strides = [1, 1, 1, 1]} : vector<2x4x4x128xbf16> to vector<2x1x1x128xbf16>
    %93 = vector.shape_cast %92 : vector<2x1x1x128xbf16> to vector<2x128xbf16>
    %94 = vector.extract_strided_slice %86 {offsets = [0, 0, 3, 0], sizes = [2, 1, 1, 128], strides = [1, 1, 1, 1]} : vector<2x4x4x128xbf16> to vector<2x1x1x128xbf16>
    %95 = vector.shape_cast %94 : vector<2x1x1x128xbf16> to vector<2x128xbf16>
    %96 = tpu.concatenate %89, %91, %93, %95 in 1 : vector<2x128xbf16>, vector<2x128xbf16>, vector<2x128xbf16>, vector<2x128xbf16> -> vector<2x512xbf16>
    %c0_38 = arith.constant 0 : index
    %c0_39 = arith.constant 0 : index
    %c0_40 = arith.constant 0 : index
    %97 = vector.load %arg8[%c0_38, %c0_39, %c0_40] : memref<4x512x256xbf16, #tpu.memory_space<vmem>>, vector<1x512x256xbf16>
    %98 = vector.shape_cast %97 : vector<1x512x256xbf16> to vector<512x256xbf16>
    %cst_41 = arith.constant dense<0.000000e+00> : vector<2x256xf32>
    %99 = tpu.matmul %96, %98, %cst_41 {dimension_numbers = #tpu.dot_dimension_numbers<[1], [0], [0], [1], [0, 0, 1, 1], [], []>} : vector<2x512xbf16>, vector<512x256xbf16>, vector<2x256xf32> -> vector<2x256xf32>
    %100 = arith.addf %87, %99 : vector<2x256xf32>
    %101 = vector.extract_strided_slice %86 {offsets = [0, 1, 0, 0], sizes = [2, 1, 1, 128], strides = [1, 1, 1, 1]} : vector<2x4x4x128xbf16> to vector<2x1x1x128xbf16>
    %102 = vector.shape_cast %101 : vector<2x1x1x128xbf16> to vector<2x128xbf16>
    %103 = vector.extract_strided_slice %86 {offsets = [0, 1, 1, 0], sizes = [2, 1, 1, 128], strides = [1, 1, 1, 1]} : vector<2x4x4x128xbf16> to vector<2x1x1x128xbf16>
    %104 = vector.shape_cast %103 : vector<2x1x1x128xbf16> to vector<2x128xbf16>
    %105 = vector.extract_strided_slice %86 {offsets = [0, 1, 2, 0], sizes = [2, 1, 1, 128], strides = [1, 1, 1, 1]} : vector<2x4x4x128xbf16> to vector<2x1x1x128xbf16>
    %106 = vector.shape_cast %105 : vector<2x1x1x128xbf16> to vector<2x128xbf16>
    %107 = vector.extract_strided_slice %86 {offsets = [0, 1, 3, 0], sizes = [2, 1, 1, 128], strides = [1, 1, 1, 1]} : vector<2x4x4x128xbf16> to vector<2x1x1x128xbf16>
    %108 = vector.shape_cast %107 : vector<2x1x1x128xbf16> to vector<2x128xbf16>
    %109 = tpu.concatenate %102, %104, %106, %108 in 1 : vector<2x128xbf16>, vector<2x128xbf16>, vector<2x128xbf16>, vector<2x128xbf16> -> vector<2x512xbf16>
    %c1_42 = arith.constant 1 : index
    %c0_43 = arith.constant 0 : index
    %c0_44 = arith.constant 0 : index
    %110 = vector.load %arg8[%c1_42, %c0_43, %c0_44] : memref<4x512x256xbf16, #tpu.memory_space<vmem>>, vector<1x512x256xbf16>
    %111 = vector.shape_cast %110 : vector<1x512x256xbf16> to vector<512x256xbf16>
    %cst_45 = arith.constant dense<0.000000e+00> : vector<2x256xf32>
    %112 = tpu.matmul %109, %111, %cst_45 {dimension_numbers = #tpu.dot_dimension_numbers<[1], [0], [0], [1], [0, 0, 1, 1], [], []>} : vector<2x512xbf16>, vector<512x256xbf16>, vector<2x256xf32> -> vector<2x256xf32>
    %113 = arith.addf %100, %112 : vector<2x256xf32>
    %114 = vector.extract_strided_slice %86 {offsets = [0, 2, 0, 0], sizes = [2, 1, 1, 128], strides = [1, 1, 1, 1]} : vector<2x4x4x128xbf16> to vector<2x1x1x128xbf16>
    %115 = vector.shape_cast %114 : vector<2x1x1x128xbf16> to vector<2x128xbf16>
    %116 = vector.extract_strided_slice %86 {offsets = [0, 2, 1, 0], sizes = [2, 1, 1, 128], strides = [1, 1, 1, 1]} : vector<2x4x4x128xbf16> to vector<2x1x1x128xbf16>
    %117 = vector.shape_cast %116 : vector<2x1x1x128xbf16> to vector<2x128xbf16>
    %118 = vector.extract_strided_slice %86 {offsets = [0, 2, 2, 0], sizes = [2, 1, 1, 128], strides = [1, 1, 1, 1]} : vector<2x4x4x128xbf16> to vector<2x1x1x128xbf16>
    %119 = vector.shape_cast %118 : vector<2x1x1x128xbf16> to vector<2x128xbf16>
    %120 = vector.extract_strided_slice %86 {offsets = [0, 2, 3, 0], sizes = [2, 1, 1, 128], strides = [1, 1, 1, 1]} : vector<2x4x4x128xbf16> to vector<2x1x1x128xbf16>
    %121 = vector.shape_cast %120 : vector<2x1x1x128xbf16> to vector<2x128xbf16>
    %122 = tpu.concatenate %115, %117, %119, %121 in 1 : vector<2x128xbf16>, vector<2x128xbf16>, vector<2x128xbf16>, vector<2x128xbf16> -> vector<2x512xbf16>
    %c2_46 = arith.constant 2 : index
    %c0_47 = arith.constant 0 : index
    %c0_48 = arith.constant 0 : index
    %123 = vector.load %arg8[%c2_46, %c0_47, %c0_48] : memref<4x512x256xbf16, #tpu.memory_space<vmem>>, vector<1x512x256xbf16>
    %124 = vector.shape_cast %123 : vector<1x512x256xbf16> to vector<512x256xbf16>
    %cst_49 = arith.constant dense<0.000000e+00> : vector<2x256xf32>
    %125 = tpu.matmul %122, %124, %cst_49 {dimension_numbers = #tpu.dot_dimension_numbers<[1], [0], [0], [1], [0, 0, 1, 1], [], []>} : vector<2x512xbf16>, vector<512x256xbf16>, vector<2x256xf32> -> vector<2x256xf32>
    %126 = arith.addf %113, %125 : vector<2x256xf32>
    %127 = vector.extract_strided_slice %86 {offsets = [0, 3, 0, 0], sizes = [2, 1, 1, 128], strides = [1, 1, 1, 1]} : vector<2x4x4x128xbf16> to vector<2x1x1x128xbf16>
    %128 = vector.shape_cast %127 : vector<2x1x1x128xbf16> to vector<2x128xbf16>
    %129 = vector.extract_strided_slice %86 {offsets = [0, 3, 1, 0], sizes = [2, 1, 1, 128], strides = [1, 1, 1, 1]} : vector<2x4x4x128xbf16> to vector<2x1x1x128xbf16>
    %130 = vector.shape_cast %129 : vector<2x1x1x128xbf16> to vector<2x128xbf16>
    %131 = vector.extract_strided_slice %86 {offsets = [0, 3, 2, 0], sizes = [2, 1, 1, 128], strides = [1, 1, 1, 1]} : vector<2x4x4x128xbf16> to vector<2x1x1x128xbf16>
    %132 = vector.shape_cast %131 : vector<2x1x1x128xbf16> to vector<2x128xbf16>
    %133 = vector.extract_strided_slice %86 {offsets = [0, 3, 3, 0], sizes = [2, 1, 1, 128], strides = [1, 1, 1, 1]} : vector<2x4x4x128xbf16> to vector<2x1x1x128xbf16>
    %134 = vector.shape_cast %133 : vector<2x1x1x128xbf16> to vector<2x128xbf16>
    %135 = tpu.concatenate %128, %130, %132, %134 in 1 : vector<2x128xbf16>, vector<2x128xbf16>, vector<2x128xbf16>, vector<2x128xbf16> -> vector<2x512xbf16>
    %c3 = arith.constant 3 : index
    %c0_50 = arith.constant 0 : index
    %c0_51 = arith.constant 0 : index
    %136 = vector.load %arg8[%c3, %c0_50, %c0_51] : memref<4x512x256xbf16, #tpu.memory_space<vmem>>, vector<1x512x256xbf16>
    %137 = vector.shape_cast %136 : vector<1x512x256xbf16> to vector<512x256xbf16>
    %cst_52 = arith.constant dense<0.000000e+00> : vector<2x256xf32>
    %138 = tpu.matmul %135, %137, %cst_52 {dimension_numbers = #tpu.dot_dimension_numbers<[1], [0], [0], [1], [0, 0, 1, 1], [], []>} : vector<2x512xbf16>, vector<512x256xbf16>, vector<2x256xf32> -> vector<2x256xf32>
    %139 = arith.addf %126, %138 : vector<2x256xf32>
    %c0_53 = arith.constant 0 : index
    %c0_54 = arith.constant 0 : index
    %140 = vector.load %arg9[%c0_53, %c0_54] : memref<1x256xf32, #tpu.memory_space<vmem>>, vector<1x256xf32>
    %141 = vector.broadcast %140 : vector<1x256xf32> to vector<2x256xf32>
    %142 = arith.addf %139, %141 : vector<2x256xf32>
    %cst_55 = arith.constant 0.000000e+00 : f32
    %143 = vector.broadcast %cst_55 : f32 to vector<2x256xf32>
    %144 = arith.maximumf %142, %143 : vector<2x256xf32>
    %145 = arith.truncf %144 : vector<2x256xf32> to vector<2x256xbf16>
    %c0_56 = arith.constant 0 : index
    %c0_57 = arith.constant 0 : index
    %146 = vector.load %arg10[%c0_56, %c0_57] : memref<256x128xbf16, #tpu.memory_space<vmem>>, vector<256x128xbf16>
    %cst_58 = arith.constant dense<0.000000e+00> : vector<2x128xf32>
    %147 = tpu.matmul %145, %146, %cst_58 {dimension_numbers = #tpu.dot_dimension_numbers<[1], [0], [0], [1], [0, 0, 1, 1], [], []>} : vector<2x256xbf16>, vector<256x128xbf16>, vector<2x128xf32> -> vector<2x128xf32>
    %c0_59 = arith.constant 0 : index
    %c0_60 = arith.constant 0 : index
    %148 = vector.load %arg11[%c0_59, %c0_60] : memref<1x128xf32, #tpu.memory_space<vmem>>, vector<1x128xf32>
    %149 = vector.broadcast %148 : vector<1x128xf32> to vector<2x128xf32>
    %150 = arith.addf %147, %149 : vector<2x128xf32>
    %c0_61 = arith.constant 0 : index
    %c0_62 = arith.constant 0 : index
    %151 = vector.load %arg12[%c0_61, %c0_62] : memref<2x128xf32, #tpu.memory_space<vmem>>, vector<2x128xf32>
    tpu.vector_store %arg12[%c0_61, %c0_62], %150 {strides = array<i32>} : memref<2x128xf32, #tpu.memory_space<vmem>>, vector<2x128xf32>,
    return
  }
  func.func @transform_0(%arg0: i32) -> (i32, i32, i32) {
    %c0_i32 = arith.constant 0 : i32
    %c0_i32_0 = arith.constant 0 : i32
    %c0_i32_1 = arith.constant 0 : i32
    return %arg0, %c0_i32, %c0_i32_0 : i32, i32, i32
  }
  func.func @transform_1(%arg0: i32) -> (i32, i32) {
    %c0_i32 = arith.constant 0 : i32
    %c0_i32_0 = arith.constant 0 : i32
    %c0_i32_1 = arith.constant 0 : i32
    return %c0_i32, %c0_i32_0 : i32, i32
  }
  func.func @transform_2(%arg0: i32) -> (i32, i32) {
    %c0_i32 = arith.constant 0 : i32
    %c0_i32_0 = arith.constant 0 : i32
    %c0_i32_1 = arith.constant 0 : i32
    return %c0_i32, %c0_i32_0 : i32, i32
  }
  func.func @transform_3(%arg0: i32) -> (i32, i32, i32) {
    %c0_i32 = arith.constant 0 : i32
    %c0_i32_0 = arith.constant 0 : i32
    %c0_i32_1 = arith.constant 0 : i32
    %c0_i32_2 = arith.constant 0 : i32
    return %c0_i32, %c0_i32_0, %c0_i32_1 : i32, i32, i32
  }
  func.func @transform_4(%arg0: i32) -> (i32, i32) {
    %c0_i32 = arith.constant 0 : i32
    %c0_i32_0 = arith.constant 0 : i32
    %c0_i32_1 = arith.constant 0 : i32
    return %c0_i32, %c0_i32_0 : i32, i32
  }
  func.func @transform_5(%arg0: i32) -> (i32, i32, i32) {
    %c0_i32 = arith.constant 0 : i32
    %c0_i32_0 = arith.constant 0 : i32
    %c0_i32_1 = arith.constant 0 : i32
    %c0_i32_2 = arith.constant 0 : i32
    return %c0_i32, %c0_i32_0, %c0_i32_1 : i32, i32, i32
  }
  func.func @transform_6(%arg0: i32) -> (i32, i32) {
    %c0_i32 = arith.constant 0 : i32
    %c0_i32_0 = arith.constant 0 : i32
    %c0_i32_1 = arith.constant 0 : i32
    return %c0_i32, %c0_i32_0 : i32, i32
  }
  func.func @transform_7(%arg0: i32) -> (i32, i32, i32) {
    %c0_i32 = arith.constant 0 : i32
    %c0_i32_0 = arith.constant 0 : i32
    %c0_i32_1 = arith.constant 0 : i32
    %c0_i32_2 = arith.constant 0 : i32
    return %c0_i32, %c0_i32_0, %c0_i32_1 : i32, i32, i32
  }
  func.func @transform_8(%arg0: i32) -> (i32, i32) {
    %c0_i32 = arith.constant 0 : i32
    %c0_i32_0 = arith.constant 0 : i32
    %c0_i32_1 = arith.constant 0 : i32
    return %c0_i32, %c0_i32_0 : i32, i32
  }
  func.func @transform_9(%arg0: i32) -> (i32, i32) {
    %c0_i32 = arith.constant 0 : i32
    %c0_i32_0 = arith.constant 0 : i32
    %c0_i32_1 = arith.constant 0 : i32
    return %c0_i32, %c0_i32_0 : i32, i32
  }
  func.func @transform_10(%arg0: i32) -> (i32, i32) {
    %c0_i32 = arith.constant 0 : i32
    %c0_i32_0 = arith.constant 0 : i32
    %c0_i32_1 = arith.constant 0 : i32
    return %c0_i32, %c0_i32_0 : i32, i32
  }
  func.func @transform_11(%arg0: i32) -> (i32, i32) {
    %c0_i32 = arith.constant 0 : i32
    %c0_i32_0 = arith.constant 0 : i32
    return %arg0, %c0_i32 : i32, i32
  }
}

</mosaic_0001>

<llo_original>
// kernel: net_forward.1
$region0: #{net_forward.1}
  #allocation0 [shape = 'u32[]', space=smem, size = 0x4, offset = 0x4, fixed_abs, tag = 'smem constant byte address 0x4 - core index']
  #allocation1 [shape = 'u32[144,128]{1,0:T(1,128)}', space=vmem, size = 0x12000, scoped, tag = 'internal scratch']
  %s0 = inlined_call_operand.hbm [shape: bf16[2,64,27], index: 0, kind: input, shape index: {}]
  %s1 = inlined_call_operand.hbm [shape: bf16[27,128], index: 1, kind: input, shape index: {}]
  %s2 = inlined_call_operand.hbm [shape: f32[1,128], index: 2, kind: input, shape index: {}]
  %s3 = inlined_call_operand.hbm [shape: bf16[3,384,128], index: 3, kind: input, shape index: {}]
  %s4 = inlined_call_operand.hbm [shape: f32[1,128], index: 4, kind: input, shape index: {}]
  %s5 = inlined_call_operand.hbm [shape: bf16[3,384,128], index: 5, kind: input, shape index: {}]
  %s6 = inlined_call_operand.hbm [shape: f32[1,128], index: 6, kind: input, shape index: {}]
  %s7 = inlined_call_operand.hbm [shape: bf16[4,512,256], index: 7, kind: input, shape index: {}]
  %s8 = inlined_call_operand.hbm [shape: f32[1,256], index: 8, kind: input, shape index: {}]
  %s9 = inlined_call_operand.hbm [shape: bf16[256,128], index: 9, kind: input, shape index: {}]
  %s10 = inlined_call_operand.hbm [shape: f32[1,128], index: 10, kind: input, shape index: {}]
  %s11 = inlined_call_operand.hbm [shape: f32[2,128], index: 11, kind: output, shape index: {}]
  %s12 = sld [smem:[#allocation0]]
  $region98: #{net_forward.1} parent=0
    _
  %s14 = ssub.s32 1, %s12
  %s15 = scalar_select 0, %s14, %s12
  $region1: #{net_forward.1} parent=0
    #allocation2 [shape = 'u8[32768]{0}', space=vmem, size = 0x8000, scoped, tag = 'input window, operand 0, single buffered']
    #allocation3 [shape = 's32[1]{0}', space=sflag, size = 0x4, scoped, tag = 'scoped memory for net_forward.1']
    #allocation4 [shape = 's32[1]{0}', space=sflag, size = 0x4, scoped, tag = 'scoped memory for net_forward.1']
    #allocation5 [shape = 'u8[8192]{0}', space=vmem, size = 0x2000, scoped, tag = 'input window, operand 1, single buffered']
    #allocation6 [shape = 's32[1]{0}', space=sflag, size = 0x4, scoped, tag = 'scoped memory for net_forward.1']
    #allocation7 [shape = 'u8[512]{0}', space=vmem, size = 0x400, scoped, tag = 'input window, operand 2, single buffered']
    #allocation8 [shape = 'u8[294912]{0}', space=vmem, size = 0x48000, scoped, tag = 'input window, operand 3, single buffered']
    #allocation9 [shape = 's32[1]{0}', space=sflag, size = 0x4, scoped, tag = 'scoped memory for net_forward.1']
    #allocation10 [shape = 'u8[512]{0}', space=vmem, size = 0x400, scoped, tag = 'input window, operand 4, single buffered']
    #allocation11 [shape = 'u8[294912]{0}', space=vmem, size = 0x48000, scoped, tag = 'input window, operand 5, single buffered']
    #allocation12 [shape = 's32[1]{0}', space=sflag, size = 0x4, scoped, tag = 'scoped memory for net_forward.1']
    #allocation13 [shape = 'u8[512]{0}', space=vmem, size = 0x400, scoped, tag = 'input window, operand 6, single buffered']
    #allocation14 [shape = 'u8[1048576]{0}', space=vmem, size = 0x100000, scoped, tag = 'input window, operand 7, single buffered']
    #allocation15 [shape = 's32[1]{0}', space=sflag, size = 0x4, scoped, tag = 'scoped memory for net_forward.1']
    #allocation16 [shape = 'u8[1024]{0}', space=vmem, size = 0x400, scoped, tag = 'input window, operand 8, single buffered']
    #allocation17 [shape = 'u8[65536]{0}', space=vmem, size = 0x10000, scoped, tag = 'input window, operand 9, single buffered']
    #allocation18 [shape = 's32[1]{0}', space=sflag, size = 0x4, scoped, tag = 'scoped memory for net_forward.1']
    #allocation19 [shape = 'u8[512]{0}', space=vmem, size = 0x400, scoped, tag = 'input window, operand 10, single buffered']
    #allocation20 [shape = 'u8[1024]{0}', space=vmem, size = 0x400, scoped, tag = 'output window, operand 0, single buffered']
    %16 = vsyncpa [#allocation3], 0
    %17 = vsyncpa [#allocation6], 0
    %18 = vsyncpa [#allocation9], 0
    %19 = vsyncpa [#allocation12], 0
    %20 = vsyncpa [#allocation15], 0
    %21 = vsyncpa [#allocation18], 0
    %22 = vsyncpa [#allocation4], 0
    // Predicated region
    $region2: #{net_forward.1} parent=1 // pred_check
      _
    $region3: #{net_forward.1} parent=1 // pred_check_branch
      %24 = sbr.rel (0) target = $region5
    $region4: #{net_forward.1} parent=1 // pred_region
      %s26 = ssub.s32 1024, 1024
      %27 = vsyncadd [#allocation3], %s26
      %s28 = sshll.u32 [#allocation2], 4
      %s29 = int_to_ptr.vmem [resolvable:$true] %s28
      %34 = dma.hbm_to_vmem [thread:$0]  %s0, 1024, %s29, [#allocation3], 64, 64, 4
    $region5: #{net_forward.1} parent=1 // pred_fallthru
      _
    // Predicated region
    $region6: #{net_forward.1} parent=1 // pred_check
      _
    $region7: #{net_forward.1} parent=1 // pred_check_branch
      %36 = sbr.rel (0) target = $region9
    $region8: #{net_forward.1} parent=1 // pred_region
      %s38 = ssub.s32 256, 256
      %39 = vsyncadd [#allocation6], %s38
      %s40 = sshll.u32 [#allocation5], 4
      %s41 = int_to_ptr.vmem [resolvable:$true] %s40
      %46 = dma.hbm_to_vmem [thread:$0]  %s1, 256, %s41, [#allocation6], 64, 64, 4
    $region9: #{net_forward.1} parent=1 // pred_fallthru
      _
    // Predicated region
    $region10: #{net_forward.1} parent=1 // pred_check
      _
    $region11: #{net_forward.1} parent=1 // pred_check_branch
      %48 = sbr.rel (0) target = $region13
    $region12: #{net_forward.1} parent=1 // pred_region
      %s50 = ssub.s32 16, 16
      %51 = vsyncadd [#allocation6], %s50
      %s53 = sshll.u32 [#allocation7], 4
      %s54 = int_to_ptr.vmem [resolvable:$true] %s53
      %56 = dma.hbm_to_vmem [thread:$0]  %s2, 16, %s54, [#allocation6]
    $region13: #{net_forward.1} parent=1 // pred_fallthru
      _
    // Predicated region
    $region14: #{net_forward.1} parent=1 // pred_check
      _
    $region15: #{net_forward.1} parent=1 // pred_check_branch
      %58 = sbr.rel (0) target = $region17
    $region16: #{net_forward.1} parent=1 // pred_region
      %s60 = ssub.s32 9216, 9216
      %61 = vsyncadd [#allocation9], %s60
      %s62 = sshll.u32 [#allocation8], 4
      %s63 = int_to_ptr.vmem [resolvable:$true] %s62
      %68 = dma.hbm_to_vmem [thread:$0]  %s3, 9216, %s63, [#allocation9], 64, 64, 4
    $region17: #{net_forward.1} parent=1 // pred_fallthru
      _
    // Predicated region
    $region18: #{net_forward.1} parent=1 // pred_check
      _
    $region19: #{net_forward.1} parent=1 // pred_check_branch
      %70 = sbr.rel (0) target = $region21
    $region20: #{net_forward.1} parent=1 // pred_region
      %s72 = ssub.s32 16, 16
      %73 = vsyncadd [#allocation9], %s72
      %s75 = sshll.u32 [#allocation10], 4
      %s76 = int_to_ptr.vmem [resolvable:$true] %s75
      %78 = dma.hbm_to_vmem [thread:$0]  %s4, 16, %s76, [#allocation9]
    $region21: #{net_forward.1} parent=1 // pred_fallthru
      _
    // Predicated region
    $region22: #{net_forward.1} parent=1 // pred_check
      _
    $region23: #{net_forward.1} parent=1 // pred_check_branch
      %80 = sbr.rel (0) target = $region25
    $region24: #{net_forward.1} parent=1 // pred_region
      %s82 = ssub.s32 9216, 9216
      %83 = vsyncadd [#allocation12], %s82
      %s84 = sshll.u32 [#allocation11], 4
      %s85 = int_to_ptr.vmem [resolvable:$true] %s84
      %90 = dma.hbm_to_vmem [thread:$0]  %s5, 9216, %s85, [#allocation12], 64, 64, 4
    $region25: #{net_forward.1} parent=1 // pred_fallthru
      _
    // Predicated region
    $region26: #{net_forward.1} parent=1 // pred_check
      _
    $region27: #{net_forward.1} parent=1 // pred_check_branch
      %92 = sbr.rel (0) target = $region29
    $region28: #{net_forward.1} parent=1 // pred_region
      %s94 = ssub.s32 16, 16
      %95 = vsyncadd [#allocation12], %s94
      %s97 = sshll.u32 [#allocation13], 4
      %s98 = int_to_ptr.vmem [resolvable:$true] %s97
      %100 = dma.hbm_to_vmem [thread:$0]  %s6, 16, %s98, [#allocation12]
    $region29: #{net_forward.1} parent=1 // pred_fallthru
      _
    // Predicated region
    $region30: #{net_forward.1} parent=1 // pred_check
      _
    $region31: #{net_forward.1} parent=1 // pred_check_branch
      %102 = sbr.rel (0) target = $region33
    $region32: #{net_forward.1} parent=1 // pred_region
      %s104 = ssub.s32 32768, 32768
      %105 = vsyncadd [#allocation15], %s104
      %s106 = sshll.u32 [#allocation14], 4
      %s107 = int_to_ptr.vmem [resolvable:$true] %s106
      %112 = dma.hbm_to_vmem [thread:$0]  %s7, 32768, %s107, [#allocation15], 128, 128, 8
    $region33: #{net_forward.1} parent=1 // pred_fallthru
      _
    // Predicated region
    $region34: #{net_forward.1} parent=1 // pred_check
      _
    $region35: #{net_forward.1} parent=1 // pred_check_branch
      %114 = sbr.rel (0) target = $region37
    $region36: #{net_forward.1} parent=1 // pred_region
      %s116 = ssub.s32 32, 32
      %117 = vsyncadd [#allocation15], %s116
      %s119 = sshll.u32 [#allocation16], 4
      %s120 = int_to_ptr.vmem [resolvable:$true] %s119
      %122 = dma.hbm_to_vmem [thread:$0]  %s8, 32, %s120, [#allocation15]
    $region37: #{net_forward.1} parent=1 // pred_fallthru
      _
    // Predicated region
    $region38: #{net_forward.1} parent=1 // pred_check
      _
    $region39: #{net_forward.1} parent=1 // pred_check_branch
      %124 = sbr.rel (0) target = $region41
    $region40: #{net_forward.1} parent=1 // pred_region
      %s126 = ssub.s32 2048, 2048
      %127 = vsyncadd [#allocation18], %s126
      %s128 = sshll.u32 [#allocation17], 4
      %s129 = int_to_ptr.vmem [resolvable:$true] %s128
      %134 = dma.hbm_to_vmem [thread:$0]  %s9, 2048, %s129, [#allocation18], 64, 64, 4
    $region41: #{net_forward.1} parent=1 // pred_fallthru
      _
    // Predicated region
    $region42: #{net_forward.1} parent=1 // pred_check
      _
    $region43: #{net_forward.1} parent=1 // pred_check_branch
      %136 = sbr.rel (0) target = $region45
    $region44: #{net_forward.1} parent=1 // pred_region
      %s138 = ssub.s32 16, 16
      %139 = vsyncadd [#allocation18], %s138
      %s141 = sshll.u32 [#allocation19], 4
      %s142 = int_to_ptr.vmem [resolvable:$true] %s141
      %144 = dma.hbm_to_vmem [thread:$0]  %s10, 16, %s142, [#allocation18]
    $region45: #{net_forward.1} parent=1 // pred_fallthru
      _
    // Predicated region
    $region46: #{net_forward.1} parent=1 // pred_check
      _
    $region47: #{net_forward.1} parent=1 // pred_check_branch
      %146 = sbr.rel (0) target = $region49
    $region48: #{net_forward.1} parent=1 // pred_region
      %147 = dma.done [#allocation3], 1024
    $region49: #{net_forward.1} parent=1 // pred_fallthru
      _
    // Predicated region
    $region50: #{net_forward.1} parent=1 // pred_check
      _
    $region51: #{net_forward.1} parent=1 // pred_check_branch
      %149 = sbr.rel (0) target = $region53
    $region52: #{net_forward.1} parent=1 // pred_region
      %150 = dma.done [#allocation6], 256
    $region53: #{net_forward.1} parent=1 // pred_fallthru
      _
    // Predicated region
    $region54: #{net_forward.1} parent=1 // pred_check
      _
    $region55: #{net_forward.1} parent=1 // pred_check_branch
      %152 = sbr.rel (0) target = $region57
    $region56: #{net_forward.1} parent=1 // pred_region
      %153 = dma.done [#allocation6], 16
    $region57: #{net_forward.1} parent=1 // pred_fallthru
      _
    // Predicated region
    $region58: #{net_forward.1} parent=1 // pred_check
      _
    $region59: #{net_forward.1} parent=1 // pred_check_branch
      %155 = sbr.rel (0) target = $region61
    $region60: #{net_forward.1} parent=1 // pred_region
      %156 = dma.done [#allocation9], 9216
    $region61: #{net_forward.1} parent=1 // pred_fallthru
      _
    // Predicated region
    $region62: #{net_forward.1} parent=1 // pred_check
      _
    $region63: #{net_forward.1} parent=1 // pred_check_branch
      %158 = sbr.rel (0) target = $region65
    $region64: #{net_forward.1} parent=1 // pred_region
      %159 = dma.done [#allocation9], 16
    $region65: #{net_forward.1} parent=1 // pred_fallthru
      _
    // Predicated region
    $region66: #{net_forward.1} parent=1 // pred_check
      _
    $region67: #{net_forward.1} parent=1 // pred_check_branch
      %161 = sbr.rel (0) target = $region69
    $region68: #{net_forward.1} parent=1 // pred_region
      %162 = dma.done [#allocation12], 9216
    $region69: #{net_forward.1} parent=1 // pred_fallthru
      _
    // Predicated region
    $region70: #{net_forward.1} parent=1 // pred_check
      _
    $region71: #{net_forward.1} parent=1 // pred_check_branch
      %164 = sbr.rel (0) target = $region73
    $region72: #{net_forward.1} parent=1 // pred_region
      %165 = dma.done [#allocation12], 16
    $region73: #{net_forward.1} parent=1 // pred_fallthru
      _
    // Predicated region
    $region74: #{net_forward.1} parent=1 // pred_check
      _
    $region75: #{net_forward.1} parent=1 // pred_check_branch
      %167 = sbr.rel (0) target = $region77
    $region76: #{net_forward.1} parent=1 // pred_region
      %168 = dma.done [#allocation15], 32768
    $region77: #{net_forward.1} parent=1 // pred_fallthru
      _
    // Predicated region
    $region78: #{net_forward.1} parent=1 // pred_check
      _
    $region79: #{net_forward.1} parent=1 // pred_check_branch
      %170 = sbr.rel (0) target = $region81
    $region80: #{net_forward.1} parent=1 // pred_region
      %171 = dma.done [#allocation15], 32
    $region81: #{net_forward.1} parent=1 // pred_fallthru
      _
    // Predicated region
    $region82: #{net_forward.1} parent=1 // pred_check
      _
    $region83: #{net_forward.1} parent=1 // pred_check_branch
      %173 = sbr.rel (0) target = $region85
    $region84: #{net_forward.1} parent=1 // pred_region
      %174 = dma.done [#allocation18], 2048
    $region85: #{net_forward.1} parent=1 // pred_fallthru
      _
    // Predicated region
    $region86: #{net_forward.1} parent=1 // pred_check
      _
    $region87: #{net_forward.1} parent=1 // pred_check_branch
      %176 = sbr.rel (0) target = $region89
    $region88: #{net_forward.1} parent=1 // pred_region
      %177 = dma.done [#allocation18], 16
    $region89: #{net_forward.1} parent=1 // pred_fallthru
      _
    %v179 = vld [vmem:[#allocation2] sm:$0xf]
    %v180 = vld [vmem:[#allocation2 + $0x4] sm:$0xf]
    %v181 = vld [vmem:[#allocation2 + $0x8] sm:$0xf]
    %v182 = vld [vmem:[#allocation2 + $0xc] sm:$0xf]
    %v183 = vld [vmem:[#allocation2 + $0x10] sm:$0xf]
    %v184 = vld [vmem:[#allocation2 + $0x14] sm:$0xf]
    %v185 = vld [vmem:[#allocation2 + $0x18] sm:$0xf]
    %v186 = vld [vmem:[#allocation2 + $0x1c] sm:$0xf]
    %v187 = vld [vmem:[#allocation2 + $0x20] sm:$0xf]
    %v188 = vld [vmem:[#allocation2 + $0x24] sm:$0xf]
    %v189 = vld [vmem:[#allocation2 + $0x28] sm:$0xf]
    %v190 = vld [vmem:[#allocation2 + $0x2c] sm:$0xf]
    %v191 = vld [vmem:[#allocation2 + $0x30] sm:$0xf]
    %v192 = vld [vmem:[#allocation2 + $0x34] sm:$0xf]
    %v193 = vld [vmem:[#allocation2 + $0x38] sm:$0xf]
    %v194 = vld [vmem:[#allocation2 + $0x3c] sm:$0xf]
    %v195 = vld [vmem:[#allocation5] sm:$0xf]
    %v196 = vld [vmem:[#allocation5 + $0x4] sm:$0xf]
    %v197 = vld [vmem:[#allocation5 + $0x8] sm:$0xf]
    %v198 = vld [vmem:[#allocation5 + $0xc] sm:$0x3]
    %v199 = vld [vmem:[#allocation7] sm:$0x1]
    %v201 = vlaneseq
    %v202 = vshrl.u32 %v201, 7
    %v203 = vsub.s32 0, %v202
    %v204 = vrot.slane %v199, %v203
    %v222 = vunpack.c.l.b16 %v179
    %v223 = vunpack.c.l.b16 %v180
    %v224 = vunpack.c.l.b16 %v181
    %v225 = vunpack.c.l.b16 %v182
    %v226 = vunpack.c.l.b16 %v183
    %v227 = vunpack.c.l.b16 %v184
    %v228 = vunpack.c.l.b16 %v185
    %v229 = vunpack.c.l.b16 %v186
    %v230 = vunpack.c.l.b16 %v187
    %v231 = vunpack.c.l.b16 %v188
    %v232 = vunpack.c.l.b16 %v189
    %v233 = vunpack.c.l.b16 %v190
    %v234 = vunpack.c.l.b16 %v191
    %v235 = vunpack.c.l.b16 %v192
    %v236 = vunpack.c.l.b16 %v193
    %v237 = vunpack.c.l.b16 %v194
    %v238 = vpack.c.b16 %v223, %v222
    %v239 = vpack.c.b16 %v225, %v224
    %v240 = vpack.c.b16 %v227, %v226
    %v241 = vpack.c.b16 %v229, %v228
    %v242 = vpack.c.b16 %v231, %v230
    %v243 = vpack.c.b16 %v233, %v232
    %v244 = vpack.c.b16 %v235, %v234
    %v245 = vpack.c.b16 %v237, %v236
    %v250 = vunpack.c.l.b16 %v195
    %v251 = vunpack.c.l.b16 %v196
    %v252 = vunpack.c.l.b16 %v197
    %v253 = vunpack.c.l.b16 %v198
    %v254 = vpack.c.b16 %v251, %v250
    %v255 = vpack.c.b16 %v253, %v252
    %vm257 = vcmask 220160
    %v259 = vsel %vm257, %v238, 0
    %v262 = vsel %vm257, %v239, 0
    %v265 = vsel %vm257, %v240, 0
    %v268 = vsel %vm257, %v241, 0
    %v271 = vsel %vm257, %v242, 0
    %v274 = vsel %vm257, %v243, 0
    %v277 = vsel %vm257, %v244, 0
    %v280 = vsel %vm257, %v245, 0
    %vm282 = vcmask 1044480
    %vm283 = vcmask 1045504
    %v284 = vsel %vm282, 4294967295, 65535
    %v285 = vsel %vm283, %v284, 0
    %v287 = vand.u32 %v255, %v285
    %289 = vmatprep.subr.bf16.mxu0 0
    %290 = vmatpush1.bf16.msra.mxu0 %v254
    %291 = vmatprep.subr.bf16.mxu0 0
    %292 = vmatpush1.bf16.msra.mxu0 %v287
    %293 = vmatprep.subr.bf16.mxu0 0
    %294 = vmatpush1.bf16.msra.mxu0 0
    %295 = vmatprep.subr.bf16.mxu0 0
    %296 = vmatpush1.bf16.msra.mxu0 0
    %297 = vmatprep.subr.bf16.mxu0 0
    %298 = vmatpush1.bf16.msra.mxu0 0
    %299 = vmatprep.subr.bf16.mxu0 0
    %300 = vmatpush1.bf16.msra.mxu0 0
    %301 = vmatprep.subr.bf16.mxu0 0
    %302 = vmatpush1.bf16.msra.mxu0 0
    %303 = vmatprep.subr.bf16.mxu0 0
    %304 = vmatpush1.bf16.msra.mxu0 0
    %305 = vmatprep.subr.bf16.mxu0 0
    %306 = vmatpush1.bf16.msra.mxu0 0
    %307 = vmatprep.subr.bf16.mxu0 0
    %308 = vmatpush1.bf16.msra.mxu0 0
    %309 = vmatprep.subr.bf16.mxu0 0
    %310 = vmatpush1.bf16.msra.mxu0 0
    %311 = vmatprep.subr.bf16.mxu0 0
    %312 = vmatpush1.bf16.msra.mxu0 0
    %313 = vmatprep.subr.bf16.mxu0 0
    %314 = vmatpush1.bf16.msra.mxu0 0
    %315 = vmatprep.subr.bf16.mxu0 0
    %316 = vmatpush1.bf16.msra.mxu0 0
    %317 = vmatprep.subr.bf16.mxu0 0
    %318 = vmatpush1.bf16.msra.mxu0 0
    %319 = vmatprep.subr.bf16.mxu0 0
    %320 = vmatpush1.bf16.msra.mxu0 0
    %321 = vmatprep.mubr.bf16.mxu0 0
    %322 = vmatmul.mubr.bf16.gmra.mrb[0].mxu0 %v259
    %v323 = vpop.f32.mrb[0].mxu0
    %v324 = vadd.f32 %v204, %v323
    %v325 = vpop.f32.mrb[0].mxu0
    %v326 = vpop.f32.mrb[0].mxu0
    %v327 = vadd.f32 %v204, %v326
    %v328 = vpop.f32.mrb[0].mxu0
    %329 = vmatprep.mubr.bf16.mxu0 0
    %330 = vmatmul.mubr.bf16.gmra.mrb[0].mxu0 %v262
    %v331 = vpop.f32.mrb[0].mxu0
    %v332 = vadd.f32 %v204, %v331
    %v333 = vpop.f32.mrb[0].mxu0
    %v334 = vpop.f32.mrb[0].mxu0
    %v335 = vadd.f32 %v204, %v334
    %v336 = vpop.f32.mrb[0].mxu0
    %337 = vmatprep.mubr.bf16.mxu0 0
    %338 = vmatmul.mubr.bf16.gmra.mrb[0].mxu0 %v265
    %v339 = vpop.f32.mrb[0].mxu0
    %v340 = vadd.f32 %v204, %v339
    %v341 = vpop.f32.mrb[0].mxu0
    %v342 = vpop.f32.mrb[0].mxu0
    %v343 = vadd.f32 %v204, %v342
    %v344 = vpop.f32.mrb[0].mxu0
    %345 = vmatprep.mubr.bf16.mxu0 0
    %346 = vmatmul.mubr.bf16.gmra.mrb[0].mxu0 %v268
    %v347 = vpop.f32.mrb[0].mxu0
    %v348 = vadd.f32 %v204, %v347
    %v349 = vpop.f32.mrb[0].mxu0
    %v350 = vpop.f32.mrb[0].mxu0
    %v351 = vadd.f32 %v204, %v350
    %v352 = vpop.f32.mrb[0].mxu0
    %353 = vmatprep.mubr.bf16.mxu0 0
    %354 = vmatmul.mubr.bf16.gmra.mrb[0].mxu0 %v271
    %v355 = vpop.f32.mrb[0].mxu0
    %v356 = vadd.f32 %v204, %v355
    %v357 = vpop.f32.mrb[0].mxu0
    %v358 = vpop.f32.mrb[0].mxu0
    %v359 = vadd.f32 %v204, %v358
    %v360 = vpop.f32.mrb[0].mxu0
    %361 = vmatprep.mubr.bf16.mxu0 0
    %362 = vmatmul.mubr.bf16.gmra.mrb[0].mxu0 %v274
    %v363 = vpop.f32.mrb[0].mxu0
    %v364 = vadd.f32 %v204, %v363
    %v365 = vpop.f32.mrb[0].mxu0
    %v366 = vpop.f32.mrb[0].mxu0
    %v367 = vadd.f32 %v204, %v366
    %v368 = vpop.f32.mrb[0].mxu0
    %369 = vmatprep.mubr.bf16.mxu0 0
    %370 = vmatmul.mubr.bf16.gmra.mrb[0].mxu0 %v277
    %v371 = vpop.f32.mrb[0].mxu0
    %v372 = vadd.f32 %v204, %v371
    %v373 = vpop.f32.mrb[0].mxu0
    %v374 = vpop.f32.mrb[0].mxu0
    %v375 = vadd.f32 %v204, %v374
    %v376 = vpop.f32.mrb[0].mxu0
    %377 = vmatprep.mubr.bf16.mxu0 0
    %378 = vmatmul.mubr.bf16.gmra.mrb[0].mxu0 %v280
    %v379 = vpop.f32.mrb[0].mxu0
    %v380 = vadd.f32 %v204, %v379
    %v381 = vpop.f32.mrb[0].mxu0
    %v382 = vpop.f32.mrb[0].mxu0
    %v383 = vadd.f32 %v204, %v382
    %v384 = vpop.f32.mrb[0].mxu0
    %385 = vdwg.mxu0
    %v386 = vmax.f32 %v324, 0.0
    %v387 = vmax.f32 %v327, 0.0
    %v388 = vmax.f32 %v332, 0.0
    %v389 = vmax.f32 %v335, 0.0
    %v390 = vmax.f32 %v340, 0.0
    %v391 = vmax.f32 %v343, 0.0
    %v392 = vmax.f32 %v348, 0.0
    %v393 = vmax.f32 %v351, 0.0
    %v394 = vmax.f32 %v356, 0.0
    %v395 = vmax.f32 %v359, 0.0
    %v396 = vmax.f32 %v364, 0.0
    %v397 = vmax.f32 %v367, 0.0
    %v398 = vmax.f32 %v372, 0.0
    %v399 = vmax.f32 %v375, 0.0
    %v400 = vmax.f32 %v380, 0.0
    %v401 = vmax.f32 %v383, 0.0
    %v402 = vpack.c.bf16 %v387, %v386
    %v403 = vpack.c.bf16 %v389, %v388
    %v404 = vpack.c.bf16 %v391, %v390
    %v405 = vpack.c.bf16 %v393, %v392
    %v406 = vpack.c.bf16 %v395, %v394
    %v407 = vpack.c.bf16 %v397, %v396
    %v408 = vpack.c.bf16 %v399, %v398
    %v409 = vpack.c.bf16 %v401, %v400
    %v418 = vunpack.c.l.b16 %v402
    %v419 = vunpack.c.h.b16 %v402
    %v420 = vunpack.c.l.b16 %v403
    %v421 = vunpack.c.h.b16 %v403
    %v422 = vunpack.c.l.b16 %v404
    %v423 = vunpack.c.h.b16 %v404
    %v424 = vunpack.c.l.b16 %v405
    %v425 = vunpack.c.h.b16 %v405
    %v426 = vunpack.c.l.b16 %v406
    %v427 = vunpack.c.h.b16 %v406
    %v428 = vunpack.c.l.b16 %v407
    %v429 = vunpack.c.h.b16 %v407
    %v430 = vunpack.c.l.b16 %v408
    %v431 = vunpack.c.h.b16 %v408
    %v432 = vunpack.c.l.b16 %v409
    %v433 = vunpack.c.h.b16 %v409
    %v434 = vpack.c.b16 %v418, %v418
    %v435 = vpack.c.b16 %v419, %v419
    %v436 = vpack.c.b16 %v420, %v420
    %v437 = vpack.c.b16 %v421, %v421
    %v438 = vpack.c.b16 %v422, %v422
    %v439 = vpack.c.b16 %v423, %v423
    %v440 = vpack.c.b16 %v424, %v424
    %v441 = vpack.c.b16 %v425, %v425
    %v442 = vpack.c.b16 %v426, %v426
    %v443 = vpack.c.b16 %v427, %v427
    %v444 = vpack.c.b16 %v428, %v428
    %v445 = vpack.c.b16 %v429, %v429
    %v446 = vpack.c.b16 %v430, %v430
    %v447 = vpack.c.b16 %v431, %v431
    %v448 = vpack.c.b16 %v432, %v432
    %v449 = vpack.c.b16 %v433, %v433
    %v451 = vshrl.u32 %v434, 16
    %v453 = vshll.u32 %v434, 16
    %v455 = vrot.slane %v453, 1
    %v456 = vor.u32 %v451, %v455
    %v458 = vshrl.u32 %v435, 16
    %v460 = vshll.u32 %v435, 16
    %v462 = vrot.slane %v460, 1
    %v463 = vor.u32 %v458, %v462
    %v465 = vshrl.u32 %v436, 16
    %v467 = vshll.u32 %v436, 16
    %v469 = vrot.slane %v467, 1
    %v470 = vor.u32 %v465, %v469
    %v472 = vshrl.u32 %v437, 16
    %v474 = vshll.u32 %v437, 16
    %v476 = vrot.slane %v474, 1
    %v477 = vor.u32 %v472, %v476
    %v479 = vshrl.u32 %v438, 16
    %v481 = vshll.u32 %v438, 16
    %v483 = vrot.slane %v481, 1
    %v484 = vor.u32 %v479, %v483
    %v486 = vshrl.u32 %v439, 16
    %v488 = vshll.u32 %v439, 16
    %v490 = vrot.slane %v488, 1
    %v491 = vor.u32 %v486, %v490
    %v493 = vshrl.u32 %v442, 16
    %v495 = vshll.u32 %v442, 16
    %v497 = vrot.slane %v495, 1
    %v498 = vor.u32 %v493, %v497
    %v500 = vshrl.u32 %v443, 16
    %v502 = vshll.u32 %v443, 16
    %v504 = vrot.slane %v502, 1
    %v505 = vor.u32 %v500, %v504
    %v507 = vshrl.u32 %v444, 16
    %v509 = vshll.u32 %v444, 16
    %v511 = vrot.slane %v509, 1
    %v512 = vor.u32 %v507, %v511
    %v514 = vshrl.u32 %v445, 16
    %v516 = vshll.u32 %v445, 16
    %v518 = vrot.slane %v516, 1
    %v519 = vor.u32 %v514, %v518
    %v521 = vshrl.u32 %v446, 16
    %v523 = vshll.u32 %v446, 16
    %v525 = vrot.slane %v523, 1
    %v526 = vor.u32 %v521, %v525
    %v528 = vshrl.u32 %v447, 16
    %v530 = vshll.u32 %v447, 16
    %v532 = vrot.slane %v530, 1
    %v533 = vor.u32 %v528, %v532
    %v534 = vrot.slane %v434, 1
    %v535 = vrot.slane %v435, 1
    %v536 = vrot.slane %v436, 1
    %v537 = vrot.slane %v437, 1
    %v538 = vrot.slane %v438, 1
    %v539 = vrot.slane %v439, 1
    %v540 = vrot.slane %v442, 1
    %v541 = vrot.slane %v443, 1
    %v542 = vrot.slane %v444, 1
    %v543 = vrot.slane %v445, 1
    %v544 = vrot.slane %v446, 1
    %v545 = vrot.slane %v447, 1
    %v546 = vcombine.low %v434, %v456
    %v548 = vunpack.c.l.s4 1966171168
    %v549 = vunpack.c.0.s8 %v548
    %v550 = vlaneseq
    %v551 = vshrl.u32 %v550, 7
    %v552 = vsub.s32 %v549, %v551
    %v553 = vrot.slane %v546, %v552
    %v555 = vunpack.c.l.s4 1966171168
    %v556 = vunpack.c.0.s8 %v555
    %v557 = vlaneseq
    %v558 = vshrl.u32 %v557, 7
    %v559 = vsub.s32 %v556, %v558
    %v560 = vrot.slane %v534, %v559
    %v561 = vcombine.low %v553, %v560
    %v562 = vcombine.high %v553, %v560
    %v564 = vunpack.c.l.s4 1966171168
    %v565 = vunpack.c.0.s8 %v564
    %v566 = vlaneseq
    %v567 = vshrl.u32 %v566, 7
    %v568 = vsub.s32 %v565, %v567
    %v569 = vrot.slane %v561, %v568
    %v571 = vunpack.c.l.s4 1966171168
    %v572 = vunpack.c.0.s8 %v571
    %v573 = vlaneseq
    %v574 = vshrl.u32 %v573, 7
    %v575 = vsub.s32 %v572, %v574
    %v576 = vrot.slane %v562, %v575
    %v577 = vcombine.high %v569, %v569
    %v578 = vcombine.low %v435, %v463
    %v580 = vunpack.c.l.s4 1966171168
    %v581 = vunpack.c.0.s8 %v580
    %v582 = vlaneseq
    %v583 = vshrl.u32 %v582, 7
    %v584 = vsub.s32 %v581, %v583
    %v585 = vrot.slane %v578, %v584
    %v587 = vunpack.c.l.s4 1966171168
    %v588 = vunpack.c.0.s8 %v587
    %v589 = vlaneseq
    %v590 = vshrl.u32 %v589, 7
    %v591 = vsub.s32 %v588, %v590
    %v592 = vrot.slane %v535, %v591
    %v593 = vcombine.low %v585, %v592
    %v594 = vcombine.high %v585, %v592
    %v596 = vunpack.c.l.s4 1966171168
    %v597 = vunpack.c.0.s8 %v596
    %v598 = vlaneseq
    %v599 = vshrl.u32 %v598, 7
    %v600 = vsub.s32 %v597, %v599
    %v601 = vrot.slane %v593, %v600
    %v603 = vunpack.c.l.s4 1966171168
    %v604 = vunpack.c.0.s8 %v603
    %v605 = vlaneseq
    %v606 = vshrl.u32 %v605, 7
    %v607 = vsub.s32 %v604, %v606
    %v608 = vrot.slane %v594, %v607
    %v609 = vcombine.high %v601, %v601
    %v610 = vcombine.low %v436, %v470
    %v612 = vunpack.c.l.s4 1966171168
    %v613 = vunpack.c.0.s8 %v612
    %v614 = vlaneseq
    %v615 = vshrl.u32 %v614, 7
    %v616 = vsub.s32 %v613, %v615
    %v617 = vrot.slane %v610, %v616
    %v619 = vunpack.c.l.s4 1966171168
    %v620 = vunpack.c.0.s8 %v619
    %v621 = vlaneseq
    %v622 = vshrl.u32 %v621, 7
    %v623 = vsub.s32 %v620, %v622
    %v624 = vrot.slane %v536, %v623
    %v625 = vcombine.low %v617, %v624
    %v626 = vcombine.high %v617, %v624
    %v628 = vunpack.c.l.s4 1966171168
    %v629 = vunpack.c.0.s8 %v628
    %v630 = vlaneseq
    %v631 = vshrl.u32 %v630, 7
    %v632 = vsub.s32 %v629, %v631
    %v633 = vrot.slane %v625, %v632
    %v635 = vunpack.c.l.s4 1966171168
    %v636 = vunpack.c.0.s8 %v635
    %v637 = vlaneseq
    %v638 = vshrl.u32 %v637, 7
    %v639 = vsub.s32 %v636, %v638
    %v640 = vrot.slane %v626, %v639
    %v641 = vcombine.high %v633, %v633
    %v642 = vcombine.low %v437, %v477
    %v644 = vunpack.c.l.s4 1966171168
    %v645 = vunpack.c.0.s8 %v644
    %v646 = vlaneseq
    %v647 = vshrl.u32 %v646, 7
    %v648 = vsub.s32 %v645, %v647
    %v649 = vrot.slane %v642, %v648
    %v651 = vunpack.c.l.s4 1966171168
    %v652 = vunpack.c.0.s8 %v651
    %v653 = vlaneseq
    %v654 = vshrl.u32 %v653, 7
    %v655 = vsub.s32 %v652, %v654
    %v656 = vrot.slane %v537, %v655
    %v657 = vcombine.low %v649, %v656
    %v658 = vcombine.high %v649, %v656
    %v660 = vunpack.c.l.s4 1966171168
    %v661 = vunpack.c.0.s8 %v660
    %v662 = vlaneseq
    %v663 = vshrl.u32 %v662, 7
    %v664 = vsub.s32 %v661, %v663
    %v665 = vrot.slane %v657, %v664
    %v667 = vunpack.c.l.s4 1966171168
    %v668 = vunpack.c.0.s8 %v667
    %v669 = vlaneseq
    %v670 = vshrl.u32 %v669, 7
    %v671 = vsub.s32 %v668, %v670
    %v672 = vrot.slane %v658, %v671
    %v673 = vcombine.high %v665, %v665
    %v674 = vcombine.low %v438, %v484
    %v676 = vunpack.c.l.s4 1966171168
    %v677 = vunpack.c.0.s8 %v676
    %v678 = vlaneseq
    %v679 = vshrl.u32 %v678, 7
    %v680 = vsub.s32 %v677, %v679
    %v681 = vrot.slane %v674, %v680
    %v683 = vunpack.c.l.s4 1966171168
    %v684 = vunpack.c.0.s8 %v683
    %v685 = vlaneseq
    %v686 = vshrl.u32 %v685, 7
    %v687 = vsub.s32 %v684, %v686
    %v688 = vrot.slane %v538, %v687
    %v689 = vcombine.low %v681, %v688
    %v690 = vcombine.high %v681, %v688
    %v692 = vunpack.c.l.s4 1966171168
    %v693 = vunpack.c.0.s8 %v692
    %v694 = vlaneseq
    %v695 = vshrl.u32 %v694, 7
    %v696 = vsub.s32 %v693, %v695
    %v697 = vrot.slane %v689, %v696
    %v699 = vunpack.c.l.s4 1966171168
    %v700 = vunpack.c.0.s8 %v699
    %v701 = vlaneseq
    %v702 = vshrl.u32 %v701, 7
    %v703 = vsub.s32 %v700, %v702
    %v704 = vrot.slane %v690, %v703
    %v705 = vcombine.high %v697, %v697
    %v706 = vcombine.low %v439, %v491
    %v708 = vunpack.c.l.s4 1966171168
    %v709 = vunpack.c.0.s8 %v708
    %v710 = vlaneseq
    %v711 = vshrl.u32 %v710, 7
    %v712 = vsub.s32 %v709, %v711
    %v713 = vrot.slane %v706, %v712
    %v715 = vunpack.c.l.s4 1966171168
    %v716 = vunpack.c.0.s8 %v715
    %v717 = vlaneseq
    %v718 = vshrl.u32 %v717, 7
    %v719 = vsub.s32 %v716, %v718
    %v720 = vrot.slane %v539, %v719
    %v721 = vcombine.low %v713, %v720
    %v722 = vcombine.high %v713, %v720
    %v724 = vunpack.c.l.s4 1966171168
    %v725 = vunpack.c.0.s8 %v724
    %v726 = vlaneseq
    %v727 = vshrl.u32 %v726, 7
    %v728 = vsub.s32 %v725, %v727
    %v729 = vrot.slane %v721, %v728
    %v731 = vunpack.c.l.s4 1966171168
    %v732 = vunpack.c.0.s8 %v731
    %v733 = vlaneseq
    %v734 = vshrl.u32 %v733, 7
    %v735 = vsub.s32 %v732, %v734
    %v736 = vrot.slane %v722, %v735
    %v737 = vcombine.high %v729, %v729
    %v738 = vcombine.low %v442, %v498
    %v740 = vunpack.c.l.s4 1966171168
    %v741 = vunpack.c.0.s8 %v740
    %v742 = vlaneseq
    %v743 = vshrl.u32 %v742, 7
    %v744 = vsub.s32 %v741, %v743
    %v745 = vrot.slane %v738, %v744
    %v747 = vunpack.c.l.s4 1966171168
    %v748 = vunpack.c.0.s8 %v747
    %v749 = vlaneseq
    %v750 = vshrl.u32 %v749, 7
    %v751 = vsub.s32 %v748, %v750
    %v752 = vrot.slane %v540, %v751
    %v753 = vcombine.low %v745, %v752
    %v754 = vcombine.high %v745, %v752
    %v756 = vunpack.c.l.s4 1966171168
    %v757 = vunpack.c.0.s8 %v756
    %v758 = vlaneseq
    %v759 = vshrl.u32 %v758, 7
    %v760 = vsub.s32 %v757, %v759
    %v761 = vrot.slane %v753, %v760
    %v763 = vunpack.c.l.s4 1966171168
    %v764 = vunpack.c.0.s8 %v763
    %v765 = vlaneseq
    %v766 = vshrl.u32 %v765, 7
    %v767 = vsub.s32 %v764, %v766
    %v768 = vrot.slane %v754, %v767
    %v769 = vcombine.high %v761, %v761
    %v770 = vcombine.low %v443, %v505
    %v772 = vunpack.c.l.s4 1966171168
    %v773 = vunpack.c.0.s8 %v772
    %v774 = vlaneseq
    %v775 = vshrl.u32 %v774, 7
    %v776 = vsub.s32 %v773, %v775
    %v777 = vrot.slane %v770, %v776
    %v779 = vunpack.c.l.s4 1966171168
    %v780 = vunpack.c.0.s8 %v779
    %v781 = vlaneseq
    %v782 = vshrl.u32 %v781, 7
    %v783 = vsub.s32 %v780, %v782
    %v784 = vrot.slane %v541, %v783
    %v785 = vcombine.low %v777, %v784
    %v786 = vcombine.high %v777, %v784
    %v788 = vunpack.c.l.s4 1966171168
    %v789 = vunpack.c.0.s8 %v788
    %v790 = vlaneseq
    %v791 = vshrl.u32 %v790, 7
    %v792 = vsub.s32 %v789, %v791
    %v793 = vrot.slane %v785, %v792
    %v795 = vunpack.c.l.s4 1966171168
    %v796 = vunpack.c.0.s8 %v795
    %v797 = vlaneseq
    %v798 = vshrl.u32 %v797, 7
    %v799 = vsub.s32 %v796, %v798
    %v800 = vrot.slane %v786, %v799
    %v801 = vcombine.high %v793, %v793
    %v802 = vcombine.low %v444, %v512
    %v804 = vunpack.c.l.s4 1966171168
    %v805 = vunpack.c.0.s8 %v804
    %v806 = vlaneseq
    %v807 = vshrl.u32 %v806, 7
    %v808 = vsub.s32 %v805, %v807
    %v809 = vrot.slane %v802, %v808
    %v811 = vunpack.c.l.s4 1966171168
    %v812 = vunpack.c.0.s8 %v811
    %v813 = vlaneseq
    %v814 = vshrl.u32 %v813, 7
    %v815 = vsub.s32 %v812, %v814
    %v816 = vrot.slane %v542, %v815
    %v817 = vcombine.low %v809, %v816
    %v818 = vcombine.high %v809, %v816
    %v820 = vunpack.c.l.s4 1966171168
    %v821 = vunpack.c.0.s8 %v820
    %v822 = vlaneseq
    %v823 = vshrl.u32 %v822, 7
    %v824 = vsub.s32 %v821, %v823
    %v825 = vrot.slane %v817, %v824
    %v827 = vunpack.c.l.s4 1966171168
    %v828 = vunpack.c.0.s8 %v827
    %v829 = vlaneseq
    %v830 = vshrl.u32 %v829, 7
    %v831 = vsub.s32 %v828, %v830
    %v832 = vrot.slane %v818, %v831
    %v833 = vcombine.high %v825, %v825
    %v834 = vcombine.low %v445, %v519
    %v836 = vunpack.c.l.s4 1966171168
    %v837 = vunpack.c.0.s8 %v836
    %v838 = vlaneseq
    %v839 = vshrl.u32 %v838, 7
    %v840 = vsub.s32 %v837, %v839
    %v841 = vrot.slane %v834, %v840
    %v843 = vunpack.c.l.s4 1966171168
    %v844 = vunpack.c.0.s8 %v843
    %v845 = vlaneseq
    %v846 = vshrl.u32 %v845, 7
    %v847 = vsub.s32 %v844, %v846
    %v848 = vrot.slane %v543, %v847
    %v849 = vcombine.low %v841, %v848
    %v850 = vcombine.high %v841, %v848
    %v852 = vunpack.c.l.s4 1966171168
    %v853 = vunpack.c.0.s8 %v852
    %v854 = vlaneseq
    %v855 = vshrl.u32 %v854, 7
    %v856 = vsub.s32 %v853, %v855
    %v857 = vrot.slane %v849, %v856
    %v859 = vunpack.c.l.s4 1966171168
    %v860 = vunpack.c.0.s8 %v859
    %v861 = vlaneseq
    %v862 = vshrl.u32 %v861, 7
    %v863 = vsub.s32 %v860, %v862
    %v864 = vrot.slane %v850, %v863
    %v865 = vcombine.high %v857, %v857
    %v866 = vcombine.low %v446, %v526
    %v868 = vunpack.c.l.s4 1966171168
    %v869 = vunpack.c.0.s8 %v868
    %v870 = vlaneseq
    %v871 = vshrl.u32 %v870, 7
    %v872 = vsub.s32 %v869, %v871
    %v873 = vrot.slane %v866, %v872
    %v875 = vunpack.c.l.s4 1966171168
    %v876 = vunpack.c.0.s8 %v875
    %v877 = vlaneseq
    %v878 = vshrl.u32 %v877, 7
    %v879 = vsub.s32 %v876, %v878
    %v880 = vrot.slane %v544, %v879
    %v881 = vcombine.low %v873, %v880
    %v882 = vcombine.high %v873, %v880
    %v884 = vunpack.c.l.s4 1966171168
    %v885 = vunpack.c.0.s8 %v884
    %v886 = vlaneseq
    %v887 = vshrl.u32 %v886, 7
    %v888 = vsub.s32 %v885, %v887
    %v889 = vrot.slane %v881, %v888
    %v891 = vunpack.c.l.s4 1966171168
    %v892 = vunpack.c.0.s8 %v891
    %v893 = vlaneseq
    %v894 = vshrl.u32 %v893, 7
    %v895 = vsub.s32 %v892, %v894
    %v896 = vrot.slane %v882, %v895
    %v897 = vcombine.high %v889, %v889
    %v898 = vcombine.low %v447, %v533
    %v900 = vunpack.c.l.s4 1966171168
    %v901 = vunpack.c.0.s8 %v900
    %v902 = vlaneseq
    %v903 = vshrl.u32 %v902, 7
    %v904 = vsub.s32 %v901, %v903
    %v905 = vrot.slane %v898, %v904
    %v907 = vunpack.c.l.s4 1966171168
    %v908 = vunpack.c.0.s8 %v907
    %v909 = vlaneseq
    %v910 = vshrl.u32 %v909, 7
    %v911 = vsub.s32 %v908, %v910
    %v912 = vrot.slane %v545, %v911
    %v913 = vcombine.low %v905, %v912
    %v914 = vcombine.high %v905, %v912
    %v916 = vunpack.c.l.s4 1966171168
    %v917 = vunpack.c.0.s8 %v916
    %v918 = vlaneseq
    %v919 = vshrl.u32 %v918, 7
    %v920 = vsub.s32 %v917, %v919
    %v921 = vrot.slane %v913, %v920
    %v923 = vunpack.c.l.s4 1966171168
    %v924 = vunpack.c.0.s8 %v923
    %v925 = vlaneseq
    %v926 = vshrl.u32 %v925, 7
    %v927 = vsub.s32 %v924, %v926
    %v928 = vrot.slane %v914, %v927
    %v929 = vcombine.high %v921, %v921
    %v930 = vld [vmem:[#allocation8] sm:$0xf]
    %v931 = vld [vmem:[#allocation8 + $0x4] sm:$0xf]
    %v932 = vld [vmem:[#allocation8 + $0x8] sm:$0xf]
    %v933 = vld [vmem:[#allocation8 + $0xc] sm:$0xf]
    %v934 = vld [vmem:[#allocation8 + $0x10] sm:$0xf]
    %v935 = vld [vmem:[#allocation8 + $0x14] sm:$0xf]
    %v936 = vld [vmem:[#allocation8 + $0x18] sm:$0xf]
    %v937 = vld [vmem:[#allocation8 + $0x1c] sm:$0xf]
    %v938 = vld [vmem:[#allocation8 + $0x20] sm:$0xf]
    %v939 = vld [vmem:[#allocation8 + $0x24] sm:$0xf]
    %v940 = vld [vmem:[#allocation8 + $0x28] sm:$0xf]
    %v941 = vld [vmem:[#allocation8 + $0x2c] sm:$0xf]
    %v942 = vld [vmem:[#allocation8 + $0x30] sm:$0xf]
    %v943 = vld [vmem:[#allocation8 + $0x34] sm:$0xf]
    %v944 = vld [vmem:[#allocation8 + $0x38] sm:$0xf]
    %v945 = vld [vmem:[#allocation8 + $0x3c] sm:$0xf]
    %v946 = vld [vmem:[#allocation8 + $0x40] sm:$0xf]
    %v947 = vld [vmem:[#allocation8 + $0x44] sm:$0xf]
    %v948 = vld [vmem:[#allocation8 + $0x48] sm:$0xf]
    %v949 = vld [vmem:[#allocation8 + $0x4c] sm:$0xf]
    %v950 = vld [vmem:[#allocation8 + $0x50] sm:$0xf]
    %v951 = vld [vmem:[#allocation8 + $0x54] sm:$0xf]
    %v952 = vld [vmem:[#allocation8 + $0x58] sm:$0xf]
    %v953 = vld [vmem:[#allocation8 + $0x5c] sm:$0xf]
    %v954 = vld [vmem:[#allocation8 + $0x60] sm:$0xf]
    %v955 = vld [vmem:[#allocation8 + $0x64] sm:$0xf]
    %v956 = vld [vmem:[#allocation8 + $0x68] sm:$0xf]
    %v957 = vld [vmem:[#allocation8 + $0x6c] sm:$0xf]
    %v958 = vld [vmem:[#allocation8 + $0x70] sm:$0xf]
    %v959 = vld [vmem:[#allocation8 + $0x74] sm:$0xf]
    %v960 = vld [vmem:[#allocation8 + $0x78] sm:$0xf]
    %v961 = vld [vmem:[#allocation8 + $0x7c] sm:$0xf]
    %v962 = vld [vmem:[#allocation8 + $0x80] sm:$0xf]
    %v963 = vld [vmem:[#allocation8 + $0x84] sm:$0xf]
    %v964 = vld [vmem:[#allocation8 + $0x88] sm:$0xf]
    %v965 = vld [vmem:[#allocation8 + $0x8c] sm:$0xf]
    %v966 = vld [vmem:[#allocation8 + $0x90] sm:$0xf]
    %v967 = vld [vmem:[#allocation8 + $0x94] sm:$0xf]
    %v968 = vld [vmem:[#allocation8 + $0x98] sm:$0xf]
    %v969 = vld [vmem:[#allocation8 + $0x9c] sm:$0xf]
    %v970 = vld [vmem:[#allocation8 + $0xa0] sm:$0xf]
    %v971 = vld [vmem:[#allocation8 + $0xa4] sm:$0xf]
    %v972 = vld [vmem:[#allocation8 + $0xa8] sm:$0xf]
    %v973 = vld [vmem:[#allocation8 + $0xac] sm:$0xf]
    %v974 = vld [vmem:[#allocation8 + $0xb0] sm:$0xf]
    %v975 = vld [vmem:[#allocation8 + $0xb4] sm:$0xf]
    %v976 = vld [vmem:[#allocation8 + $0xb8] sm:$0xf]
    %v977 = vld [vmem:[#allocation8 + $0xbc] sm:$0xf]
    %v979 = vshrl.u32 %v440, 16
    %v981 = vshll.u32 %v440, 16
    %v983 = vrot.slane %v981, 1
    %v984 = vor.u32 %v979, %v983
    %v986 = vshrl.u32 %v448, 16
    %v988 = vshll.u32 %v448, 16
    %v990 = vrot.slane %v988, 1
    %v991 = vor.u32 %v986, %v990
    %v992 = vrot.slane %v440, 1
    %v993 = vrot.slane %v448, 1
    %v994 = vcombine.low %v440, %v984
    %v996 = vunpack.c.l.s4 1966171168
    %v997 = vunpack.c.0.s8 %v996
    %v998 = vlaneseq
    %v999 = vshrl.u32 %v998, 7
    %v1000 = vsub.s32 %v997, %v999
    %v1001 = vrot.slane %v994, %v1000
    %v1003 = vunpack.c.l.s4 1966171168
    %v1004 = vunpack.c.0.s8 %v1003
    %v1005 = vlaneseq
    %v1006 = vshrl.u32 %v1005, 7
    %v1007 = vsub.s32 %v1004, %v1006
    %v1008 = vrot.slane %v992, %v1007
    %v1009 = vcombine.low %v1001, %v1008
    %v1010 = vcombine.high %v1001, %v1008
    %v1012 = vunpack.c.l.s4 1966171168
    %v1013 = vunpack.c.0.s8 %v1012
    %v1014 = vlaneseq
    %v1015 = vshrl.u32 %v1014, 7
    %v1016 = vsub.s32 %v1013, %v1015
    %v1017 = vrot.slane %v1009, %v1016
    %v1019 = vunpack.c.l.s4 1966171168
    %v1020 = vunpack.c.0.s8 %v1019
    %v1021 = vlaneseq
    %v1022 = vshrl.u32 %v1021, 7
    %v1023 = vsub.s32 %v1020, %v1022
    %v1024 = vrot.slane %v1010, %v1023
    %v1025 = vcombine.high %v1017, %v1017
    %v1026 = vcombine.low %v448, %v991
    %v1028 = vunpack.c.l.s4 1966171168
    %v1029 = vunpack.c.0.s8 %v1028
    %v1030 = vlaneseq
    %v1031 = vshrl.u32 %v1030, 7
    %v1032 = vsub.s32 %v1029, %v1031
    %v1033 = vrot.slane %v1026, %v1032
    %v1035 = vunpack.c.l.s4 1966171168
    %v1036 = vunpack.c.0.s8 %v1035
    %v1037 = vlaneseq
    %v1038 = vshrl.u32 %v1037, 7
    %v1039 = vsub.s32 %v1036, %v1038
    %v1040 = vrot.slane %v993, %v1039
    %v1041 = vcombine.low %v1033, %v1040
    %v1042 = vcombine.high %v1033, %v1040
    %v1044 = vunpack.c.l.s4 1966171168
    %v1045 = vunpack.c.0.s8 %v1044
    %v1046 = vlaneseq
    %v1047 = vshrl.u32 %v1046, 7
    %v1048 = vsub.s32 %v1045, %v1047
    %v1049 = vrot.slane %v1041, %v1048
    %v1051 = vunpack.c.l.s4 1966171168
    %v1052 = vunpack.c.0.s8 %v1051
    %v1053 = vlaneseq
    %v1054 = vshrl.u32 %v1053, 7
    %v1055 = vsub.s32 %v1052, %v1054
    %v1056 = vrot.slane %v1042, %v1055
    %v1057 = vcombine.high %v1049, %v1049
    %s1058 = scalar_lea.vmem [#allocation8], 192
    %v1059 = vld [vmem:[%s1058] sm:$0xf]
    %v1060 = vld [vmem:[%s1058 + $0x4] sm:$0xf]
    %v1061 = vld [vmem:[%s1058 + $0x8] sm:$0xf]
    %v1062 = vld [vmem:[%s1058 + $0xc] sm:$0xf]
    %v1063 = vld [vmem:[%s1058 + $0x10] sm:$0xf]
    %v1064 = vld [vmem:[%s1058 + $0x14] sm:$0xf]
    %v1065 = vld [vmem:[%s1058 + $0x18] sm:$0xf]
    %v1066 = vld [vmem:[%s1058 + $0x1c] sm:$0xf]
    %v1067 = vld [vmem:[%s1058 + $0x20] sm:$0xf]
    %v1068 = vld [vmem:[%s1058 + $0x24] sm:$0xf]
    %v1069 = vld [vmem:[%s1058 + $0x28] sm:$0xf]
    %v1070 = vld [vmem:[%s1058 + $0x2c] sm:$0xf]
    %v1071 = vld [vmem:[%s1058 + $0x30] sm:$0xf]
    %v1072 = vld [vmem:[%s1058 + $0x34] sm:$0xf]
    %v1073 = vld [vmem:[%s1058 + $0x38] sm:$0xf]
    %v1074 = vld [vmem:[%s1058 + $0x3c] sm:$0xf]
    %v1075 = vld [vmem:[%s1058 + $0x40] sm:$0xf]
    %v1076 = vld [vmem:[%s1058 + $0x44] sm:$0xf]
    %v1077 = vld [vmem:[%s1058 + $0x48] sm:$0xf]
    %v1078 = vld [vmem:[%s1058 + $0x4c] sm:$0xf]
    %v1079 = vld [vmem:[%s1058 + $0x50] sm:$0xf]
    %v1080 = vld [vmem:[%s1058 + $0x54] sm:$0xf]
    %v1081 = vld [vmem:[%s1058 + $0x58] sm:$0xf]
    %v1082 = vld [vmem:[%s1058 + $0x5c] sm:$0xf]
    %v1083 = vld [vmem:[%s1058 + $0x60] sm:$0xf]
    %v1084 = vld [vmem:[%s1058 + $0x64] sm:$0xf]
    %v1085 = vld [vmem:[%s1058 + $0x68] sm:$0xf]
    %v1086 = vld [vmem:[%s1058 + $0x6c] sm:$0xf]
    %v1087 = vld [vmem:[%s1058 + $0x70] sm:$0xf]
    %v1088 = vld [vmem:[%s1058 + $0x74] sm:$0xf]
    %v1089 = vld [vmem:[%s1058 + $0x78] sm:$0xf]
    %v1090 = vld [vmem:[%s1058 + $0x7c] sm:$0xf]
    %v1091 = vld [vmem:[%s1058 + $0x80] sm:$0xf]
    %v1092 = vld [vmem:[%s1058 + $0x84] sm:$0xf]
    %v1093 = vld [vmem:[%s1058 + $0x88] sm:$0xf]
    %v1094 = vld [vmem:[%s1058 + $0x8c] sm:$0xf]
    %v1095 = vld [vmem:[%s1058 + $0x90] sm:$0xf]
    %v1096 = vld [vmem:[%s1058 + $0x94] sm:$0xf]
    %v1097 = vld [vmem:[%s1058 + $0x98] sm:$0xf]
    %v1098 = vld [vmem:[%s1058 + $0x9c] sm:$0xf]
    %v1099 = vld [vmem:[%s1058 + $0xa0] sm:$0xf]
    %v1100 = vld [vmem:[%s1058 + $0xa4] sm:$0xf]
    %v1101 = vld [vmem:[%s1058 + $0xa8] sm:$0xf]
    %v1102 = vld [vmem:[%s1058 + $0xac] sm:$0xf]
    %v1103 = vld [vmem:[%s1058 + $0xb0] sm:$0xf]
    %v1104 = vld [vmem:[%s1058 + $0xb4] sm:$0xf]
    %v1105 = vld [vmem:[%s1058 + $0xb8] sm:$0xf]
    %v1106 = vld [vmem:[%s1058 + $0xbc] sm:$0xf]
    %v1107 = vcombine.low %v601, %v608
    %v1108 = vcombine.low %v609, %v633
    %v1109 = vcombine.low %v640, %v641
    %v1110 = vcombine.low %v665, %v672
    %v1112 = vunpack.c.l.s4 1966171168
    %v1113 = vunpack.c.0.s8 %v1112
    %v1114 = vlaneseq
    %v1115 = vshrl.u32 %v1114, 7
    %v1116 = vsub.s32 %v1113, %v1115
    %v1117 = vrot.slane %v1107, %v1116
    %v1119 = vunpack.c.l.s4 1966171168
    %v1120 = vunpack.c.0.s8 %v1119
    %v1121 = vlaneseq
    %v1122 = vshrl.u32 %v1121, 7
    %v1123 = vsub.s32 %v1120, %v1122
    %v1124 = vrot.slane %v1108, %v1123
    %v1126 = vunpack.c.l.s4 1966171168
    %v1127 = vunpack.c.0.s8 %v1126
    %v1128 = vlaneseq
    %v1129 = vshrl.u32 %v1128, 7
    %v1130 = vsub.s32 %v1127, %v1129
    %v1131 = vrot.slane %v1109, %v1130
    %v1133 = vunpack.c.l.s4 1966171168
    %v1134 = vunpack.c.0.s8 %v1133
    %v1135 = vlaneseq
    %v1136 = vshrl.u32 %v1135, 7
    %v1137 = vsub.s32 %v1134, %v1136
    %v1138 = vrot.slane %v1110, %v1137
    %v1139 = vcombine.low %v1117, %v1124
    %v1140 = vcombine.high %v1117, %v1124
    %v1141 = vcombine.low %v1131, %v1138
    %v1142 = vcombine.high %v1131, %v1138
    %v1144 = vunpack.c.l.s4 1966171168
    %v1145 = vunpack.c.0.s8 %v1144
    %v1146 = vlaneseq
    %v1147 = vshrl.u32 %v1146, 7
    %v1148 = vsub.s32 %v1145, %v1147
    %v1149 = vrot.slane %v1139, %v1148
    %v1151 = vunpack.c.l.s4 1966171168
    %v1152 = vunpack.c.0.s8 %v1151
    %v1153 = vlaneseq
    %v1154 = vshrl.u32 %v1153, 7
    %v1155 = vsub.s32 %v1152, %v1154
    %v1156 = vrot.slane %v1140, %v1155
    %v1158 = vunpack.c.l.s4 1966171168
    %v1159 = vunpack.c.0.s8 %v1158
    %v1160 = vlaneseq
    %v1161 = vshrl.u32 %v1160, 7
    %v1162 = vsub.s32 %v1159, %v1161
    %v1163 = vrot.slane %v1141, %v1162
    %v1165 = vunpack.c.l.s4 1966171168
    %v1166 = vunpack.c.0.s8 %v1165
    %v1167 = vlaneseq
    %v1168 = vshrl.u32 %v1167, 7
    %v1169 = vsub.s32 %v1166, %v1168
    %v1170 = vrot.slane %v1142, %v1169
    %v1171 = vcombine.low %v1149, %v1163
    %v1172 = vcombine.high %v1149, %v1163
    %v1173 = vcombine.low %v1156, %v1170
    %v1174 = vcombine.low %v673, %v697
    %v1175 = vcombine.low %v704, %v705
    %v1176 = vcombine.low %v729, %v736
    %v1177 = vcombine.low %v737, %v1017
    %v1179 = vunpack.c.l.s4 1966171168
    %v1180 = vunpack.c.0.s8 %v1179
    %v1181 = vlaneseq
    %v1182 = vshrl.u32 %v1181, 7
    %v1183 = vsub.s32 %v1180, %v1182
    %v1184 = vrot.slane %v1174, %v1183
    %v1186 = vunpack.c.l.s4 1966171168
    %v1187 = vunpack.c.0.s8 %v1186
    %v1188 = vlaneseq
    %v1189 = vshrl.u32 %v1188, 7
    %v1190 = vsub.s32 %v1187, %v1189
    %v1191 = vrot.slane %v1175, %v1190
    %v1193 = vunpack.c.l.s4 1966171168
    %v1194 = vunpack.c.0.s8 %v1193
    %v1195 = vlaneseq
    %v1196 = vshrl.u32 %v1195, 7
    %v1197 = vsub.s32 %v1194, %v1196
    %v1198 = vrot.slane %v1176, %v1197
    %v1200 = vunpack.c.l.s4 1966171168
    %v1201 = vunpack.c.0.s8 %v1200
    %v1202 = vlaneseq
    %v1203 = vshrl.u32 %v1202, 7
    %v1204 = vsub.s32 %v1201, %v1203
    %v1205 = vrot.slane %v1177, %v1204
    %v1206 = vcombine.low %v1184, %v1191
    %v1207 = vcombine.high %v1184, %v1191
    %v1208 = vcombine.low %v1198, %v1205
    %v1209 = vcombine.high %v1198, %v1205
    %v1211 = vunpack.c.l.s4 1966171168
    %v1212 = vunpack.c.0.s8 %v1211
    %v1213 = vlaneseq
    %v1214 = vshrl.u32 %v1213, 7
    %v1215 = vsub.s32 %v1212, %v1214
    %v1216 = vrot.slane %v1206, %v1215
    %v1218 = vunpack.c.l.s4 1966171168
    %v1219 = vunpack.c.0.s8 %v1218
    %v1220 = vlaneseq
    %v1221 = vshrl.u32 %v1220, 7
    %v1222 = vsub.s32 %v1219, %v1221
    %v1223 = vrot.slane %v1207, %v1222
    %v1225 = vunpack.c.l.s4 1966171168
    %v1226 = vunpack.c.0.s8 %v1225
    %v1227 = vlaneseq
    %v1228 = vshrl.u32 %v1227, 7
    %v1229 = vsub.s32 %v1226, %v1228
    %v1230 = vrot.slane %v1208, %v1229
    %v1232 = vunpack.c.l.s4 1966171168
    %v1233 = vunpack.c.0.s8 %v1232
    %v1234 = vlaneseq
    %v1235 = vshrl.u32 %v1234, 7
    %v1236 = vsub.s32 %v1233, %v1235
    %v1237 = vrot.slane %v1209, %v1236
    %v1238 = vcombine.low %v1216, %v1230
    %v1239 = vcombine.high %v1216, %v1230
    %v1240 = vcombine.low %v1223, %v1237
    %v1241 = vcombine.low %v1024, %v1025
    %v1242 = vcombine.low %v793, %v800
    %v1243 = vcombine.low %v801, %v825
    %v1244 = vcombine.low %v832, %v833
    %v1246 = vunpack.c.l.s4 1966171168
    %v1247 = vunpack.c.0.s8 %v1246
    %v1248 = vlaneseq
    %v1249 = vshrl.u32 %v1248, 7
    %v1250 = vsub.s32 %v1247, %v1249
    %v1251 = vrot.slane %v1241, %v1250
    %v1253 = vunpack.c.l.s4 1966171168
    %v1254 = vunpack.c.0.s8 %v1253
    %v1255 = vlaneseq
    %v1256 = vshrl.u32 %v1255, 7
    %v1257 = vsub.s32 %v1254, %v1256
    %v1258 = vrot.slane %v1242, %v1257
    %v1260 = vunpack.c.l.s4 1966171168
    %v1261 = vunpack.c.0.s8 %v1260
    %v1262 = vlaneseq
    %v1263 = vshrl.u32 %v1262, 7
    %v1264 = vsub.s32 %v1261, %v1263
    %v1265 = vrot.slane %v1243, %v1264
    %v1267 = vunpack.c.l.s4 1966171168
    %v1268 = vunpack.c.0.s8 %v1267
    %v1269 = vlaneseq
    %v1270 = vshrl.u32 %v1269, 7
    %v1271 = vsub.s32 %v1268, %v1270
    %v1272 = vrot.slane %v1244, %v1271
    %v1273 = vcombine.low %v1251, %v1258
    %v1274 = vcombine.high %v1251, %v1258
    %v1275 = vcombine.low %v1265, %v1272
    %v1276 = vcombine.high %v1265, %v1272
    %v1278 = vunpack.c.l.s4 1966171168
    %v1279 = vunpack.c.0.s8 %v1278
    %v1280 = vlaneseq
    %v1281 = vshrl.u32 %v1280, 7
    %v1282 = vsub.s32 %v1279, %v1281
    %v1283 = vrot.slane %v1273, %v1282
    %v1285 = vunpack.c.l.s4 1966171168
    %v1286 = vunpack.c.0.s8 %v1285
    %v1287 = vlaneseq
    %v1288 = vshrl.u32 %v1287, 7
    %v1289 = vsub.s32 %v1286, %v1288
    %v1290 = vrot.slane %v1274, %v1289
    %v1292 = vunpack.c.l.s4 1966171168
    %v1293 = vunpack.c.0.s8 %v1292
    %v1294 = vlaneseq
    %v1295 = vshrl.u32 %v1294, 7
    %v1296 = vsub.s32 %v1293, %v1295
    %v1297 = vrot.slane %v1275, %v1296
    %v1299 = vunpack.c.l.s4 1966171168
    %v1300 = vunpack.c.0.s8 %v1299
    %v1301 = vlaneseq
    %v1302 = vshrl.u32 %v1301, 7
    %v1303 = vsub.s32 %v1300, %v1302
    %v1304 = vrot.slane %v1276, %v1303
    %v1305 = vcombine.low %v1283, %v1297
    %v1306 = vcombine.high %v1283, %v1297
    %v1307 = vcombine.low %v1290, %v1304
    %v1308 = vcombine.low %v857, %v864
    %v1309 = vcombine.low %v865, %v889
    %v1310 = vcombine.low %v896, %v897
    %v1311 = vcombine.low %v921, %v928
    %v1313 = vunpack.c.l.s4 1966171168
    %v1314 = vunpack.c.0.s8 %v1313
    %v1315 = vlaneseq
    %v1316 = vshrl.u32 %v1315, 7
    %v1317 = vsub.s32 %v1314, %v1316
    %v1318 = vrot.slane %v1308, %v1317
    %v1320 = vunpack.c.l.s4 1966171168
    %v1321 = vunpack.c.0.s8 %v1320
    %v1322 = vlaneseq
    %v1323 = vshrl.u32 %v1322, 7
    %v1324 = vsub.s32 %v1321, %v1323
    %v1325 = vrot.slane %v1309, %v1324
    %v1327 = vunpack.c.l.s4 1966171168
    %v1328 = vunpack.c.0.s8 %v1327
    %v1329 = vlaneseq
    %v1330 = vshrl.u32 %v1329, 7
    %v1331 = vsub.s32 %v1328, %v1330
    %v1332 = vrot.slane %v1310, %v1331
    %v1334 = vunpack.c.l.s4 1966171168
    %v1335 = vunpack.c.0.s8 %v1334
    %v1336 = vlaneseq
    %v1337 = vshrl.u32 %v1336, 7
    %v1338 = vsub.s32 %v1335, %v1337
    %v1339 = vrot.slane %v1311, %v1338
    %v1340 = vcombine.low %v1318, %v1325
    %v1341 = vcombine.high %v1318, %v1325
    %v1342 = vcombine.low %v1332, %v1339
    %v1343 = vcombine.high %v1332, %v1339
    %v1345 = vunpack.c.l.s4 1966171168
    %v1346 = vunpack.c.0.s8 %v1345
    %v1347 = vlaneseq
    %v1348 = vshrl.u32 %v1347, 7
    %v1349 = vsub.s32 %v1346, %v1348
    %v1350 = vrot.slane %v1340, %v1349
    %v1352 = vunpack.c.l.s4 1966171168
    %v1353 = vunpack.c.0.s8 %v1352
    %v1354 = vlaneseq
    %v1355 = vshrl.u32 %v1354, 7
    %v1356 = vsub.s32 %v1353, %v1355
    %v1357 = vrot.slane %v1341, %v1356
    %v1359 = vunpack.c.l.s4 1966171168
    %v1360 = vunpack.c.0.s8 %v1359
    %v1361 = vlaneseq
    %v1362 = vshrl.u32 %v1361, 7
    %v1363 = vsub.s32 %v1360, %v1362
    %v1364 = vrot.slane %v1342, %v1363
    %v1366 = vunpack.c.l.s4 1966171168
    %v1367 = vunpack.c.0.s8 %v1366
    %v1368 = vlaneseq
    %v1369 = vshrl.u32 %v1368, 7
    %v1370 = vsub.s32 %v1367, %v1369
    %v1371 = vrot.slane %v1343, %v1370
    %v1372 = vcombine.low %v1350, %v1364
    %v1373 = vcombine.high %v1350, %v1364
    %v1374 = vcombine.low %v1357, %v1371
    %v1375 = vcombine.low %v929, %v1049
    %v1376 = vcombine.low %v1056, %v1057
    %v1378 = vunpack.c.l.s4 1966171168
    %v1379 = vunpack.c.0.s8 %v1378
    %v1380 = vlaneseq
    %v1381 = vshrl.u32 %v1380, 7
    %v1382 = vsub.s32 %v1379, %v1381
    %v1383 = vrot.slane %v1375, %v1382
    %v1385 = vunpack.c.l.s4 1966171168
    %v1386 = vunpack.c.0.s8 %v1385
    %v1387 = vlaneseq
    %v1388 = vshrl.u32 %v1387, 7
    %v1389 = vsub.s32 %v1386, %v1388
    %v1390 = vrot.slane %v1376, %v1389
    %v1391 = vcombine.low %v1383, %v1390
    %v1392 = vcombine.high %v1383, %v1390
    %v1394 = vunpack.c.l.s4 1966171168
    %v1395 = vunpack.c.0.s8 %v1394
    %v1396 = vlaneseq
    %v1397 = vshrl.u32 %v1396, 7
    %v1398 = vsub.s32 %v1395, %v1397
    %v1399 = vrot.slane %v1391, %v1398
    %v1401 = vunpack.c.l.s4 1966171168
    %v1402 = vunpack.c.0.s8 %v1401
    %v1403 = vlaneseq
    %v1404 = vshrl.u32 %v1403, 7
    %v1405 = vsub.s32 %v1402, %v1404
    %v1406 = vrot.slane %v1392, %v1405
    %v1407 = vcombine.high %v1399, %v1399
    %v1471 = vunpack.c.l.b16 %v1059
    %v1472 = vunpack.c.l.b16 %v1060
    %v1473 = vunpack.c.l.b16 %v1061
    %v1474 = vunpack.c.l.b16 %v1062
    %v1475 = vunpack.c.l.b16 %v1063
    %v1476 = vunpack.c.l.b16 %v1064
    %v1477 = vunpack.c.l.b16 %v1065
    %v1478 = vunpack.c.l.b16 %v1066
    %v1479 = vunpack.c.l.b16 %v1067
    %v1480 = vunpack.c.l.b16 %v1068
    %v1481 = vunpack.c.l.b16 %v1069
    %v1482 = vunpack.c.l.b16 %v1070
    %v1483 = vunpack.c.l.b16 %v1071
    %v1484 = vunpack.c.l.b16 %v1072
    %v1485 = vunpack.c.l.b16 %v1073
    %v1486 = vunpack.c.l.b16 %v1074
    %v1487 = vunpack.c.l.b16 %v1075
    %v1488 = vunpack.c.l.b16 %v1076
    %v1489 = vunpack.c.l.b16 %v1077
    %v1490 = vunpack.c.l.b16 %v1078
    %v1491 = vunpack.c.l.b16 %v1079
    %v1492 = vunpack.c.l.b16 %v1080
    %v1493 = vunpack.c.l.b16 %v1081
    %v1494 = vunpack.c.l.b16 %v1082
    %v1495 = vunpack.c.l.b16 %v1083
    %v1496 = vunpack.c.l.b16 %v1084
    %v1497 = vunpack.c.l.b16 %v1085
    %v1498 = vunpack.c.l.b16 %v1086
    %v1499 = vunpack.c.l.b16 %v1087
    %v1500 = vunpack.c.l.b16 %v1088
    %v1501 = vunpack.c.l.b16 %v1089
    %v1502 = vunpack.c.l.b16 %v1090
    %v1503 = vunpack.c.l.b16 %v1091
    %v1504 = vunpack.c.l.b16 %v1092
    %v1505 = vunpack.c.l.b16 %v1093
    %v1506 = vunpack.c.l.b16 %v1094
    %v1507 = vunpack.c.l.b16 %v1095
    %v1508 = vunpack.c.l.b16 %v1096
    %v1509 = vunpack.c.l.b16 %v1097
    %v1510 = vunpack.c.l.b16 %v1098
    %v1511 = vunpack.c.l.b16 %v1099
    %v1512 = vunpack.c.l.b16 %v1100
    %v1513 = vunpack.c.l.b16 %v1101
    %v1514 = vunpack.c.l.b16 %v1102
    %v1515 = vunpack.c.l.b16 %v1103
    %v1516 = vunpack.c.l.b16 %v1104
    %v1517 = vunpack.c.l.b16 %v1105
    %v1518 = vunpack.c.l.b16 %v1106
    %v1519 = vpack.c.b16 %v1472, %v1471
    %v1520 = vpack.c.b16 %v1474, %v1473
    %v1521 = vpack.c.b16 %v1476, %v1475
    %v1522 = vpack.c.b16 %v1478, %v1477
    %v1523 = vpack.c.b16 %v1480, %v1479
    %v1524 = vpack.c.b16 %v1482, %v1481
    %v1525 = vpack.c.b16 %v1484, %v1483
    %v1526 = vpack.c.b16 %v1486, %v1485
    %v1527 = vpack.c.b16 %v1488, %v1487
    %v1528 = vpack.c.b16 %v1490, %v1489
    %v1529 = vpack.c.b16 %v1492, %v1491
    %v1530 = vpack.c.b16 %v1494, %v1493
    %v1531 = vpack.c.b16 %v1496, %v1495
    %v1532 = vpack.c.b16 %v1498, %v1497
    %v1533 = vpack.c.b16 %v1500, %v1499
    %v1534 = vpack.c.b16 %v1502, %v1501
    %v1535 = vpack.c.b16 %v1504, %v1503
    %v1536 = vpack.c.b16 %v1506, %v1505
    %v1537 = vpack.c.b16 %v1508, %v1507
    %v1538 = vpack.c.b16 %v1510, %v1509
    %v1539 = vpack.c.b16 %v1512, %v1511
    %v1540 = vpack.c.b16 %v1514, %v1513
    %v1541 = vpack.c.b16 %v1516, %v1515
    %v1542 = vpack.c.b16 %v1518, %v1517
    %1567 = vmatprep.subr.bf16.mxu0 0
    %1568 = vmatpush1.bf16.msra.mxu0 %v1519
    %1569 = vmatprep.subr.bf16.mxu0 0
    %1570 = vmatpush1.bf16.msra.mxu0 %v1520
    %1571 = vmatprep.subr.bf16.mxu0 0
    %1572 = vmatpush1.bf16.msra.mxu0 %v1521
    %1573 = vmatprep.subr.bf16.mxu0 0
    %1574 = vmatpush1.bf16.msra.mxu0 %v1522
    %1575 = vmatprep.subr.bf16.mxu0 0
    %1576 = vmatpush1.bf16.msra.mxu0 %v1523
    %1577 = vmatprep.subr.bf16.mxu0 0
    %1578 = vmatpush1.bf16.msra.mxu0 %v1524
    %1579 = vmatprep.subr.bf16.mxu0 0
    %1580 = vmatpush1.bf16.msra.mxu0 %v1525
    %1581 = vmatprep.subr.bf16.mxu0 0
    %1582 = vmatpush1.bf16.msra.mxu0 %v1526
    %1583 = vmatprep.subr.bf16.mxu0 0
    %1584 = vmatpush1.bf16.msra.mxu0 %v1527
    %1585 = vmatprep.subr.bf16.mxu0 0
    %1586 = vmatpush1.bf16.msra.mxu0 %v1528
    %1587 = vmatprep.subr.bf16.mxu0 0
    %1588 = vmatpush1.bf16.msra.mxu0 %v1529
    %1589 = vmatprep.subr.bf16.mxu0 0
    %1590 = vmatpush1.bf16.msra.mxu0 %v1530
    %1591 = vmatprep.subr.bf16.mxu0 0
    %1592 = vmatpush1.bf16.msra.mxu0 %v1531
    %1593 = vmatprep.subr.bf16.mxu0 0
    %1594 = vmatpush1.bf16.msra.mxu0 %v1532
    %1595 = vmatprep.subr.bf16.mxu0 0
    %1596 = vmatpush1.bf16.msra.mxu0 %v1533
    %1597 = vmatprep.subr.bf16.mxu0 0
    %1598 = vmatpush1.bf16.msra.mxu0 %v1534
    %1599 = vmatprep.mubr.bf16.mxu0 %v1173
    %1600 = vmatmul.mubr.bf16.gmra.mrb[0].mxu0 %v1171
    %v1601 = vpop.f32.mrb[0].mxu0
    %v1602 = vadd.f32 0.0, %v1601
    %v1603 = vpop.f32.mrb[0].mxu0
    %v1604 = vpop.f32.mrb[0].mxu0
    %v1605 = vadd.f32 0.0, %v1604
    %v1606 = vpop.f32.mrb[0].mxu0
    %1607 = vmatprep.mubr.bf16.mxu0 %v1240
    %1608 = vmatmul.mubr.bf16.gmra.mrb[0].mxu0 %v1238
    %v1609 = vpop.f32.mrb[0].mxu0
    %v1610 = vadd.f32 0.0, %v1609
    %v1611 = vpop.f32.mrb[0].mxu0
    %v1612 = vpop.f32.mrb[0].mxu0
    %v1613 = vadd.f32 0.0, %v1612
    %v1614 = vpop.f32.mrb[0].mxu0
    %1615 = vmatprep.mubr.bf16.mxu0 %v1307
    %1616 = vmatmul.mubr.bf16.gmra.mrb[0].mxu0 %v1305
    %v1617 = vpop.f32.mrb[0].mxu0
    %v1618 = vadd.f32 0.0, %v1617
    %v1619 = vpop.f32.mrb[0].mxu0
    %v1620 = vpop.f32.mrb[0].mxu0
    %v1621 = vadd.f32 0.0, %v1620
    %v1622 = vpop.f32.mrb[0].mxu0
    %1623 = vmatprep.mubr.bf16.mxu0 %v1374
    %1624 = vmatmul.mubr.bf16.gmra.mrb[0].mxu0 %v1372
    %v1625 = vpop.f32.mrb[0].mxu0
    %v1626 = vadd.f32 0.0, %v1625
    %v1627 = vpop.f32.mrb[0].mxu0
    %v1628 = vpop.f32.mrb[0].mxu0
    %v1629 = vadd.f32 0.0, %v1628
    %v1630 = vpop.f32.mrb[0].mxu0
    %1631 = vmatprep.mubr.bf16.mxu0 %v1406
    %1632 = vmatmul.mubr.bf16.gmra.mrb[0].mxu0 %v1399
    %v1633 = vpop.f32.mrb[0].mxu0
    %v1634 = vadd.f32 0.0, %v1633
    %v1635 = vpop.f32.mrb[0].mxu0
    %v1636 = vpop.f32.mrb[0].mxu0
    %v1637 = vpop.f32.mrb[0].mxu0
    %1638 = vdwg.mxu0
    %1639 = vmatprep.subr.bf16.mxu0 0
    %1640 = vmatpush1.bf16.msra.mxu0 %v1535
    %1641 = vmatprep.subr.bf16.mxu0 0
    %1642 = vmatpush1.bf16.msra.mxu0 %v1536
    %1643 = vmatprep.subr.bf16.mxu0 0
    %1644 = vmatpush1.bf16.msra.mxu0 %v1537
    %1645 = vmatprep.subr.bf16.mxu0 0
    %1646 = vmatpush1.bf16.msra.mxu0 %v1538
    %1647 = vmatprep.subr.bf16.mxu0 0
    %1648 = vmatpush1.bf16.msra.mxu0 %v1539
    %1649 = vmatprep.subr.bf16.mxu0 0
    %1650 = vmatpush1.bf16.msra.mxu0 %v1540
    %1651 = vmatprep.subr.bf16.mxu0 0
    %1652 = vmatpush1.bf16.msra.mxu0 %v1541
    %1653 = vmatprep.subr.bf16.mxu0 0
    %1654 = vmatpush1.bf16.msra.mxu0 %v1542
    %1655 = vmatprep.subr.bf16.mxu0 0
    %1656 = vmatpush1.bf16.msra.mxu0 0
    %1657 = vmatprep.subr.bf16.mxu0 0
    %1658 = vmatpush1.bf16.msra.mxu0 0
    %1659 = vmatprep.subr.bf16.mxu0 0
    %1660 = vmatpush1.bf16.msra.mxu0 0
    %1661 = vmatprep.subr.bf16.mxu0 0
    %1662 = vmatpush1.bf16.msra.mxu0 0
    %1663 = vmatprep.subr.bf16.mxu0 0
    %1664 = vmatpush1.bf16.msra.mxu0 0
    %1665 = vmatprep.subr.bf16.mxu0 0
    %1666 = vmatpush1.bf16.msra.mxu0 0
    %1667 = vmatprep.subr.bf16.mxu0 0
    %1668 = vmatpush1.bf16.msra.mxu0 0
    %1669 = vmatprep.subr.bf16.mxu0 0
    %1670 = vmatpush1.bf16.msra.mxu0 0
    %1671 = vmatprep.mubr.bf16.mxu0 0
    %1672 = vmatmul.mubr.bf16.gmra.mrb[0].mxu0 %v1172
    %v1673 = vpop.f32.mrb[0].mxu0
    %v1674 = vadd.f32 %v1602, %v1673
    %v1675 = vpop.f32.mrb[0].mxu0
    %v1676 = vpop.f32.mrb[0].mxu0
    %v1677 = vadd.f32 %v1605, %v1676
    %v1678 = vpop.f32.mrb[0].mxu0
    %1679 = vmatprep.mubr.bf16.mxu0 0
    %1680 = vmatmul.mubr.bf16.gmra.mrb[0].mxu0 %v1239
    %v1681 = vpop.f32.mrb[0].mxu0
    %v1682 = vadd.f32 %v1610, %v1681
    %v1683 = vpop.f32.mrb[0].mxu0
    %v1684 = vpop.f32.mrb[0].mxu0
    %v1685 = vadd.f32 %v1613, %v1684
    %v1686 = vpop.f32.mrb[0].mxu0
    %1687 = vmatprep.mubr.bf16.mxu0 0
    %1688 = vmatmul.mubr.bf16.gmra.mrb[0].mxu0 %v1306
    %v1689 = vpop.f32.mrb[0].mxu0
    %v1690 = vadd.f32 %v1618, %v1689
    %v1691 = vpop.f32.mrb[0].mxu0
    %v1692 = vpop.f32.mrb[0].mxu0
    %v1693 = vadd.f32 %v1621, %v1692
    %v1694 = vpop.f32.mrb[0].mxu0
    %1695 = vmatprep.mubr.bf16.mxu0 0
    %1696 = vmatmul.mubr.bf16.gmra.mrb[0].mxu0 %v1373
    %v1697 = vpop.f32.mrb[0].mxu0
    %v1698 = vadd.f32 %v1626, %v1697
    %v1699 = vpop.f32.mrb[0].mxu0
    %v1700 = vpop.f32.mrb[0].mxu0
    %v1701 = vadd.f32 %v1629, %v1700
    %v1702 = vpop.f32.mrb[0].mxu0
    %1703 = vmatprep.mubr.bf16.mxu0 0
    %1704 = vmatmul.mubr.bf16.gmra.mrb[0].mxu0 %v1407
    %v1705 = vpop.f32.mrb[0].mxu0
    %v1706 = vadd.f32 %v1634, %v1705
    %v1707 = vpop.f32.mrb[0].mxu0
    %v1708 = vpop.f32.mrb[0].mxu0
    %v1709 = vpop.f32.mrb[0].mxu0
    %1710 = vdwg.mxu0
    %v1711 = vcombine.low %v569, %v576
    %v1712 = vcombine.low %v577, %v601
    %v1713 = vcombine.low %v608, %v609
    %v1714 = vcombine.low %v633, %v640
    %v1716 = vunpack.c.l.s4 1966171168
    %v1717 = vunpack.c.0.s8 %v1716
    %v1718 = vlaneseq
    %v1719 = vshrl.u32 %v1718, 7
    %v1720 = vsub.s32 %v1717, %v1719
    %v1721 = vrot.slane %v1711, %v1720
    %v1723 = vunpack.c.l.s4 1966171168
    %v1724 = vunpack.c.0.s8 %v1723
    %v1725 = vlaneseq
    %v1726 = vshrl.u32 %v1725, 7
    %v1727 = vsub.s32 %v1724, %v1726
    %v1728 = vrot.slane %v1712, %v1727
    %v1730 = vunpack.c.l.s4 1966171168
    %v1731 = vunpack.c.0.s8 %v1730
    %v1732 = vlaneseq
    %v1733 = vshrl.u32 %v1732, 7
    %v1734 = vsub.s32 %v1731, %v1733
    %v1735 = vrot.slane %v1713, %v1734
    %v1737 = vunpack.c.l.s4 1966171168
    %v1738 = vunpack.c.0.s8 %v1737
    %v1739 = vlaneseq
    %v1740 = vshrl.u32 %v1739, 7
    %v1741 = vsub.s32 %v1738, %v1740
    %v1742 = vrot.slane %v1714, %v1741
    %v1743 = vcombine.low %v1721, %v1728
    %v1744 = vcombine.high %v1721, %v1728
    %v1745 = vcombine.low %v1735, %v1742
    %v1746 = vcombine.high %v1735, %v1742
    %v1748 = vunpack.c.l.s4 1966171168
    %v1749 = vunpack.c.0.s8 %v1748
    %v1750 = vlaneseq
    %v1751 = vshrl.u32 %v1750, 7
    %v1752 = vsub.s32 %v1749, %v1751
    %v1753 = vrot.slane %v1743, %v1752
    %v1755 = vunpack.c.l.s4 1966171168
    %v1756 = vunpack.c.0.s8 %v1755
    %v1757 = vlaneseq
    %v1758 = vshrl.u32 %v1757, 7
    %v1759 = vsub.s32 %v1756, %v1758
    %v1760 = vrot.slane %v1744, %v1759
    %v1762 = vunpack.c.l.s4 1966171168
    %v1763 = vunpack.c.0.s8 %v1762
    %v1764 = vlaneseq
    %v1765 = vshrl.u32 %v1764, 7
    %v1766 = vsub.s32 %v1763, %v1765
    %v1767 = vrot.slane %v1745, %v1766
    %v1769 = vunpack.c.l.s4 1966171168
    %v1770 = vunpack.c.0.s8 %v1769
    %v1771 = vlaneseq
    %v1772 = vshrl.u32 %v1771, 7
    %v1773 = vsub.s32 %v1770, %v1772
    %v1774 = vrot.slane %v1746, %v1773
    %v1775 = vcombine.low %v1753, %v1767
    %v1776 = vcombine.high %v1753, %v1767
    %v1777 = vcombine.low %v1760, %v1774
    %v1778 = vcombine.low %v641, %v665
    %v1779 = vcombine.low %v672, %v673
    %v1780 = vcombine.low %v697, %v704
    %v1781 = vcombine.low %v705, %v729
    %v1783 = vunpack.c.l.s4 1966171168
    %v1784 = vunpack.c.0.s8 %v1783
    %v1785 = vlaneseq
    %v1786 = vshrl.u32 %v1785, 7
    %v1787 = vsub.s32 %v1784, %v1786
    %v1788 = vrot.slane %v1778, %v1787
    %v1790 = vunpack.c.l.s4 1966171168
    %v1791 = vunpack.c.0.s8 %v1790
    %v1792 = vlaneseq
    %v1793 = vshrl.u32 %v1792, 7
    %v1794 = vsub.s32 %v1791, %v1793
    %v1795 = vrot.slane %v1779, %v1794
    %v1797 = vunpack.c.l.s4 1966171168
    %v1798 = vunpack.c.0.s8 %v1797
    %v1799 = vlaneseq
    %v1800 = vshrl.u32 %v1799, 7
    %v1801 = vsub.s32 %v1798, %v1800
    %v1802 = vrot.slane %v1780, %v1801
    %v1804 = vunpack.c.l.s4 1966171168
    %v1805 = vunpack.c.0.s8 %v1804
    %v1806 = vlaneseq
    %v1807 = vshrl.u32 %v1806, 7
    %v1808 = vsub.s32 %v1805, %v1807
    %v1809 = vrot.slane %v1781, %v1808
    %v1810 = vcombine.low %v1788, %v1795
    %v1811 = vcombine.high %v1788, %v1795
    %v1812 = vcombine.low %v1802, %v1809
    %v1813 = vcombine.high %v1802, %v1809
    %v1815 = vunpack.c.l.s4 1966171168
    %v1816 = vunpack.c.0.s8 %v1815
    %v1817 = vlaneseq
    %v1818 = vshrl.u32 %v1817, 7
    %v1819 = vsub.s32 %v1816, %v1818
    %v1820 = vrot.slane %v1810, %v1819
    %v1822 = vunpack.c.l.s4 1966171168
    %v1823 = vunpack.c.0.s8 %v1822
    %v1824 = vlaneseq
    %v1825 = vshrl.u32 %v1824, 7
    %v1826 = vsub.s32 %v1823, %v1825
    %v1827 = vrot.slane %v1811, %v1826
    %v1829 = vunpack.c.l.s4 1966171168
    %v1830 = vunpack.c.0.s8 %v1829
    %v1831 = vlaneseq
    %v1832 = vshrl.u32 %v1831, 7
    %v1833 = vsub.s32 %v1830, %v1832
    %v1834 = vrot.slane %v1812, %v1833
    %v1836 = vunpack.c.l.s4 1966171168
    %v1837 = vunpack.c.0.s8 %v1836
    %v1838 = vlaneseq
    %v1839 = vshrl.u32 %v1838, 7
    %v1840 = vsub.s32 %v1837, %v1839
    %v1841 = vrot.slane %v1813, %v1840
    %v1842 = vcombine.low %v1820, %v1834
    %v1843 = vcombine.high %v1820, %v1834
    %v1844 = vcombine.low %v1827, %v1841
    %v1845 = vcombine.low %v736, %v737
    %v1846 = vcombine.low %v761, %v768
    %v1847 = vcombine.low %v769, %v793
    %v1848 = vcombine.low %v800, %v801
    %v1850 = vunpack.c.l.s4 1966171168
    %v1851 = vunpack.c.0.s8 %v1850
    %v1852 = vlaneseq
    %v1853 = vshrl.u32 %v1852, 7
    %v1854 = vsub.s32 %v1851, %v1853
    %v1855 = vrot.slane %v1845, %v1854
    %v1857 = vunpack.c.l.s4 1966171168
    %v1858 = vunpack.c.0.s8 %v1857
    %v1859 = vlaneseq
    %v1860 = vshrl.u32 %v1859, 7
    %v1861 = vsub.s32 %v1858, %v1860
    %v1862 = vrot.slane %v1846, %v1861
    %v1864 = vunpack.c.l.s4 1966171168
    %v1865 = vunpack.c.0.s8 %v1864
    %v1866 = vlaneseq
    %v1867 = vshrl.u32 %v1866, 7
    %v1868 = vsub.s32 %v1865, %v1867
    %v1869 = vrot.slane %v1847, %v1868
    %v1871 = vunpack.c.l.s4 1966171168
    %v1872 = vunpack.c.0.s8 %v1871
    %v1873 = vlaneseq
    %v1874 = vshrl.u32 %v1873, 7
    %v1875 = vsub.s32 %v1872, %v1874
    %v1876 = vrot.slane %v1848, %v1875
    %v1877 = vcombine.low %v1855, %v1862
    %v1878 = vcombine.high %v1855, %v1862
    %v1879 = vcombine.low %v1869, %v1876
    %v1880 = vcombine.high %v1869, %v1876
    %v1882 = vunpack.c.l.s4 1966171168
    %v1883 = vunpack.c.0.s8 %v1882
    %v1884 = vlaneseq
    %v1885 = vshrl.u32 %v1884, 7
    %v1886 = vsub.s32 %v1883, %v1885
    %v1887 = vrot.slane %v1877, %v1886
    %v1889 = vunpack.c.l.s4 1966171168
    %v1890 = vunpack.c.0.s8 %v1889
    %v1891 = vlaneseq
    %v1892 = vshrl.u32 %v1891, 7
    %v1893 = vsub.s32 %v1890, %v1892
    %v1894 = vrot.slane %v1878, %v1893
    %v1896 = vunpack.c.l.s4 1966171168
    %v1897 = vunpack.c.0.s8 %v1896
    %v1898 = vlaneseq
    %v1899 = vshrl.u32 %v1898, 7
    %v1900 = vsub.s32 %v1897, %v1899
    %v1901 = vrot.slane %v1879, %v1900
    %v1903 = vunpack.c.l.s4 1966171168
    %v1904 = vunpack.c.0.s8 %v1903
    %v1905 = vlaneseq
    %v1906 = vshrl.u32 %v1905, 7
    %v1907 = vsub.s32 %v1904, %v1906
    %v1908 = vrot.slane %v1880, %v1907
    %v1909 = vcombine.low %v1887, %v1901
    %v1910 = vcombine.high %v1887, %v1901
    %v1911 = vcombine.low %v1894, %v1908
    %v1912 = vcombine.low %v825, %v832
    %v1913 = vcombine.low %v833, %v857
    %v1914 = vcombine.low %v864, %v865
    %v1915 = vcombine.low %v889, %v896
    %v1917 = vunpack.c.l.s4 1966171168
    %v1918 = vunpack.c.0.s8 %v1917
    %v1919 = vlaneseq
    %v1920 = vshrl.u32 %v1919, 7
    %v1921 = vsub.s32 %v1918, %v1920
    %v1922 = vrot.slane %v1912, %v1921
    %v1924 = vunpack.c.l.s4 1966171168
    %v1925 = vunpack.c.0.s8 %v1924
    %v1926 = vlaneseq
    %v1927 = vshrl.u32 %v1926, 7
    %v1928 = vsub.s32 %v1925, %v1927
    %v1929 = vrot.slane %v1913, %v1928
    %v1931 = vunpack.c.l.s4 1966171168
    %v1932 = vunpack.c.0.s8 %v1931
    %v1933 = vlaneseq
    %v1934 = vshrl.u32 %v1933, 7
    %v1935 = vsub.s32 %v1932, %v1934
    %v1936 = vrot.slane %v1914, %v1935
    %v1938 = vunpack.c.l.s4 1966171168
    %v1939 = vunpack.c.0.s8 %v1938
    %v1940 = vlaneseq
    %v1941 = vshrl.u32 %v1940, 7
    %v1942 = vsub.s32 %v1939, %v1941
    %v1943 = vrot.slane %v1915, %v1942
    %v1944 = vcombine.low %v1922, %v1929
    %v1945 = vcombine.high %v1922, %v1929
    %v1946 = vcombine.low %v1936, %v1943
    %v1947 = vcombine.high %v1936, %v1943
    %v1949 = vunpack.c.l.s4 1966171168
    %v1950 = vunpack.c.0.s8 %v1949
    %v1951 = vlaneseq
    %v1952 = vshrl.u32 %v1951, 7
    %v1953 = vsub.s32 %v1950, %v1952
    %v1954 = vrot.slane %v1944, %v1953
    %v1956 = vunpack.c.l.s4 1966171168
    %v1957 = vunpack.c.0.s8 %v1956
    %v1958 = vlaneseq
    %v1959 = vshrl.u32 %v1958, 7
    %v1960 = vsub.s32 %v1957, %v1959
    %v1961 = vrot.slane %v1945, %v1960
    %v1963 = vunpack.c.l.s4 1966171168
    %v1964 = vunpack.c.0.s8 %v1963
    %v1965 = vlaneseq
    %v1966 = vshrl.u32 %v1965, 7
    %v1967 = vsub.s32 %v1964, %v1966
    %v1968 = vrot.slane %v1946, %v1967
    %v1970 = vunpack.c.l.s4 1966171168
    %v1971 = vunpack.c.0.s8 %v1970
    %v1972 = vlaneseq
    %v1973 = vshrl.u32 %v1972, 7
    %v1974 = vsub.s32 %v1971, %v1973
    %v1975 = vrot.slane %v1947, %v1974
    %v1976 = vcombine.low %v1954, %v1968
    %v1977 = vcombine.high %v1954, %v1968
    %v1978 = vcombine.low %v1961, %v1975
    %v1979 = vcombine.low %v897, %v921
    %v1980 = vcombine.low %v928, %v929
    %v1982 = vunpack.c.l.s4 1966171168
    %v1983 = vunpack.c.0.s8 %v1982
    %v1984 = vlaneseq
    %v1985 = vshrl.u32 %v1984, 7
    %v1986 = vsub.s32 %v1983, %v1985
    %v1987 = vrot.slane %v1979, %v1986
    %v1989 = vunpack.c.l.s4 1966171168
    %v1990 = vunpack.c.0.s8 %v1989
    %v1991 = vlaneseq
    %v1992 = vshrl.u32 %v1991, 7
    %v1993 = vsub.s32 %v1990, %v1992
    %v1994 = vrot.slane %v1980, %v1993
    %v1995 = vcombine.low %v1987, %v1994
    %v1996 = vcombine.high %v1987, %v1994
    %v1998 = vunpack.c.l.s4 1966171168
    %v1999 = vunpack.c.0.s8 %v1998
    %v2000 = vlaneseq
    %v2001 = vshrl.u32 %v2000, 7
    %v2002 = vsub.s32 %v1999, %v2001
    %v2003 = vrot.slane %v1995, %v2002
    %v2005 = vunpack.c.l.s4 1966171168
    %v2006 = vunpack.c.0.s8 %v2005
    %v2007 = vlaneseq
    %v2008 = vshrl.u32 %v2007, 7
    %v2009 = vsub.s32 %v2006, %v2008
    %v2010 = vrot.slane %v1996, %v2009
    %v2011 = vcombine.high %v2003, %v2003
    %v2075 = vunpack.c.l.b16 %v930
    %v2076 = vunpack.c.l.b16 %v931
    %v2077 = vunpack.c.l.b16 %v932
    %v2078 = vunpack.c.l.b16 %v933
    %v2079 = vunpack.c.l.b16 %v934
    %v2080 = vunpack.c.l.b16 %v935
    %v2081 = vunpack.c.l.b16 %v936
    %v2082 = vunpack.c.l.b16 %v937
    %v2083 = vunpack.c.l.b16 %v938
    %v2084 = vunpack.c.l.b16 %v939
    %v2085 = vunpack.c.l.b16 %v940
    %v2086 = vunpack.c.l.b16 %v941
    %v2087 = vunpack.c.l.b16 %v942
    %v2088 = vunpack.c.l.b16 %v943
    %v2089 = vunpack.c.l.b16 %v944
    %v2090 = vunpack.c.l.b16 %v945
    %v2091 = vunpack.c.l.b16 %v946
    %v2092 = vunpack.c.l.b16 %v947
    %v2093 = vunpack.c.l.b16 %v948
    %v2094 = vunpack.c.l.b16 %v949
    %v2095 = vunpack.c.l.b16 %v950
    %v2096 = vunpack.c.l.b16 %v951
    %v2097 = vunpack.c.l.b16 %v952
    %v2098 = vunpack.c.l.b16 %v953
    %v2099 = vunpack.c.l.b16 %v954
    %v2100 = vunpack.c.l.b16 %v955
    %v2101 = vunpack.c.l.b16 %v956
    %v2102 = vunpack.c.l.b16 %v957
    %v2103 = vunpack.c.l.b16 %v958
    %v2104 = vunpack.c.l.b16 %v959
    %v2105 = vunpack.c.l.b16 %v960
    %v2106 = vunpack.c.l.b16 %v961
    %v2107 = vunpack.c.l.b16 %v962
    %v2108 = vunpack.c.l.b16 %v963
    %v2109 = vunpack.c.l.b16 %v964
    %v2110 = vunpack.c.l.b16 %v965
    %v2111 = vunpack.c.l.b16 %v966
    %v2112 = vunpack.c.l.b16 %v967
    %v2113 = vunpack.c.l.b16 %v968
    %v2114 = vunpack.c.l.b16 %v969
    %v2115 = vunpack.c.l.b16 %v970
    %v2116 = vunpack.c.l.b16 %v971
    %v2117 = vunpack.c.l.b16 %v972
    %v2118 = vunpack.c.l.b16 %v973
    %v2119 = vunpack.c.l.b16 %v974
    %v2120 = vunpack.c.l.b16 %v975
    %v2121 = vunpack.c.l.b16 %v976
    %v2122 = vunpack.c.l.b16 %v977
    %v2123 = vpack.c.b16 %v2076, %v2075
    %v2124 = vpack.c.b16 %v2078, %v2077
    %v2125 = vpack.c.b16 %v2080, %v2079
    %v2126 = vpack.c.b16 %v2082, %v2081
    %v2127 = vpack.c.b16 %v2084, %v2083
    %v2128 = vpack.c.b16 %v2086, %v2085
    %v2129 = vpack.c.b16 %v2088, %v2087
    %v2130 = vpack.c.b16 %v2090, %v2089
    %v2131 = vpack.c.b16 %v2092, %v2091
    %v2132 = vpack.c.b16 %v2094, %v2093
    %v2133 = vpack.c.b16 %v2096, %v2095
    %v2134 = vpack.c.b16 %v2098, %v2097
    %v2135 = vpack.c.b16 %v2100, %v2099
    %v2136 = vpack.c.b16 %v2102, %v2101
    %v2137 = vpack.c.b16 %v2104, %v2103
    %v2138 = vpack.c.b16 %v2106, %v2105
    %v2139 = vpack.c.b16 %v2108, %v2107
    %v2140 = vpack.c.b16 %v2110, %v2109
    %v2141 = vpack.c.b16 %v2112, %v2111
    %v2142 = vpack.c.b16 %v2114, %v2113
    %v2143 = vpack.c.b16 %v2116, %v2115
    %v2144 = vpack.c.b16 %v2118, %v2117
    %v2145 = vpack.c.b16 %v2120, %v2119
    %v2146 = vpack.c.b16 %v2122, %v2121
    %2171 = vmatprep.subr.bf16.mxu0 0
    %2172 = vmatpush1.bf16.msra.mxu0 %v2123
    %2173 = vmatprep.subr.bf16.mxu0 0
    %2174 = vmatpush1.bf16.msra.mxu0 %v2124
    %2175 = vmatprep.subr.bf16.mxu0 0
    %2176 = vmatpush1.bf16.msra.mxu0 %v2125
    %2177 = vmatprep.subr.bf16.mxu0 0
    %2178 = vmatpush1.bf16.msra.mxu0 %v2126
    %2179 = vmatprep.subr.bf16.mxu0 0
    %2180 = vmatpush1.bf16.msra.mxu0 %v2127
    %2181 = vmatprep.subr.bf16.mxu0 0
    %2182 = vmatpush1.bf16.msra.mxu0 %v2128
    %2183 = vmatprep.subr.bf16.mxu0 0
    %2184 = vmatpush1.bf16.msra.mxu0 %v2129
    %2185 = vmatprep.subr.bf16.mxu0 0
    %2186 = vmatpush1.bf16.msra.mxu0 %v2130
    %2187 = vmatprep.subr.bf16.mxu0 0
    %2188 = vmatpush1.bf16.msra.mxu0 %v2131
    %2189 = vmatprep.subr.bf16.mxu0 0
    %2190 = vmatpush1.bf16.msra.mxu0 %v2132
    %2191 = vmatprep.subr.bf16.mxu0 0
    %2192 = vmatpush1.bf16.msra.mxu0 %v2133
    %2193 = vmatprep.subr.bf16.mxu0 0
    %2194 = vmatpush1.bf16.msra.mxu0 %v2134
    %2195 = vmatprep.subr.bf16.mxu0 0
    %2196 = vmatpush1.bf16.msra.mxu0 %v2135
    %2197 = vmatprep.subr.bf16.mxu0 0
    %2198 = vmatpush1.bf16.msra.mxu0 %v2136
    %2199 = vmatprep.subr.bf16.mxu0 0
    %2200 = vmatpush1.bf16.msra.mxu0 %v2137
    %2201 = vmatprep.subr.bf16.mxu0 0
    %2202 = vmatpush1.bf16.msra.mxu0 %v2138
    %2203 = vmatprep.mubr.bf16.mxu0 %v1777
    %2204 = vmatmul.mubr.bf16.gmra.mrb[0].mxu0 %v1775
    %v2205 = vpop.f32.mrb[0].mxu0
    %v2206 = vadd.f32 %v1674, %v2205
    %v2207 = vpop.f32.mrb[0].mxu0
    %v2208 = vpop.f32.mrb[0].mxu0
    %v2209 = vadd.f32 %v1677, %v2208
    %v2210 = vpop.f32.mrb[0].mxu0
    %2211 = vmatprep.mubr.bf16.mxu0 %v1844
    %2212 = vmatmul.mubr.bf16.gmra.mrb[0].mxu0 %v1842
    %v2213 = vpop.f32.mrb[0].mxu0
    %v2214 = vadd.f32 %v1682, %v2213
    %v2215 = vpop.f32.mrb[0].mxu0
    %v2216 = vpop.f32.mrb[0].mxu0
    %v2217 = vadd.f32 %v1685, %v2216
    %v2218 = vpop.f32.mrb[0].mxu0
    %2219 = vmatprep.mubr.bf16.mxu0 %v1911
    %2220 = vmatmul.mubr.bf16.gmra.mrb[0].mxu0 %v1909
    %v2221 = vpop.f32.mrb[0].mxu0
    %v2222 = vadd.f32 %v1690, %v2221
    %v2223 = vpop.f32.mrb[0].mxu0
    %v2224 = vpop.f32.mrb[0].mxu0
    %v2225 = vadd.f32 %v1693, %v2224
    %v2226 = vpop.f32.mrb[0].mxu0
    %2227 = vmatprep.mubr.bf16.mxu0 %v1978
    %2228 = vmatmul.mubr.bf16.gmra.mrb[0].mxu0 %v1976
    %v2229 = vpop.f32.mrb[0].mxu0
    %v2230 = vadd.f32 %v1698, %v2229
    %v2231 = vpop.f32.mrb[0].mxu0
    %v2232 = vpop.f32.mrb[0].mxu0
    %v2233 = vadd.f32 %v1701, %v2232
    %v2234 = vpop.f32.mrb[0].mxu0
    %2235 = vmatprep.mubr.bf16.mxu0 %v2010
    %2236 = vmatmul.mubr.bf16.gmra.mrb[0].mxu0 %v2003
    %v2237 = vpop.f32.mrb[0].mxu0
    %v2238 = vadd.f32 %v1706, %v2237
    %v2239 = vpop.f32.mrb[0].mxu0
    %v2240 = vpop.f32.mrb[0].mxu0
    %v2241 = vpop.f32.mrb[0].mxu0
    %2242 = vdwg.mxu0
    %2243 = vmatprep.subr.bf16.mxu0 0
    %2244 = vmatpush1.bf16.msra.mxu0 %v2139
    %2245 = vmatprep.subr.bf16.mxu0 0
    %2246 = vmatpush1.bf16.msra.mxu0 %v2140
    %2247 = vmatprep.subr.bf16.mxu0 0
    %2248 = vmatpush1.bf16.msra.mxu0 %v2141
    %2249 = vmatprep.subr.bf16.mxu0 0
    %2250 = vmatpush1.bf16.msra.mxu0 %v2142
    %2251 = vmatprep.subr.bf16.mxu0 0
    %2252 = vmatpush1.bf16.msra.mxu0 %v2143
    %2253 = vmatprep.subr.bf16.mxu0 0
    %2254 = vmatpush1.bf16.msra.mxu0 %v2144
    %2255 = vmatprep.subr.bf16.mxu0 0
    %2256 = vmatpush1.bf16.msra.mxu0 %v2145
    %2257 = vmatprep.subr.bf16.mxu0 0
    %2258 = vmatpush1.bf16.msra.mxu0 %v2146
    %2259 = vmatprep.subr.bf16.mxu0 0
    %2260 = vmatpush1.bf16.msra.mxu0 0
    %2261 = vmatprep.subr.bf16.mxu0 0
    %2262 = vmatpush1.bf16.msra.mxu0 0
    %2263 = vmatprep.subr.bf16.mxu0 0
    %2264 = vmatpush1.bf16.msra.mxu0 0
    %2265 = vmatprep.subr.bf16.mxu0 0
    %2266 = vmatpush1.bf16.msra.mxu0 0
    %2267 = vmatprep.subr.bf16.mxu0 0
    %2268 = vmatpush1.bf16.msra.mxu0 0
    %2269 = vmatprep.subr.bf16.mxu0 0
    %2270 = vmatpush1.bf16.msra.mxu0 0
    %2271 = vmatprep.subr.bf16.mxu0 0
    %2272 = vmatpush1.bf16.msra.mxu0 0
    %2273 = vmatprep.subr.bf16.mxu0 0
    %2274 = vmatpush1.bf16.msra.mxu0 0
    %2275 = vmatprep.mubr.bf16.mxu0 0
    %2276 = vmatmul.mubr.bf16.gmra.mrb[0].mxu0 %v1776
    %v2277 = vpop.f32.mrb[0].mxu0
    %v2278 = vadd.f32 %v2206, %v2277
    %v2279 = vpop.f32.mrb[0].mxu0
    %v2280 = vpop.f32.mrb[0].mxu0
    %v2281 = vadd.f32 %v2209, %v2280
    %v2282 = vpop.f32.mrb[0].mxu0
    %2283 = vmatprep.mubr.bf16.mxu0 0
    %2284 = vmatmul.mubr.bf16.gmra.mrb[0].mxu0 %v1843
    %v2285 = vpop.f32.mrb[0].mxu0
    %v2286 = vadd.f32 %v2214, %v2285
    %v2287 = vpop.f32.mrb[0].mxu0
    %v2288 = vpop.f32.mrb[0].mxu0
    %v2289 = vadd.f32 %v2217, %v2288
    %v2290 = vpop.f32.mrb[0].mxu0
    %2291 = vmatprep.mubr.bf16.mxu0 0
    %2292 = vmatmul.mubr.bf16.gmra.mrb[0].mxu0 %v1910
    %v2293 = vpop.f32.mrb[0].mxu0
    %v2294 = vadd.f32 %v2222, %v2293
    %v2295 = vpop.f32.mrb[0].mxu0
    %v2296 = vpop.f32.mrb[0].mxu0
    %v2297 = vadd.f32 %v2225, %v2296
    %v2298 = vpop.f32.mrb[0].mxu0
    %2299 = vmatprep.mubr.bf16.mxu0 0
    %2300 = vmatmul.mubr.bf16.gmra.mrb[0].mxu0 %v1977
    %v2301 = vpop.f32.mrb[0].mxu0
    %v2302 = vadd.f32 %v2230, %v2301
    %v2303 = vpop.f32.mrb[0].mxu0
    %v2304 = vpop.f32.mrb[0].mxu0
    %v2305 = vadd.f32 %v2233, %v2304
    %v2306 = vpop.f32.mrb[0].mxu0
    %2307 = vmatprep.mubr.bf16.mxu0 0
    %2308 = vmatmul.mubr.bf16.gmra.mrb[0].mxu0 %v2011
    %v2309 = vpop.f32.mrb[0].mxu0
    %v2310 = vadd.f32 %v2238, %v2309
    %v2311 = vpop.f32.mrb[0].mxu0
    %v2312 = vpop.f32.mrb[0].mxu0
    %v2313 = vpop.f32.mrb[0].mxu0
    %2314 = vdwg.mxu0
    %v2316 = vshrl.u32 %v441, 16
    %v2318 = vshll.u32 %v441, 16
    %v2320 = vrot.slane %v2318, 1
    %v2321 = vor.u32 %v2316, %v2320
    %v2323 = vshrl.u32 %v449, 16
    %v2325 = vshll.u32 %v449, 16
    %v2327 = vrot.slane %v2325, 1
    %v2328 = vor.u32 %v2323, %v2327
    %v2329 = vrot.slane %v441, 1
    %v2330 = vrot.slane %v449, 1
    %v2331 = vcombine.low %v441, %v2321
    %v2333 = vunpack.c.l.s4 1966171168
    %v2334 = vunpack.c.0.s8 %v2333
    %v2335 = vlaneseq
    %v2336 = vshrl.u32 %v2335, 7
    %v2337 = vsub.s32 %v2334, %v2336
    %v2338 = vrot.slane %v2331, %v2337
    %v2340 = vunpack.c.l.s4 1966171168
    %v2341 = vunpack.c.0.s8 %v2340
    %v2342 = vlaneseq
    %v2343 = vshrl.u32 %v2342, 7
    %v2344 = vsub.s32 %v2341, %v2343
    %v2345 = vrot.slane %v2329, %v2344
    %v2346 = vcombine.low %v2338, %v2345
    %v2347 = vcombine.high %v2338, %v2345
    %v2349 = vunpack.c.l.s4 1966171168
    %v2350 = vunpack.c.0.s8 %v2349
    %v2351 = vlaneseq
    %v2352 = vshrl.u32 %v2351, 7
    %v2353 = vsub.s32 %v2350, %v2352
    %v2354 = vrot.slane %v2346, %v2353
    %v2356 = vunpack.c.l.s4 1966171168
    %v2357 = vunpack.c.0.s8 %v2356
    %v2358 = vlaneseq
    %v2359 = vshrl.u32 %v2358, 7
    %v2360 = vsub.s32 %v2357, %v2359
    %v2361 = vrot.slane %v2347, %v2360
    %v2362 = vcombine.high %v2354, %v2354
    %v2363 = vcombine.low %v449, %v2328
    %v2365 = vunpack.c.l.s4 1966171168
    %v2366 = vunpack.c.0.s8 %v2365
    %v2367 = vlaneseq
    %v2368 = vshrl.u32 %v2367, 7
    %v2369 = vsub.s32 %v2366, %v2368
    %v2370 = vrot.slane %v2363, %v2369
    %v2372 = vunpack.c.l.s4 1966171168
    %v2373 = vunpack.c.0.s8 %v2372
    %v2374 = vlaneseq
    %v2375 = vshrl.u32 %v2374, 7
    %v2376 = vsub.s32 %v2373, %v2375
    %v2377 = vrot.slane %v2330, %v2376
    %v2378 = vcombine.low %v2370, %v2377
    %v2379 = vcombine.high %v2370, %v2377
    %v2381 = vunpack.c.l.s4 1966171168
    %v2382 = vunpack.c.0.s8 %v2381
    %v2383 = vlaneseq
    %v2384 = vshrl.u32 %v2383, 7
    %v2385 = vsub.s32 %v2382, %v2384
    %v2386 = vrot.slane %v2378, %v2385
    %v2388 = vunpack.c.l.s4 1966171168
    %v2389 = vunpack.c.0.s8 %v2388
    %v2390 = vlaneseq
    %v2391 = vshrl.u32 %v2390, 7
    %v2392 = vsub.s32 %v2389, %v2391
    %v2393 = vrot.slane %v2379, %v2392
    %v2394 = vcombine.high %v2386, %v2386
    %s2395 = scalar_lea.vmem [#allocation8], 384
    %v2396 = vld [vmem:[%s2395] sm:$0xf]
    %v2397 = vld [vmem:[%s2395 + $0x4] sm:$0xf]
    %v2398 = vld [vmem:[%s2395 + $0x8] sm:$0xf]
    %v2399 = vld [vmem:[%s2395 + $0xc] sm:$0xf]
    %v2400 = vld [vmem:[%s2395 + $0x10] sm:$0xf]
    %v2401 = vld [vmem:[%s2395 + $0x14] sm:$0xf]
    %v2402 = vld [vmem:[%s2395 + $0x18] sm:$0xf]
    %v2403 = vld [vmem:[%s2395 + $0x1c] sm:$0xf]
    %v2404 = vld [vmem:[%s2395 + $0x20] sm:$0xf]
    %v2405 = vld [vmem:[%s2395 + $0x24] sm:$0xf]
    %v2406 = vld [vmem:[%s2395 + $0x28] sm:$0xf]
    %v2407 = vld [vmem:[%s2395 + $0x2c] sm:$0xf]
    %v2408 = vld [vmem:[%s2395 + $0x30] sm:$0xf]
    %v2409 = vld [vmem:[%s2395 + $0x34] sm:$0xf]
    %v2410 = vld [vmem:[%s2395 + $0x38] sm:$0xf]
    %v2411 = vld [vmem:[%s2395 + $0x3c] sm:$0xf]
    %v2412 = vld [vmem:[%s2395 + $0x40] sm:$0xf]
    %v2413 = vld [vmem:[%s2395 + $0x44] sm:$0xf]
    %v2414 = vld [vmem:[%s2395 + $0x48] sm:$0xf]
    %v2415 = vld [vmem:[%s2395 + $0x4c] sm:$0xf]
    %v2416 = vld [vmem:[%s2395 + $0x50] sm:$0xf]
    %v2417 = vld [vmem:[%s2395 + $0x54] sm:$0xf]
    %v2418 = vld [vmem:[%s2395 + $0x58] sm:$0xf]
    %v2419 = vld [vmem:[%s2395 + $0x5c] sm:$0xf]
    %v2420 = vld [vmem:[%s2395 + $0x60] sm:$0xf]
    %v2421 = vld [vmem:[%s2395 + $0x64] sm:$0xf]
    %v2422 = vld [vmem:[%s2395 + $0x68] sm:$0xf]
    %v2423 = vld [vmem:[%s2395 + $0x6c] sm:$0xf]
    %v2424 = vld [vmem:[%s2395 + $0x70] sm:$0xf]
    %v2425 = vld [vmem:[%s2395 + $0x74] sm:$0xf]
    %v2426 = vld [vmem:[%s2395 + $0x78] sm:$0xf]
    %v2427 = vld [vmem:[%s2395 + $0x7c] sm:$0xf]
    %v2428 = vld [vmem:[%s2395 + $0x80] sm:$0xf]
    %v2429 = vld [vmem:[%s2395 + $0x84] sm:$0xf]
    %v2430 = vld [vmem:[%s2395 + $0x88] sm:$0xf]
    %v2431 = vld [vmem:[%s2395 + $0x8c] sm:$0xf]
    %v2432 = vld [vmem:[%s2395 + $0x90] sm:$0xf]
    %v2433 = vld [vmem:[%s2395 + $0x94] sm:$0xf]
    %v2434 = vld [vmem:[%s2395 + $0x98] sm:$0xf]
    %v2435 = vld [vmem:[%s2395 + $0x9c] sm:$0xf]
    %v2436 = vld [vmem:[%s2395 + $0xa0] sm:$0xf]
    %v2437 = vld [vmem:[%s2395 + $0xa4] sm:$0xf]
    %v2438 = vld [vmem:[%s2395 + $0xa8] sm:$0xf]
    %v2439 = vld [vmem:[%s2395 + $0xac] sm:$0xf]
    %v2440 = vld [vmem:[%s2395 + $0xb0] sm:$0xf]
    %v2441 = vld [vmem:[%s2395 + $0xb4] sm:$0xf]
    %v2442 = vld [vmem:[%s2395 + $0xb8] sm:$0xf]
    %v2443 = vld [vmem:[%s2395 + $0xbc] sm:$0xf]
    %v2444 = vcombine.low %v1742, %v1788
    %v2445 = vcombine.high %v1742, %v1788
    %v2446 = vcombine.low %v1795, %v1802
    %v2447 = vcombine.high %v1795, %v1802
    %v2449 = vunpack.c.l.s4 1966171168
    %v2450 = vunpack.c.0.s8 %v2449
    %v2451 = vlaneseq
    %v2452 = vshrl.u32 %v2451, 7
    %v2453 = vsub.s32 %v2450, %v2452
    %v2454 = vrot.slane %v2444, %v2453
    %v2456 = vunpack.c.l.s4 1966171168
    %v2457 = vunpack.c.0.s8 %v2456
    %v2458 = vlaneseq
    %v2459 = vshrl.u32 %v2458, 7
    %v2460 = vsub.s32 %v2457, %v2459
    %v2461 = vrot.slane %v2445, %v2460
    %v2463 = vunpack.c.l.s4 1966171168
    %v2464 = vunpack.c.0.s8 %v2463
    %v2465 = vlaneseq
    %v2466 = vshrl.u32 %v2465, 7
    %v2467 = vsub.s32 %v2464, %v2466
    %v2468 = vrot.slane %v2446, %v2467
    %v2470 = vunpack.c.l.s4 1966171168
    %v2471 = vunpack.c.0.s8 %v2470
    %v2472 = vlaneseq
    %v2473 = vshrl.u32 %v2472, 7
    %v2474 = vsub.s32 %v2471, %v2473
    %v2475 = vrot.slane %v2447, %v2474
    %v2476 = vcombine.low %v2454, %v2468
    %v2477 = vcombine.high %v2454, %v2468
    %v2478 = vcombine.low %v2461, %v2475
    %v2479 = vcombine.low %v1017, %v1024
    %v2480 = vcombine.low %v1025, %v2354
    %v2482 = vunpack.c.l.s4 1966171168
    %v2483 = vunpack.c.0.s8 %v2482
    %v2484 = vlaneseq
    %v2485 = vshrl.u32 %v2484, 7
    %v2486 = vsub.s32 %v2483, %v2485
    %v2487 = vrot.slane %v2479, %v2486
    %v2489 = vunpack.c.l.s4 1966171168
    %v2490 = vunpack.c.0.s8 %v2489
    %v2491 = vlaneseq
    %v2492 = vshrl.u32 %v2491, 7
    %v2493 = vsub.s32 %v2490, %v2492
    %v2494 = vrot.slane %v2480, %v2493
    %v2495 = vcombine.low %v1809, %v1855
    %v2496 = vcombine.high %v1809, %v1855
    %v2497 = vcombine.low %v2487, %v2494
    %v2498 = vcombine.high %v2487, %v2494
    %v2500 = vunpack.c.l.s4 1966171168
    %v2501 = vunpack.c.0.s8 %v2500
    %v2502 = vlaneseq
    %v2503 = vshrl.u32 %v2502, 7
    %v2504 = vsub.s32 %v2501, %v2503
    %v2505 = vrot.slane %v2495, %v2504
    %v2507 = vunpack.c.l.s4 1966171168
    %v2508 = vunpack.c.0.s8 %v2507
    %v2509 = vlaneseq
    %v2510 = vshrl.u32 %v2509, 7
    %v2511 = vsub.s32 %v2508, %v2510
    %v2512 = vrot.slane %v2496, %v2511
    %v2514 = vunpack.c.l.s4 1966171168
    %v2515 = vunpack.c.0.s8 %v2514
    %v2516 = vlaneseq
    %v2517 = vshrl.u32 %v2516, 7
    %v2518 = vsub.s32 %v2515, %v2517
    %v2519 = vrot.slane %v2497, %v2518
    %v2521 = vunpack.c.l.s4 1966171168
    %v2522 = vunpack.c.0.s8 %v2521
    %v2523 = vlaneseq
    %v2524 = vshrl.u32 %v2523, 7
    %v2525 = vsub.s32 %v2522, %v2524
    %v2526 = vrot.slane %v2498, %v2525
    %v2527 = vcombine.low %v2505, %v2519
    %v2528 = vcombine.high %v2505, %v2519
    %v2529 = vcombine.low %v2512, %v2526
    %v2530 = vcombine.low %v2361, %v2362
    %v2532 = vunpack.c.l.s4 1966171168
    %v2533 = vunpack.c.0.s8 %v2532
    %v2534 = vlaneseq
    %v2535 = vshrl.u32 %v2534, 7
    %v2536 = vsub.s32 %v2533, %v2535
    %v2537 = vrot.slane %v2530, %v2536
    %v2538 = vcombine.low %v2537, %v1922
    %v2539 = vcombine.high %v2537, %v1922
    %v2540 = vcombine.low %v1929, %v1936
    %v2541 = vcombine.high %v1929, %v1936
    %v2543 = vunpack.c.l.s4 1966171168
    %v2544 = vunpack.c.0.s8 %v2543
    %v2545 = vlaneseq
    %v2546 = vshrl.u32 %v2545, 7
    %v2547 = vsub.s32 %v2544, %v2546
    %v2548 = vrot.slane %v2538, %v2547
    %v2550 = vunpack.c.l.s4 1966171168
    %v2551 = vunpack.c.0.s8 %v2550
    %v2552 = vlaneseq
    %v2553 = vshrl.u32 %v2552, 7
    %v2554 = vsub.s32 %v2551, %v2553
    %v2555 = vrot.slane %v2539, %v2554
    %v2557 = vunpack.c.l.s4 1966171168
    %v2558 = vunpack.c.0.s8 %v2557
    %v2559 = vlaneseq
    %v2560 = vshrl.u32 %v2559, 7
    %v2561 = vsub.s32 %v2558, %v2560
    %v2562 = vrot.slane %v2540, %v2561
    %v2564 = vunpack.c.l.s4 1966171168
    %v2565 = vunpack.c.0.s8 %v2564
    %v2566 = vlaneseq
    %v2567 = vshrl.u32 %v2566, 7
    %v2568 = vsub.s32 %v2565, %v2567
    %v2569 = vrot.slane %v2541, %v2568
    %v2570 = vcombine.low %v2548, %v2562
    %v2571 = vcombine.high %v2548, %v2562
    %v2572 = vcombine.low %v2555, %v2569
    %v2573 = vcombine.low %v1049, %v1056
    %v2575 = vunpack.c.l.s4 1966171168
    %v2576 = vunpack.c.0.s8 %v2575
    %v2577 = vlaneseq
    %v2578 = vshrl.u32 %v2577, 7
    %v2579 = vsub.s32 %v2576, %v2578
    %v2580 = vrot.slane %v2573, %v2579
    %v2581 = vcombine.low %v1943, %v1987
    %v2582 = vcombine.high %v1943, %v1987
    %v2583 = vcombine.low %v1994, %v2580
    %v2584 = vcombine.high %v1994, %v2580
    %v2586 = vunpack.c.l.s4 1966171168
    %v2587 = vunpack.c.0.s8 %v2586
    %v2588 = vlaneseq
    %v2589 = vshrl.u32 %v2588, 7
    %v2590 = vsub.s32 %v2587, %v2589
    %v2591 = vrot.slane %v2581, %v2590
    %v2593 = vunpack.c.l.s4 1966171168
    %v2594 = vunpack.c.0.s8 %v2593
    %v2595 = vlaneseq
    %v2596 = vshrl.u32 %v2595, 7
    %v2597 = vsub.s32 %v2594, %v2596
    %v2598 = vrot.slane %v2582, %v2597
    %v2600 = vunpack.c.l.s4 1966171168
    %v2601 = vunpack.c.0.s8 %v2600
    %v2602 = vlaneseq
    %v2603 = vshrl.u32 %v2602, 7
    %v2604 = vsub.s32 %v2601, %v2603
    %v2605 = vrot.slane %v2583, %v2604
    %v2607 = vunpack.c.l.s4 1966171168
    %v2608 = vunpack.c.0.s8 %v2607
    %v2609 = vlaneseq
    %v2610 = vshrl.u32 %v2609, 7
    %v2611 = vsub.s32 %v2608, %v2610
    %v2612 = vrot.slane %v2584, %v2611
    %v2613 = vcombine.low %v2591, %v2605
    %v2614 = vcombine.high %v2591, %v2605
    %v2615 = vcombine.low %v2598, %v2612
    %v2616 = vcombine.low %v1057, %v2386
    %v2617 = vcombine.low %v2393, %v2394
    %v2619 = vunpack.c.l.s4 1966171168
    %v2620 = vunpack.c.0.s8 %v2619
    %v2621 = vlaneseq
    %v2622 = vshrl.u32 %v2621, 7
    %v2623 = vsub.s32 %v2620, %v2622
    %v2624 = vrot.slane %v2616, %v2623
    %v2626 = vunpack.c.l.s4 1966171168
    %v2627 = vunpack.c.0.s8 %v2626
    %v2628 = vlaneseq
    %v2629 = vshrl.u32 %v2628, 7
    %v2630 = vsub.s32 %v2627, %v2629
    %v2631 = vrot.slane %v2617, %v2630
    %v2632 = vcombine.low %v2624, %v2631
    %v2633 = vcombine.high %v2624, %v2631
    %v2635 = vunpack.c.l.s4 1966171168
    %v2636 = vunpack.c.0.s8 %v2635
    %v2637 = vlaneseq
    %v2638 = vshrl.u32 %v2637, 7
    %v2639 = vsub.s32 %v2636, %v2638
    %v2640 = vrot.slane %v2632, %v2639
    %v2642 = vunpack.c.l.s4 1966171168
    %v2643 = vunpack.c.0.s8 %v2642
    %v2644 = vlaneseq
    %v2645 = vshrl.u32 %v2644, 7
    %v2646 = vsub.s32 %v2643, %v2645
    %v2647 = vrot.slane %v2633, %v2646
    %v2648 = vcombine.high %v2640, %v2640
    %v2712 = vunpack.c.l.b16 %v2396
    %v2713 = vunpack.c.l.b16 %v2397
    %v2714 = vunpack.c.l.b16 %v2398
    %v2715 = vunpack.c.l.b16 %v2399
    %v2716 = vunpack.c.l.b16 %v2400
    %v2717 = vunpack.c.l.b16 %v2401
    %v2718 = vunpack.c.l.b16 %v2402
    %v2719 = vunpack.c.l.b16 %v2403
    %v2720 = vunpack.c.l.b16 %v2404
    %v2721 = vunpack.c.l.b16 %v2405
    %v2722 = vunpack.c.l.b16 %v2406
    %v2723 = vunpack.c.l.b16 %v2407
    %v2724 = vunpack.c.l.b16 %v2408
    %v2725 = vunpack.c.l.b16 %v2409
    %v2726 = vunpack.c.l.b16 %v2410
    %v2727 = vunpack.c.l.b16 %v2411
    %v2728 = vunpack.c.l.b16 %v2412
    %v2729 = vunpack.c.l.b16 %v2413
    %v2730 = vunpack.c.l.b16 %v2414
    %v2731 = vunpack.c.l.b16 %v2415
    %v2732 = vunpack.c.l.b16 %v2416
    %v2733 = vunpack.c.l.b16 %v2417
    %v2734 = vunpack.c.l.b16 %v2418
    %v2735 = vunpack.c.l.b16 %v2419
    %v2736 = vunpack.c.l.b16 %v2420
    %v2737 = vunpack.c.l.b16 %v2421
    %v2738 = vunpack.c.l.b16 %v2422
    %v2739 = vunpack.c.l.b16 %v2423
    %v2740 = vunpack.c.l.b16 %v2424
    %v2741 = vunpack.c.l.b16 %v2425
    %v2742 = vunpack.c.l.b16 %v2426
    %v2743 = vunpack.c.l.b16 %v2427
    %v2744 = vunpack.c.l.b16 %v2428
    %v2745 = vunpack.c.l.b16 %v2429
    %v2746 = vunpack.c.l.b16 %v2430
    %v2747 = vunpack.c.l.b16 %v2431
    %v2748 = vunpack.c.l.b16 %v2432
    %v2749 = vunpack.c.l.b16 %v2433
    %v2750 = vunpack.c.l.b16 %v2434
    %v2751 = vunpack.c.l.b16 %v2435
    %v2752 = vunpack.c.l.b16 %v2436
    %v2753 = vunpack.c.l.b16 %v2437
    %v2754 = vunpack.c.l.b16 %v2438
    %v2755 = vunpack.c.l.b16 %v2439
    %v2756 = vunpack.c.l.b16 %v2440
    %v2757 = vunpack.c.l.b16 %v2441
    %v2758 = vunpack.c.l.b16 %v2442
    %v2759 = vunpack.c.l.b16 %v2443
    %v2760 = vpack.c.b16 %v2713, %v2712
    %v2761 = vpack.c.b16 %v2715, %v2714
    %v2762 = vpack.c.b16 %v2717, %v2716
    %v2763 = vpack.c.b16 %v2719, %v2718
    %v2764 = vpack.c.b16 %v2721, %v2720
    %v2765 = vpack.c.b16 %v2723, %v2722
    %v2766 = vpack.c.b16 %v2725, %v2724
    %v2767 = vpack.c.b16 %v2727, %v2726
    %v2768 = vpack.c.b16 %v2729, %v2728
    %v2769 = vpack.c.b16 %v2731, %v2730
    %v2770 = vpack.c.b16 %v2733, %v2732
    %v2771 = vpack.c.b16 %v2735, %v2734
    %v2772 = vpack.c.b16 %v2737, %v2736
    %v2773 = vpack.c.b16 %v2739, %v2738
    %v2774 = vpack.c.b16 %v2741, %v2740
    %v2775 = vpack.c.b16 %v2743, %v2742
    %v2776 = vpack.c.b16 %v2745, %v2744
    %v2777 = vpack.c.b16 %v2747, %v2746
    %v2778 = vpack.c.b16 %v2749, %v2748
    %v2779 = vpack.c.b16 %v2751, %v2750
    %v2780 = vpack.c.b16 %v2753, %v2752
    %v2781 = vpack.c.b16 %v2755, %v2754
    %v2782 = vpack.c.b16 %v2757, %v2756
    %v2783 = vpack.c.b16 %v2759, %v2758
    %2808 = vmatprep.subr.bf16.mxu0 0
    %2809 = vmatpush1.bf16.msra.mxu0 %v2760
    %2810 = vmatprep.subr.bf16.mxu0 0
    %2811 = vmatpush1.bf16.msra.mxu0 %v2761
    %2812 = vmatprep.subr.bf16.mxu0 0
    %2813 = vmatpush1.bf16.msra.mxu0 %v2762
    %2814 = vmatprep.subr.bf16.mxu0 0
    %2815 = vmatpush1.bf16.msra.mxu0 %v2763
    %2816 = vmatprep.subr.bf16.mxu0 0
    %2817 = vmatpush1.bf16.msra.mxu0 %v2764
    %2818 = vmatprep.subr.bf16.mxu0 0
    %2819 = vmatpush1.bf16.msra.mxu0 %v2765
    %2820 = vmatprep.subr.bf16.mxu0 0
    %2821 = vmatpush1.bf16.msra.mxu0 %v2766
    %2822 = vmatprep.subr.bf16.mxu0 0
    %2823 = vmatpush1.bf16.msra.mxu0 %v2767
    %2824 = vmatprep.subr.bf16.mxu0 0
    %2825 = vmatpush1.bf16.msra.mxu0 %v2768
    %2826 = vmatprep.subr.bf16.mxu0 0
    %2827 = vmatpush1.bf16.msra.mxu0 %v2769
    %2828 = vmatprep.subr.bf16.mxu0 0
    %2829 = vmatpush1.bf16.msra.mxu0 %v2770
    %2830 = vmatprep.subr.bf16.mxu0 0
    %2831 = vmatpush1.bf16.msra.mxu0 %v2771
    %2832 = vmatprep.subr.bf16.mxu0 0
    %2833 = vmatpush1.bf16.msra.mxu0 %v2772
    %2834 = vmatprep.subr.bf16.mxu0 0
    %2835 = vmatpush1.bf16.msra.mxu0 %v2773
    %2836 = vmatprep.subr.bf16.mxu0 0
    %2837 = vmatpush1.bf16.msra.mxu0 %v2774
    %2838 = vmatprep.subr.bf16.mxu0 0
    %2839 = vmatpush1.bf16.msra.mxu0 %v2775
    %2840 = vmatprep.mubr.bf16.mxu0 %v2478
    %2841 = vmatmul.mubr.bf16.gmra.mrb[0].mxu0 %v2476
    %v2842 = vpop.f32.mrb[0].mxu0
    %v2843 = vadd.f32 0.0, %v2842
    %v2844 = vpop.f32.mrb[0].mxu0
    %v2845 = vpop.f32.mrb[0].mxu0
    %v2846 = vadd.f32 0.0, %v2845
    %v2847 = vpop.f32.mrb[0].mxu0
    %2848 = vmatprep.mubr.bf16.mxu0 %v2529
    %2849 = vmatmul.mubr.bf16.gmra.mrb[0].mxu0 %v2527
    %v2850 = vpop.f32.mrb[0].mxu0
    %v2851 = vadd.f32 0.0, %v2850
    %v2852 = vpop.f32.mrb[0].mxu0
    %v2853 = vpop.f32.mrb[0].mxu0
    %v2854 = vadd.f32 0.0, %v2853
    %v2855 = vpop.f32.mrb[0].mxu0
    %2856 = vmatprep.mubr.bf16.mxu0 %v2572
    %2857 = vmatmul.mubr.bf16.gmra.mrb[0].mxu0 %v2570
    %v2858 = vpop.f32.mrb[0].mxu0
    %v2859 = vadd.f32 0.0, %v2858
    %v2860 = vpop.f32.mrb[0].mxu0
    %v2861 = vpop.f32.mrb[0].mxu0
    %v2862 = vadd.f32 0.0, %v2861
    %v2863 = vpop.f32.mrb[0].mxu0
    %2864 = vmatprep.mubr.bf16.mxu0 %v2615
    %2865 = vmatmul.mubr.bf16.gmra.mrb[0].mxu0 %v2613
    %v2866 = vpop.f32.mrb[0].mxu0
    %v2867 = vadd.f32 0.0, %v2866
    %v2868 = vpop.f32.mrb[0].mxu0
    %v2869 = vpop.f32.mrb[0].mxu0
    %v2870 = vadd.f32 0.0, %v2869
    %v2871 = vpop.f32.mrb[0].mxu0
    %2872 = vmatprep.mubr.bf16.mxu0 %v2647
    %2873 = vmatmul.mubr.bf16.gmra.mrb[0].mxu0 %v2640
    %v2874 = vpop.f32.mrb[0].mxu0
    %v2875 = vadd.f32 0.0, %v2874
    %v2876 = vpop.f32.mrb[0].mxu0
    %v2877 = vpop.f32.mrb[0].mxu0
    %v2878 = vpop.f32.mrb[0].mxu0
    %2879 = vdwg.mxu0
    %2880 = vmatprep.subr.bf16.mxu0 0
    %2881 = vmatpush1.bf16.msra.mxu0 %v2776
    %2882 = vmatprep.subr.bf16.mxu0 0
    %2883 = vmatpush1.bf16.msra.mxu0 %v2777
    %2884 = vmatprep.subr.bf16.mxu0 0
    %2885 = vmatpush1.bf16.msra.mxu0 %v2778
    %2886 = vmatprep.subr.bf16.mxu0 0
    %2887 = vmatpush1.bf16.msra.mxu0 %v2779
    %2888 = vmatprep.subr.bf16.mxu0 0
    %2889 = vmatpush1.bf16.msra.mxu0 %v2780
    %2890 = vmatprep.subr.bf16.mxu0 0
    %2891 = vmatpush1.bf16.msra.mxu0 %v2781
    %2892 = vmatprep.subr.bf16.mxu0 0
    %2893 = vmatpush1.bf16.msra.mxu0 %v2782
    %2894 = vmatprep.subr.bf16.mxu0 0
    %2895 = vmatpush1.bf16.msra.mxu0 %v2783
    %2896 = vmatprep.subr.bf16.mxu0 0
    %2897 = vmatpush1.bf16.msra.mxu0 0
    %2898 = vmatprep.subr.bf16.mxu0 0
    %2899 = vmatpush1.bf16.msra.mxu0 0
    %2900 = vmatprep.subr.bf16.mxu0 0
    %2901 = vmatpush1.bf16.msra.mxu0 0
    %2902 = vmatprep.subr.bf16.mxu0 0
    %2903 = vmatpush1.bf16.msra.mxu0 0
    %2904 = vmatprep.subr.bf16.mxu0 0
    %2905 = vmatpush1.bf16.msra.mxu0 0
    %2906 = vmatprep.subr.bf16.mxu0 0
    %2907 = vmatpush1.bf16.msra.mxu0 0
    %2908 = vmatprep.subr.bf16.mxu0 0
    %2909 = vmatpush1.bf16.msra.mxu0 0
    %2910 = vmatprep.subr.bf16.mxu0 0
    %2911 = vmatpush1.bf16.msra.mxu0 0
    %2912 = vmatprep.mubr.bf16.mxu0 0
    %2913 = vmatmul.mubr.bf16.gmra.mrb[0].mxu0 %v2477
    %v2914 = vpop.f32.mrb[0].mxu0
    %v2915 = vadd.f32 %v2843, %v2914
    %v2916 = vpop.f32.mrb[0].mxu0
    %v2917 = vpop.f32.mrb[0].mxu0
    %v2918 = vadd.f32 %v2846, %v2917
    %v2919 = vpop.f32.mrb[0].mxu0
    %2920 = vmatprep.mubr.bf16.mxu0 0
    %2921 = vmatmul.mubr.bf16.gmra.mrb[0].mxu0 %v2528
    %v2922 = vpop.f32.mrb[0].mxu0
    %v2923 = vadd.f32 %v2851, %v2922
    %v2924 = vpop.f32.mrb[0].mxu0
    %v2925 = vpop.f32.mrb[0].mxu0
    %v2926 = vadd.f32 %v2854, %v2925
    %v2927 = vpop.f32.mrb[0].mxu0
    %2928 = vmatprep.mubr.bf16.mxu0 0
    %2929 = vmatmul.mubr.bf16.gmra.mrb[0].mxu0 %v2571
    %v2930 = vpop.f32.mrb[0].mxu0
    %v2931 = vadd.f32 %v2859, %v2930
    %v2932 = vpop.f32.mrb[0].mxu0
    %v2933 = vpop.f32.mrb[0].mxu0
    %v2934 = vadd.f32 %v2862, %v2933
    %v2935 = vpop.f32.mrb[0].mxu0
    %2936 = vmatprep.mubr.bf16.mxu0 0
    %2937 = vmatmul.mubr.bf16.gmra.mrb[0].mxu0 %v2614
    %v2938 = vpop.f32.mrb[0].mxu0
    %v2939 = vadd.f32 %v2867, %v2938
    %v2940 = vpop.f32.mrb[0].mxu0
    %v2941 = vpop.f32.mrb[0].mxu0
    %v2942 = vadd.f32 %v2870, %v2941
    %v2943 = vpop.f32.mrb[0].mxu0
    %2944 = vmatprep.mubr.bf16.mxu0 0
    %2945 = vmatmul.mubr.bf16.gmra.mrb[0].mxu0 %v2648
    %v2946 = vpop.f32.mrb[0].mxu0
    %v2947 = vadd.f32 %v2875, %v2946
    %v2948 = vpop.f32.mrb[0].mxu0
    %v2949 = vpop.f32.mrb[0].mxu0
    %v2950 = vpop.f32.mrb[0].mxu0
    %2951 = vdwg.mxu0
    %v2952 = vadd.f32 %v2278, %v2915
    %v2953 = vadd.f32 %v2281, %v2918
    %v2954 = vadd.f32 %v2286, %v2923
    %v2955 = vadd.f32 %v2289, %v2926
    %v2956 = vadd.f32 %v2294, %v2931
    %v2957 = vadd.f32 %v2297, %v2934
    %v2958 = vadd.f32 %v2302, %v2939
    %v2959 = vadd.f32 %v2305, %v2942
    %v2960 = vadd.f32 %v2310, %v2947
    %v2961 = vld [vmem:[#allocation10] sm:$0x1]
    %v2963 = vlaneseq
    %v2964 = vshrl.u32 %v2963, 7
    %v2965 = vsub.s32 0, %v2964
    %v2966 = vrot.slane %v2961, %v2965
    %v2968 = vadd.f32 %v2952, %v2966
    %v2969 = vadd.f32 %v2953, %v2966
    %v2970 = vadd.f32 %v2954, %v2966
    %v2971 = vadd.f32 %v2955, %v2966
    %v2972 = vadd.f32 %v2956, %v2966
    %v2973 = vadd.f32 %v2957, %v2966
    %v2974 = vadd.f32 %v2958, %v2966
    %v2975 = vadd.f32 %v2959, %v2966
    %v2976 = vadd.f32 %v2960, %v2966
    %v2977 = vmax.f32 %v2968, 0.0
    %v2978 = vmax.f32 %v2969, 0.0
    %v2979 = vmax.f32 %v2970, 0.0
    %v2980 = vmax.f32 %v2971, 0.0
    %v2981 = vmax.f32 %v2972, 0.0
    %v2982 = vmax.f32 %v2973, 0.0
    %v2983 = vmax.f32 %v2974, 0.0
    %v2984 = vmax.f32 %v2975, 0.0
    %v2985 = vmax.f32 %v2976, 0.0
    %v2986 = vpack.c.bf16 %v2978, %v2977
    %v2987 = vpack.c.bf16 %v2980, %v2979
    %v2988 = vpack.c.bf16 %v2982, %v2981
    %v2989 = vpack.c.bf16 %v2984, %v2983
    %v2990 = vpack.c.bf16 %v2985, %v2985
    %v2996 = vcombine.high %v2986, %v2986
    %v2998 = vunpack.c.l.s4 1966171168
    %v2999 = vunpack.c.0.s8 %v2998
    %v3000 = vlaneseq
    %v3001 = vshrl.u32 %v3000, 7
    %v3002 = vsub.s32 %v2999, %v3001
    %v3003 = vrot.slane %v2986, %v3002
    %v3005 = vunpack.c.l.s4 1966171168
    %v3006 = vunpack.c.0.s8 %v3005
    %v3007 = vlaneseq
    %v3008 = vshrl.u32 %v3007, 7
    %v3009 = vsub.s32 %v3006, %v3008
    %v3010 = vrot.slane %v2996, %v3009
    %v3011 = vcombine.high %v3003, %v3003
    %v3012 = vcombine.high %v3010, %v3010
    %v3014 = vunpack.c.l.s4 1966171168
    %v3015 = vunpack.c.0.s8 %v3014
    %v3016 = vlaneseq
    %v3017 = vshrl.u32 %v3016, 7
    %v3018 = vsub.s32 %v3015, %v3017
    %v3019 = vrot.slane %v3003, %v3018
    %v3021 = vunpack.c.l.s4 1966171168
    %v3022 = vunpack.c.0.s8 %v3021
    %v3023 = vlaneseq
    %v3024 = vshrl.u32 %v3023, 7
    %v3025 = vsub.s32 %v3022, %v3024
    %v3026 = vrot.slane %v3010, %v3025
    %v3028 = vunpack.c.l.s4 1966171168
    %v3029 = vunpack.c.0.s8 %v3028
    %v3030 = vlaneseq
    %v3031 = vshrl.u32 %v3030, 7
    %v3032 = vsub.s32 %v3029, %v3031
    %v3033 = vrot.slane %v3011, %v3032
    %v3035 = vunpack.c.l.s4 1966171168
    %v3036 = vunpack.c.0.s8 %v3035
    %v3037 = vlaneseq
    %v3038 = vshrl.u32 %v3037, 7
    %v3039 = vsub.s32 %v3036, %v3038
    %v3040 = vrot.slane %v3012, %v3039
    %v3041 = vcombine.high %v3019, %v3019
    %v3042 = vcombine.high %v3026, %v3026
    %v3043 = vcombine.high %v3033, %v3033
    %v3044 = vcombine.high %v3040, %v3040
    %v3045 = vcombine.high %v2987, %v2987
    %v3047 = vunpack.c.l.s4 1966171168
    %v3048 = vunpack.c.0.s8 %v3047
    %v3049 = vlaneseq
    %v3050 = vshrl.u32 %v3049, 7
    %v3051 = vsub.s32 %v3048, %v3050
    %v3052 = vrot.slane %v2987, %v3051
    %v3054 = vunpack.c.l.s4 1966171168
    %v3055 = vunpack.c.0.s8 %v3054
    %v3056 = vlaneseq
    %v3057 = vshrl.u32 %v3056, 7
    %v3058 = vsub.s32 %v3055, %v3057
    %v3059 = vrot.slane %v3045, %v3058
    %v3060 = vcombine.high %v3052, %v3052
    %v3061 = vcombine.high %v3059, %v3059
    %v3063 = vunpack.c.l.s4 1966171168
    %v3064 = vunpack.c.0.s8 %v3063
    %v3065 = vlaneseq
    %v3066 = vshrl.u32 %v3065, 7
    %v3067 = vsub.s32 %v3064, %v3066
    %v3068 = vrot.slane %v3052, %v3067
    %v3070 = vunpack.c.l.s4 1966171168
    %v3071 = vunpack.c.0.s8 %v3070
    %v3072 = vlaneseq
    %v3073 = vshrl.u32 %v3072, 7
    %v3074 = vsub.s32 %v3071, %v3073
    %v3075 = vrot.slane %v3059, %v3074
    %v3077 = vunpack.c.l.s4 1966171168
    %v3078 = vunpack.c.0.s8 %v3077
    %v3079 = vlaneseq
    %v3080 = vshrl.u32 %v3079, 7
    %v3081 = vsub.s32 %v3078, %v3080
    %v3082 = vrot.slane %v3060, %v3081
    %v3084 = vunpack.c.l.s4 1966171168
    %v3085 = vunpack.c.0.s8 %v3084
    %v3086 = vlaneseq
    %v3087 = vshrl.u32 %v3086, 7
    %v3088 = vsub.s32 %v3085, %v3087
    %v3089 = vrot.slane %v3061, %v3088
    %v3090 = vcombine.high %v3068, %v3068
    %v3091 = vcombine.high %v3075, %v3075
    %v3092 = vcombine.high %v3082, %v3082
    %v3093 = vcombine.high %v3089, %v3089
    %v3094 = vcombine.high %v2988, %v2988
    %v3096 = vunpack.c.l.s4 1966171168
    %v3097 = vunpack.c.0.s8 %v3096
    %v3098 = vlaneseq
    %v3099 = vshrl.u32 %v3098, 7
    %v3100 = vsub.s32 %v3097, %v3099
    %v3101 = vrot.slane %v2988, %v3100
    %v3103 = vunpack.c.l.s4 1966171168
    %v3104 = vunpack.c.0.s8 %v3103
    %v3105 = vlaneseq
    %v3106 = vshrl.u32 %v3105, 7
    %v3107 = vsub.s32 %v3104, %v3106
    %v3108 = vrot.slane %v3094, %v3107
    %v3109 = vcombine.high %v3101, %v3101
    %v3110 = vcombine.high %v3108, %v3108
    %v3112 = vunpack.c.l.s4 1966171168
    %v3113 = vunpack.c.0.s8 %v3112
    %v3114 = vlaneseq
    %v3115 = vshrl.u32 %v3114, 7
    %v3116 = vsub.s32 %v3113, %v3115
    %v3117 = vrot.slane %v3101, %v3116
    %v3119 = vunpack.c.l.s4 1966171168
    %v3120 = vunpack.c.0.s8 %v3119
    %v3121 = vlaneseq
    %v3122 = vshrl.u32 %v3121, 7
    %v3123 = vsub.s32 %v3120, %v3122
    %v3124 = vrot.slane %v3108, %v3123
    %v3126 = vunpack.c.l.s4 1966171168
    %v3127 = vunpack.c.0.s8 %v3126
    %v3128 = vlaneseq
    %v3129 = vshrl.u32 %v3128, 7
    %v3130 = vsub.s32 %v3127, %v3129
    %v3131 = vrot.slane %v3109, %v3130
    %v3133 = vunpack.c.l.s4 1966171168
    %v3134 = vunpack.c.0.s8 %v3133
    %v3135 = vlaneseq
    %v3136 = vshrl.u32 %v3135, 7
    %v3137 = vsub.s32 %v3134, %v3136
    %v3138 = vrot.slane %v3110, %v3137
    %v3139 = vcombine.high %v3117, %v3117
    %v3140 = vcombine.high %v3124, %v3124
    %v3141 = vcombine.high %v3131, %v3131
    %v3142 = vcombine.high %v3138, %v3138
    %v3143 = vcombine.high %v2989, %v2989
    %v3145 = vunpack.c.l.s4 1966171168
    %v3146 = vunpack.c.0.s8 %v3145
    %v3147 = vlaneseq
    %v3148 = vshrl.u32 %v3147, 7
    %v3149 = vsub.s32 %v3146, %v3148
    %v3150 = vrot.slane %v2989, %v3149
    %v3152 = vunpack.c.l.s4 1966171168
    %v3153 = vunpack.c.0.s8 %v3152
    %v3154 = vlaneseq
    %v3155 = vshrl.u32 %v3154, 7
    %v3156 = vsub.s32 %v3153, %v3155
    %v3157 = vrot.slane %v3143, %v3156
    %v3158 = vcombine.high %v3150, %v3150
    %v3159 = vcombine.high %v3157, %v3157
    %v3161 = vunpack.c.l.s4 1966171168
    %v3162 = vunpack.c.0.s8 %v3161
    %v3163 = vlaneseq
    %v3164 = vshrl.u32 %v3163, 7
    %v3165 = vsub.s32 %v3162, %v3164
    %v3166 = vrot.slane %v3150, %v3165
    %v3168 = vunpack.c.l.s4 1966171168
    %v3169 = vunpack.c.0.s8 %v3168
    %v3170 = vlaneseq
    %v3171 = vshrl.u32 %v3170, 7
    %v3172 = vsub.s32 %v3169, %v3171
    %v3173 = vrot.slane %v3157, %v3172
    %v3175 = vunpack.c.l.s4 1966171168
    %v3176 = vunpack.c.0.s8 %v3175
    %v3177 = vlaneseq
    %v3178 = vshrl.u32 %v3177, 7
    %v3179 = vsub.s32 %v3176, %v3178
    %v3180 = vrot.slane %v3158, %v3179
    %v3182 = vunpack.c.l.s4 1966171168
    %v3183 = vunpack.c.0.s8 %v3182
    %v3184 = vlaneseq
    %v3185 = vshrl.u32 %v3184, 7
    %v3186 = vsub.s32 %v3183, %v3185
    %v3187 = vrot.slane %v3159, %v3186
    %v3188 = vcombine.high %v3166, %v3166
    %v3189 = vcombine.high %v3173, %v3173
    %v3190 = vcombine.high %v3180, %v3180
    %v3191 = vcombine.high %v3187, %v3187
    %v3193 = vunpack.c.l.s4 1966171168
    %v3194 = vunpack.c.0.s8 %v3193
    %v3195 = vlaneseq
    %v3196 = vshrl.u32 %v3195, 7
    %v3197 = vsub.s32 %v3194, %v3196
    %v3198 = vrot.slane %v2990, %v3197
    %v3199 = vcombine.high %v3198, %v3198
    %v3201 = vunpack.c.l.s4 1966171168
    %v3202 = vunpack.c.0.s8 %v3201
    %v3203 = vlaneseq
    %v3204 = vshrl.u32 %v3203, 7
    %v3205 = vsub.s32 %v3202, %v3204
    %v3206 = vrot.slane %v3198, %v3205
    %v3208 = vunpack.c.l.s4 1966171168
    %v3209 = vunpack.c.0.s8 %v3208
    %v3210 = vlaneseq
    %v3211 = vshrl.u32 %v3210, 7
    %v3212 = vsub.s32 %v3209, %v3211
    %v3213 = vrot.slane %v3199, %v3212
    %v3214 = vcombine.high %v3206, %v3206
    %v3215 = vcombine.high %v3213, %v3213
    %v3216 = vcombine.low %v3019, %v3033
    %v3218 = vunpack.c.l.s4 1966171168
    %v3219 = vunpack.c.0.s8 %v3218
    %v3220 = vlaneseq
    %v3221 = vshrl.u32 %v3220, 7
    %v3222 = vsub.s32 %v3219, %v3221
    %v3223 = vrot.slane %v3216, %v3222
    %v3225 = vunpack.c.l.s4 1966171168
    %v3226 = vunpack.c.0.s8 %v3225
    %v3227 = vlaneseq
    %v3228 = vshrl.u32 %v3227, 7
    %v3229 = vsub.s32 %v3226, %v3228
    %v3230 = vrot.slane %v3223, %v3229
    %v3231 = vcombine.low %v3043, %v3026
    %v3233 = vunpack.c.l.s4 1966171168
    %v3234 = vunpack.c.0.s8 %v3233
    %v3235 = vlaneseq
    %v3236 = vshrl.u32 %v3235, 7
    %v3237 = vsub.s32 %v3234, %v3236
    %v3238 = vrot.slane %v3231, %v3237
    %v3240 = vunpack.c.l.s4 1966171168
    %v3241 = vunpack.c.0.s8 %v3240
    %v3242 = vlaneseq
    %v3243 = vshrl.u32 %v3242, 7
    %v3244 = vsub.s32 %v3241, %v3243
    %v3245 = vrot.slane %v3238, %v3244
    %v3246 = vcombine.low %v3042, %v3044
    %v3248 = vunpack.c.l.s4 1966171168
    %v3249 = vunpack.c.0.s8 %v3248
    %v3250 = vlaneseq
    %v3251 = vshrl.u32 %v3250, 7
    %v3252 = vsub.s32 %v3249, %v3251
    %v3253 = vrot.slane %v3246, %v3252
    %v3255 = vunpack.c.l.s4 1966171168
    %v3256 = vunpack.c.0.s8 %v3255
    %v3257 = vlaneseq
    %v3258 = vshrl.u32 %v3257, 7
    %v3259 = vsub.s32 %v3256, %v3258
    %v3260 = vrot.slane %v3253, %v3259
    %v3261 = vcombine.low %v3082, %v3090
    %v3263 = vunpack.c.l.s4 1966171168
    %v3264 = vunpack.c.0.s8 %v3263
    %v3265 = vlaneseq
    %v3266 = vshrl.u32 %v3265, 7
    %v3267 = vsub.s32 %v3264, %v3266
    %v3268 = vrot.slane %v3261, %v3267
    %v3270 = vunpack.c.l.s4 1966171168
    %v3271 = vunpack.c.0.s8 %v3270
    %v3272 = vlaneseq
    %v3273 = vshrl.u32 %v3272, 7
    %v3274 = vsub.s32 %v3271, %v3273
    %v3275 = vrot.slane %v3268, %v3274
    %v3276 = vcombine.low %v3139, %v3141
    %v3278 = vunpack.c.l.s4 1966171168
    %v3279 = vunpack.c.0.s8 %v3278
    %v3280 = vlaneseq
    %v3281 = vshrl.u32 %v3280, 7
    %v3282 = vsub.s32 %v3279, %v3281
    %v3283 = vrot.slane %v3276, %v3282
    %v3285 = vunpack.c.l.s4 1966171168
    %v3286 = vunpack.c.0.s8 %v3285
    %v3287 = vlaneseq
    %v3288 = vshrl.u32 %v3287, 7
    %v3289 = vsub.s32 %v3286, %v3288
    %v3290 = vrot.slane %v3283, %v3289
    %v3291 = vcombine.low %v3138, %v3140
    %v3293 = vunpack.c.l.s4 1966171168
    %v3294 = vunpack.c.0.s8 %v3293
    %v3295 = vlaneseq
    %v3296 = vshrl.u32 %v3295, 7
    %v3297 = vsub.s32 %v3294, %v3296
    %v3298 = vrot.slane %v3291, %v3297
    %v3300 = vunpack.c.l.s4 1966171168
    %v3301 = vunpack.c.0.s8 %v3300
    %v3302 = vlaneseq
    %v3303 = vshrl.u32 %v3302, 7
    %v3304 = vsub.s32 %v3301, %v3303
    %v3305 = vrot.slane %v3298, %v3304
    %v3306 = vcombine.low %v3166, %v3180
    %v3308 = vunpack.c.l.s4 1966171168
    %v3309 = vunpack.c.0.s8 %v3308
    %v3310 = vlaneseq
    %v3311 = vshrl.u32 %v3310, 7
    %v3312 = vsub.s32 %v3309, %v3311
    %v3313 = vrot.slane %v3306, %v3312
    %v3315 = vunpack.c.l.s4 1966171168
    %v3316 = vunpack.c.0.s8 %v3315
    %v3317 = vlaneseq
    %v3318 = vshrl.u32 %v3317, 7
    %v3319 = vsub.s32 %v3316, %v3318
    %v3320 = vrot.slane %v3313, %v3319
    %v3321 = vcombine.low %v3190, %v3173
    %v3323 = vunpack.c.l.s4 1966171168
    %v3324 = vunpack.c.0.s8 %v3323
    %v3325 = vlaneseq
    %v3326 = vshrl.u32 %v3325, 7
    %v3327 = vsub.s32 %v3324, %v3326
    %v3328 = vrot.slane %v3321, %v3327
    %v3330 = vunpack.c.l.s4 1966171168
    %v3331 = vunpack.c.0.s8 %v3330
    %v3332 = vlaneseq
    %v3333 = vshrl.u32 %v3332, 7
    %v3334 = vsub.s32 %v3331, %v3333
    %v3335 = vrot.slane %v3328, %v3334
    %v3337 = vunpack.c.l.s4 1966171168
    %v3338 = vunpack.c.0.s8 %v3337
    %v3339 = vlaneseq
    %v3340 = vshrl.u32 %v3339, 7
    %v3341 = vsub.s32 %v3338, %v3340
    %v3342 = vrot.slane %v3041, %v3341
    %v3343 = vcombine.low %v3223, %v3342
    %v3345 = vunpack.c.l.s4 1966171168
    %v3346 = vunpack.c.0.s8 %v3345
    %v3347 = vlaneseq
    %v3348 = vshrl.u32 %v3347, 7
    %v3349 = vsub.s32 %v3346, %v3348
    %v3350 = vrot.slane %v3343, %v3349
    %v3352 = vunpack.c.l.s4 1966171168
    %v3353 = vunpack.c.0.s8 %v3352
    %v3354 = vlaneseq
    %v3355 = vshrl.u32 %v3354, 7
    %v3356 = vsub.s32 %v3353, %v3355
    %v3357 = vrot.slane %v3040, %v3356
    %v3358 = vcombine.low %v3238, %v3357
    %v3360 = vunpack.c.l.s4 1966171168
    %v3361 = vunpack.c.0.s8 %v3360
    %v3362 = vlaneseq
    %v3363 = vshrl.u32 %v3362, 7
    %v3364 = vsub.s32 %v3361, %v3363
    %v3365 = vrot.slane %v3358, %v3364
    %v3367 = vunpack.c.l.s4 1966171168
    %v3368 = vunpack.c.0.s8 %v3367
    %v3369 = vlaneseq
    %v3370 = vshrl.u32 %v3369, 7
    %v3371 = vsub.s32 %v3368, %v3370
    %v3372 = vrot.slane %v3068, %v3371
    %v3373 = vcombine.low %v3253, %v3372
    %v3375 = vunpack.c.l.s4 1966171168
    %v3376 = vunpack.c.0.s8 %v3375
    %v3377 = vlaneseq
    %v3378 = vshrl.u32 %v3377, 7
    %v3379 = vsub.s32 %v3376, %v3378
    %v3380 = vrot.slane %v3373, %v3379
    %v3382 = vunpack.c.l.s4 1966171168
    %v3383 = vunpack.c.0.s8 %v3382
    %v3384 = vlaneseq
    %v3385 = vshrl.u32 %v3384, 7
    %v3386 = vsub.s32 %v3383, %v3385
    %v3387 = vrot.slane %v3092, %v3386
    %v3388 = vcombine.low %v3268, %v3387
    %v3390 = vunpack.c.l.s4 1966171168
    %v3391 = vunpack.c.0.s8 %v3390
    %v3392 = vlaneseq
    %v3393 = vshrl.u32 %v3392, 7
    %v3394 = vsub.s32 %v3391, %v3393
    %v3395 = vrot.slane %v3388, %v3394
    %v3397 = vunpack.c.l.s4 1966171168
    %v3398 = vunpack.c.0.s8 %v3397
    %v3399 = vlaneseq
    %v3400 = vshrl.u32 %v3399, 7
    %v3401 = vsub.s32 %v3398, %v3400
    %v3402 = vrot.slane %v3124, %v3401
    %v3403 = vcombine.low %v3283, %v3402
    %v3405 = vunpack.c.l.s4 1966171168
    %v3406 = vunpack.c.0.s8 %v3405
    %v3407 = vlaneseq
    %v3408 = vshrl.u32 %v3407, 7
    %v3409 = vsub.s32 %v3406, %v3408
    %v3410 = vrot.slane %v3403, %v3409
    %v3412 = vunpack.c.l.s4 1966171168
    %v3413 = vunpack.c.0.s8 %v3412
    %v3414 = vlaneseq
    %v3415 = vshrl.u32 %v3414, 7
    %v3416 = vsub.s32 %v3413, %v3415
    %v3417 = vrot.slane %v3142, %v3416
    %v3418 = vcombine.low %v3298, %v3417
    %v3420 = vunpack.c.l.s4 1966171168
    %v3421 = vunpack.c.0.s8 %v3420
    %v3422 = vlaneseq
    %v3423 = vshrl.u32 %v3422, 7
    %v3424 = vsub.s32 %v3421, %v3423
    %v3425 = vrot.slane %v3418, %v3424
    %v3427 = vunpack.c.l.s4 1966171168
    %v3428 = vunpack.c.0.s8 %v3427
    %v3429 = vlaneseq
    %v3430 = vshrl.u32 %v3429, 7
    %v3431 = vsub.s32 %v3428, %v3430
    %v3432 = vrot.slane %v3188, %v3431
    %v3433 = vcombine.low %v3313, %v3432
    %v3435 = vunpack.c.l.s4 1966171168
    %v3436 = vunpack.c.0.s8 %v3435
    %v3437 = vlaneseq
    %v3438 = vshrl.u32 %v3437, 7
    %v3439 = vsub.s32 %v3436, %v3438
    %v3440 = vrot.slane %v3433, %v3439
    %v3442 = vunpack.c.l.s4 1966171168
    %v3443 = vunpack.c.0.s8 %v3442
    %v3444 = vlaneseq
    %v3445 = vshrl.u32 %v3444, 7
    %v3446 = vsub.s32 %v3443, %v3445
    %v3447 = vrot.slane %v3187, %v3446
    %v3448 = vcombine.low %v3328, %v3447
    %v3450 = vunpack.c.l.s4 1966171168
    %v3451 = vunpack.c.0.s8 %v3450
    %v3452 = vlaneseq
    %v3453 = vshrl.u32 %v3452, 7
    %v3454 = vsub.s32 %v3451, %v3453
    %v3455 = vrot.slane %v3448, %v3454
    %v3457 = vshrl.u32 %v3350, 16
    %v3459 = vshll.u32 %v3350, 16
    %v3461 = vrot.slane %v3459, 1
    %v3462 = vor.u32 %v3457, %v3461
    %v3464 = vshrl.u32 %v3365, 16
    %v3466 = vshll.u32 %v3365, 16
    %v3468 = vrot.slane %v3466, 1
    %v3469 = vor.u32 %v3464, %v3468
    %v3471 = vshrl.u32 %v3380, 16
    %v3473 = vshll.u32 %v3380, 16
    %v3475 = vrot.slane %v3473, 1
    %v3476 = vor.u32 %v3471, %v3475
    %v3478 = vshrl.u32 %v3395, 16
    %v3480 = vshll.u32 %v3395, 16
    %v3482 = vrot.slane %v3480, 1
    %v3483 = vor.u32 %v3478, %v3482
    %v3485 = vshrl.u32 %v3410, 16
    %v3487 = vshll.u32 %v3410, 16
    %v3489 = vrot.slane %v3487, 1
    %v3490 = vor.u32 %v3485, %v3489
    %v3492 = vshrl.u32 %v3425, 16
    %v3494 = vshll.u32 %v3425, 16
    %v3496 = vrot.slane %v3494, 1
    %v3497 = vor.u32 %v3492, %v3496
    %v3499 = vshrl.u32 %v3440, 16
    %v3501 = vshll.u32 %v3440, 16
    %v3503 = vrot.slane %v3501, 1
    %v3504 = vor.u32 %v3499, %v3503
    %v3506 = vshrl.u32 %v3455, 16
    %v3508 = vshll.u32 %v3455, 16
    %v3510 = vrot.slane %v3508, 1
    %v3511 = vor.u32 %v3506, %v3510
    %v3512 = vcombine.low %v3033, %v3041
    %v3514 = vunpack.c.l.s4 1966171168
    %v3515 = vunpack.c.0.s8 %v3514
    %v3516 = vlaneseq
    %v3517 = vshrl.u32 %v3516, 7
    %v3518 = vsub.s32 %v3515, %v3517
    %v3519 = vrot.slane %v3512, %v3518
    %v3521 = vunpack.c.l.s4 1966171168
    %v3522 = vunpack.c.0.s8 %v3521
    %v3523 = vlaneseq
    %v3524 = vshrl.u32 %v3523, 7
    %v3525 = vsub.s32 %v3522, %v3524
    %v3526 = vrot.slane %v3519, %v3525
    %v3527 = vcombine.low %v3026, %v3040
    %v3529 = vunpack.c.l.s4 1966171168
    %v3530 = vunpack.c.0.s8 %v3529
    %v3531 = vlaneseq
    %v3532 = vshrl.u32 %v3531, 7
    %v3533 = vsub.s32 %v3530, %v3532
    %v3534 = vrot.slane %v3527, %v3533
    %v3536 = vunpack.c.l.s4 1966171168
    %v3537 = vunpack.c.0.s8 %v3536
    %v3538 = vlaneseq
    %v3539 = vshrl.u32 %v3538, 7
    %v3540 = vsub.s32 %v3537, %v3539
    %v3541 = vrot.slane %v3534, %v3540
    %v3542 = vcombine.low %v3044, %v3068
    %v3544 = vunpack.c.l.s4 1966171168
    %v3545 = vunpack.c.0.s8 %v3544
    %v3546 = vlaneseq
    %v3547 = vshrl.u32 %v3546, 7
    %v3548 = vsub.s32 %v3545, %v3547
    %v3549 = vrot.slane %v3542, %v3548
    %v3551 = vunpack.c.l.s4 1966171168
    %v3552 = vunpack.c.0.s8 %v3551
    %v3553 = vlaneseq
    %v3554 = vshrl.u32 %v3553, 7
    %v3555 = vsub.s32 %v3552, %v3554
    %v3556 = vrot.slane %v3549, %v3555
    %v3557 = vcombine.low %v3090, %v3092
    %v3559 = vunpack.c.l.s4 1966171168
    %v3560 = vunpack.c.0.s8 %v3559
    %v3561 = vlaneseq
    %v3562 = vshrl.u32 %v3561, 7
    %v3563 = vsub.s32 %v3560, %v3562
    %v3564 = vrot.slane %v3557, %v3563
    %v3566 = vunpack.c.l.s4 1966171168
    %v3567 = vunpack.c.0.s8 %v3566
    %v3568 = vlaneseq
    %v3569 = vshrl.u32 %v3568, 7
    %v3570 = vsub.s32 %v3567, %v3569
    %v3571 = vrot.slane %v3564, %v3570
    %v3572 = vcombine.low %v3141, %v3124
    %v3574 = vunpack.c.l.s4 1966171168
    %v3575 = vunpack.c.0.s8 %v3574
    %v3576 = vlaneseq
    %v3577 = vshrl.u32 %v3576, 7
    %v3578 = vsub.s32 %v3575, %v3577
    %v3579 = vrot.slane %v3572, %v3578
    %v3581 = vunpack.c.l.s4 1966171168
    %v3582 = vunpack.c.0.s8 %v3581
    %v3583 = vlaneseq
    %v3584 = vshrl.u32 %v3583, 7
    %v3585 = vsub.s32 %v3582, %v3584
    %v3586 = vrot.slane %v3579, %v3585
    %v3587 = vcombine.low %v3140, %v3142
    %v3589 = vunpack.c.l.s4 1966171168
    %v3590 = vunpack.c.0.s8 %v3589
    %v3591 = vlaneseq
    %v3592 = vshrl.u32 %v3591, 7
    %v3593 = vsub.s32 %v3590, %v3592
    %v3594 = vrot.slane %v3587, %v3593
    %v3596 = vunpack.c.l.s4 1966171168
    %v3597 = vunpack.c.0.s8 %v3596
    %v3598 = vlaneseq
    %v3599 = vshrl.u32 %v3598, 7
    %v3600 = vsub.s32 %v3597, %v3599
    %v3601 = vrot.slane %v3594, %v3600
    %v3602 = vcombine.low %v3180, %v3188
    %v3604 = vunpack.c.l.s4 1966171168
    %v3605 = vunpack.c.0.s8 %v3604
    %v3606 = vlaneseq
    %v3607 = vshrl.u32 %v3606, 7
    %v3608 = vsub.s32 %v3605, %v3607
    %v3609 = vrot.slane %v3602, %v3608
    %v3611 = vunpack.c.l.s4 1966171168
    %v3612 = vunpack.c.0.s8 %v3611
    %v3613 = vlaneseq
    %v3614 = vshrl.u32 %v3613, 7
    %v3615 = vsub.s32 %v3612, %v3614
    %v3616 = vrot.slane %v3609, %v3615
    %v3617 = vcombine.low %v3173, %v3187
    %v3619 = vunpack.c.l.s4 1966171168
    %v3620 = vunpack.c.0.s8 %v3619
    %v3621 = vlaneseq
    %v3622 = vshrl.u32 %v3621, 7
    %v3623 = vsub.s32 %v3620, %v3622
    %v3624 = vrot.slane %v3617, %v3623
    %v3626 = vunpack.c.l.s4 1966171168
    %v3627 = vunpack.c.0.s8 %v3626
    %v3628 = vlaneseq
    %v3629 = vshrl.u32 %v3628, 7
    %v3630 = vsub.s32 %v3627, %v3629
    %v3631 = vrot.slane %v3624, %v3630
    %v3632 = vcombine.low %v3230, %v3462
    %v3634 = vunpack.c.l.s4 1983009808
    %v3635 = vunpack.c.0.s8 %v3634
    %v3636 = vlaneseq
    %v3637 = vshrl.u32 %v3636, 7
    %v3638 = vsub.s32 %v3635, %v3637
    %v3639 = vrot.slane %v3632, %v3638
    %v3641 = vunpack.c.l.s4 1983009808
    %v3642 = vunpack.c.0.s8 %v3641
    %v3643 = vlaneseq
    %v3644 = vshrl.u32 %v3643, 7
    %v3645 = vsub.s32 %v3642, %v3644
    %v3646 = vrot.slane %v3526, %v3645
    %v3647 = vcombine.low %v3639, %v3646
    %v3648 = vcombine.low %v3245, %v3469
    %v3650 = vunpack.c.l.s4 1983009808
    %v3651 = vunpack.c.0.s8 %v3650
    %v3652 = vlaneseq
    %v3653 = vshrl.u32 %v3652, 7
    %v3654 = vsub.s32 %v3651, %v3653
    %v3655 = vrot.slane %v3648, %v3654
    %v3657 = vunpack.c.l.s4 1983009808
    %v3658 = vunpack.c.0.s8 %v3657
    %v3659 = vlaneseq
    %v3660 = vshrl.u32 %v3659, 7
    %v3661 = vsub.s32 %v3658, %v3660
    %v3662 = vrot.slane %v3541, %v3661
    %v3663 = vcombine.low %v3655, %v3662
    %v3664 = vcombine.low %v3260, %v3476
    %v3666 = vunpack.c.l.s4 1983009808
    %v3667 = vunpack.c.0.s8 %v3666
    %v3668 = vlaneseq
    %v3669 = vshrl.u32 %v3668, 7
    %v3670 = vsub.s32 %v3667, %v3669
    %v3671 = vrot.slane %v3664, %v3670
    %v3673 = vunpack.c.l.s4 1983009808
    %v3674 = vunpack.c.0.s8 %v3673
    %v3675 = vlaneseq
    %v3676 = vshrl.u32 %v3675, 7
    %v3677 = vsub.s32 %v3674, %v3676
    %v3678 = vrot.slane %v3556, %v3677
    %v3679 = vcombine.low %v3671, %v3678
    %v3680 = vcombine.low %v3275, %v3483
    %v3682 = vunpack.c.l.s4 1983009808
    %v3683 = vunpack.c.0.s8 %v3682
    %v3684 = vlaneseq
    %v3685 = vshrl.u32 %v3684, 7
    %v3686 = vsub.s32 %v3683, %v3685
    %v3687 = vrot.slane %v3680, %v3686
    %v3689 = vunpack.c.l.s4 1983009808
    %v3690 = vunpack.c.0.s8 %v3689
    %v3691 = vlaneseq
    %v3692 = vshrl.u32 %v3691, 7
    %v3693 = vsub.s32 %v3690, %v3692
    %v3694 = vrot.slane %v3571, %v3693
    %v3695 = vcombine.low %v3687, %v3694
    %v3696 = vcombine.low %v3290, %v3490
    %v3698 = vunpack.c.l.s4 1983009808
    %v3699 = vunpack.c.0.s8 %v3698
    %v3700 = vlaneseq
    %v3701 = vshrl.u32 %v3700, 7
    %v3702 = vsub.s32 %v3699, %v3701
    %v3703 = vrot.slane %v3696, %v3702
    %v3705 = vunpack.c.l.s4 1983009808
    %v3706 = vunpack.c.0.s8 %v3705
    %v3707 = vlaneseq
    %v3708 = vshrl.u32 %v3707, 7
    %v3709 = vsub.s32 %v3706, %v3708
    %v3710 = vrot.slane %v3586, %v3709
    %v3711 = vcombine.low %v3703, %v3710
    %v3712 = vcombine.low %v3305, %v3497
    %v3714 = vunpack.c.l.s4 1983009808
    %v3715 = vunpack.c.0.s8 %v3714
    %v3716 = vlaneseq
    %v3717 = vshrl.u32 %v3716, 7
    %v3718 = vsub.s32 %v3715, %v3717
    %v3719 = vrot.slane %v3712, %v3718
    %v3721 = vunpack.c.l.s4 1983009808
    %v3722 = vunpack.c.0.s8 %v3721
    %v3723 = vlaneseq
    %v3724 = vshrl.u32 %v3723, 7
    %v3725 = vsub.s32 %v3722, %v3724
    %v3726 = vrot.slane %v3601, %v3725
    %v3727 = vcombine.low %v3719, %v3726
    %v3728 = vcombine.low %v3320, %v3504
    %v3730 = vunpack.c.l.s4 1983009808
    %v3731 = vunpack.c.0.s8 %v3730
    %v3732 = vlaneseq
    %v3733 = vshrl.u32 %v3732, 7
    %v3734 = vsub.s32 %v3731, %v3733
    %v3735 = vrot.slane %v3728, %v3734
    %v3737 = vunpack.c.l.s4 1983009808
    %v3738 = vunpack.c.0.s8 %v3737
    %v3739 = vlaneseq
    %v3740 = vshrl.u32 %v3739, 7
    %v3741 = vsub.s32 %v3738, %v3740
    %v3742 = vrot.slane %v3616, %v3741
    %v3743 = vcombine.low %v3735, %v3742
    %v3744 = vcombine.low %v3335, %v3511
    %v3746 = vunpack.c.l.s4 1983009808
    %v3747 = vunpack.c.0.s8 %v3746
    %v3748 = vlaneseq
    %v3749 = vshrl.u32 %v3748, 7
    %v3750 = vsub.s32 %v3747, %v3749
    %v3751 = vrot.slane %v3744, %v3750
    %v3753 = vunpack.c.l.s4 1983009808
    %v3754 = vunpack.c.0.s8 %v3753
    %v3755 = vlaneseq
    %v3756 = vshrl.u32 %v3755, 7
    %v3757 = vsub.s32 %v3754, %v3756
    %v3758 = vrot.slane %v3631, %v3757
    %v3759 = vcombine.low %v3751, %v3758
    %v3760 = vld [vmem:[#allocation11] sm:$0xf]
    %v3761 = vld [vmem:[#allocation11 + $0x4] sm:$0xf]
    %v3762 = vld [vmem:[#allocation11 + $0x8] sm:$0xf]
    %v3763 = vld [vmem:[#allocation11 + $0xc] sm:$0xf]
    %v3764 = vld [vmem:[#allocation11 + $0x10] sm:$0xf]
    %v3765 = vld [vmem:[#allocation11 + $0x14] sm:$0xf]
    %v3766 = vld [vmem:[#allocation11 + $0x18] sm:$0xf]
    %v3767 = vld [vmem:[#allocation11 + $0x1c] sm:$0xf]
    %v3768 = vld [vmem:[#allocation11 + $0x20] sm:$0xf]
    %v3769 = vld [vmem:[#allocation11 + $0x24] sm:$0xf]
    %v3770 = vld [vmem:[#allocation11 + $0x28] sm:$0xf]
    %v3771 = vld [vmem:[#allocation11 + $0x2c] sm:$0xf]
    %v3772 = vld [vmem:[#allocation11 + $0x30] sm:$0xf]
    %v3773 = vld [vmem:[#allocation11 + $0x34] sm:$0xf]
    %v3774 = vld [vmem:[#allocation11 + $0x38] sm:$0xf]
    %v3775 = vld [vmem:[#allocation11 + $0x3c] sm:$0xf]
    %v3776 = vld [vmem:[#allocation11 + $0x40] sm:$0xf]
    %v3777 = vld [vmem:[#allocation11 + $0x44] sm:$0xf]
    %v3778 = vld [vmem:[#allocation11 + $0x48] sm:$0xf]
    %v3779 = vld [vmem:[#allocation11 + $0x4c] sm:$0xf]
    %v3780 = vld [vmem:[#allocation11 + $0x50] sm:$0xf]
    %v3781 = vld [vmem:[#allocation11 + $0x54] sm:$0xf]
    %v3782 = vld [vmem:[#allocation11 + $0x58] sm:$0xf]
    %v3783 = vld [vmem:[#allocation11 + $0x5c] sm:$0xf]
    %v3784 = vld [vmem:[#allocation11 + $0x60] sm:$0xf]
    %v3785 = vld [vmem:[#allocation11 + $0x64] sm:$0xf]
    %v3786 = vld [vmem:[#allocation11 + $0x68] sm:$0xf]
    %v3787 = vld [vmem:[#allocation11 + $0x6c] sm:$0xf]
    %v3788 = vld [vmem:[#allocation11 + $0x70] sm:$0xf]
    %v3789 = vld [vmem:[#allocation11 + $0x74] sm:$0xf]
    %v3790 = vld [vmem:[#allocation11 + $0x78] sm:$0xf]
    %v3791 = vld [vmem:[#allocation11 + $0x7c] sm:$0xf]
    %v3792 = vld [vmem:[#allocation11 + $0x80] sm:$0xf]
    %v3793 = vld [vmem:[#allocation11 + $0x84] sm:$0xf]
    %v3794 = vld [vmem:[#allocation11 + $0x88] sm:$0xf]
    %v3795 = vld [vmem:[#allocation11 + $0x8c] sm:$0xf]
    %v3796 = vld [vmem:[#allocation11 + $0x90] sm:$0xf]
    %v3797 = vld [vmem:[#allocation11 + $0x94] sm:$0xf]
    %v3798 = vld [vmem:[#allocation11 + $0x98] sm:$0xf]
    %v3799 = vld [vmem:[#allocation11 + $0x9c] sm:$0xf]
    %v3800 = vld [vmem:[#allocation11 + $0xa0] sm:$0xf]
    %v3801 = vld [vmem:[#allocation11 + $0xa4] sm:$0xf]
    %v3802 = vld [vmem:[#allocation11 + $0xa8] sm:$0xf]
    %v3803 = vld [vmem:[#allocation11 + $0xac] sm:$0xf]
    %v3804 = vld [vmem:[#allocation11 + $0xb0] sm:$0xf]
    %v3805 = vld [vmem:[#allocation11 + $0xb4] sm:$0xf]
    %v3806 = vld [vmem:[#allocation11 + $0xb8] sm:$0xf]
    %v3807 = vld [vmem:[#allocation11 + $0xbc] sm:$0xf]
    %v3808 = vcombine.low %v3075, %v3089
    %v3810 = vunpack.c.l.s4 1966171168
    %v3811 = vunpack.c.0.s8 %v3810
    %v3812 = vlaneseq
    %v3813 = vshrl.u32 %v3812, 7
    %v3814 = vsub.s32 %v3811, %v3813
    %v3815 = vrot.slane %v3808, %v3814
    %v3817 = vunpack.c.l.s4 1966171168
    %v3818 = vunpack.c.0.s8 %v3817
    %v3819 = vlaneseq
    %v3820 = vshrl.u32 %v3819, 7
    %v3821 = vsub.s32 %v3818, %v3820
    %v3822 = vrot.slane %v3815, %v3821
    %v3823 = vcombine.low %v3189, %v3191
    %v3825 = vunpack.c.l.s4 1966171168
    %v3826 = vunpack.c.0.s8 %v3825
    %v3827 = vlaneseq
    %v3828 = vshrl.u32 %v3827, 7
    %v3829 = vsub.s32 %v3826, %v3828
    %v3830 = vrot.slane %v3823, %v3829
    %v3832 = vunpack.c.l.s4 1966171168
    %v3833 = vunpack.c.0.s8 %v3832
    %v3834 = vlaneseq
    %v3835 = vshrl.u32 %v3834, 7
    %v3836 = vsub.s32 %v3833, %v3835
    %v3837 = vrot.slane %v3830, %v3836
    %v3839 = vunpack.c.l.s4 1966171168
    %v3840 = vunpack.c.0.s8 %v3839
    %v3841 = vlaneseq
    %v3842 = vshrl.u32 %v3841, 7
    %v3843 = vsub.s32 %v3840, %v3842
    %v3844 = vrot.slane %v3091, %v3843
    %v3845 = vcombine.low %v3815, %v3844
    %v3847 = vunpack.c.l.s4 1966171168
    %v3848 = vunpack.c.0.s8 %v3847
    %v3849 = vlaneseq
    %v3850 = vshrl.u32 %v3849, 7
    %v3851 = vsub.s32 %v3848, %v3850
    %v3852 = vrot.slane %v3845, %v3851
    %v3854 = vunpack.c.l.s4 1966171168
    %v3855 = vunpack.c.0.s8 %v3854
    %v3856 = vlaneseq
    %v3857 = vshrl.u32 %v3856, 7
    %v3858 = vsub.s32 %v3855, %v3857
    %v3859 = vrot.slane %v3206, %v3858
    %v3860 = vcombine.low %v3830, %v3859
    %v3862 = vunpack.c.l.s4 1966171168
    %v3863 = vunpack.c.0.s8 %v3862
    %v3864 = vlaneseq
    %v3865 = vshrl.u32 %v3864, 7
    %v3866 = vsub.s32 %v3863, %v3865
    %v3867 = vrot.slane %v3860, %v3866
    %v3869 = vshrl.u32 %v3852, 16
    %v3871 = vshll.u32 %v3852, 16
    %v3873 = vrot.slane %v3871, 1
    %v3874 = vor.u32 %v3869, %v3873
    %v3876 = vshrl.u32 %v3867, 16
    %v3878 = vshll.u32 %v3867, 16
    %v3880 = vrot.slane %v3878, 1
    %v3881 = vor.u32 %v3876, %v3880
    %v3882 = vcombine.low %v3089, %v3091
    %v3884 = vunpack.c.l.s4 1966171168
    %v3885 = vunpack.c.0.s8 %v3884
    %v3886 = vlaneseq
    %v3887 = vshrl.u32 %v3886, 7
    %v3888 = vsub.s32 %v3885, %v3887
    %v3889 = vrot.slane %v3882, %v3888
    %v3891 = vunpack.c.l.s4 1966171168
    %v3892 = vunpack.c.0.s8 %v3891
    %v3893 = vlaneseq
    %v3894 = vshrl.u32 %v3893, 7
    %v3895 = vsub.s32 %v3892, %v3894
    %v3896 = vrot.slane %v3889, %v3895
    %v3897 = vcombine.low %v3191, %v3206
    %v3899 = vunpack.c.l.s4 1966171168
    %v3900 = vunpack.c.0.s8 %v3899
    %v3901 = vlaneseq
    %v3902 = vshrl.u32 %v3901, 7
    %v3903 = vsub.s32 %v3900, %v3902
    %v3904 = vrot.slane %v3897, %v3903
    %v3906 = vunpack.c.l.s4 1966171168
    %v3907 = vunpack.c.0.s8 %v3906
    %v3908 = vlaneseq
    %v3909 = vshrl.u32 %v3908, 7
    %v3910 = vsub.s32 %v3907, %v3909
    %v3911 = vrot.slane %v3904, %v3910
    %v3912 = vcombine.low %v3822, %v3874
    %v3914 = vunpack.c.l.s4 1983009808
    %v3915 = vunpack.c.0.s8 %v3914
    %v3916 = vlaneseq
    %v3917 = vshrl.u32 %v3916, 7
    %v3918 = vsub.s32 %v3915, %v3917
    %v3919 = vrot.slane %v3912, %v3918
    %v3921 = vunpack.c.l.s4 1983009808
    %v3922 = vunpack.c.0.s8 %v3921
    %v3923 = vlaneseq
    %v3924 = vshrl.u32 %v3923, 7
    %v3925 = vsub.s32 %v3922, %v3924
    %v3926 = vrot.slane %v3896, %v3925
    %v3927 = vcombine.low %v3919, %v3926
    %v3928 = vcombine.low %v3837, %v3881
    %v3930 = vunpack.c.l.s4 1983009808
    %v3931 = vunpack.c.0.s8 %v3930
    %v3932 = vlaneseq
    %v3933 = vshrl.u32 %v3932, 7
    %v3934 = vsub.s32 %v3931, %v3933
    %v3935 = vrot.slane %v3928, %v3934
    %v3937 = vunpack.c.l.s4 1983009808
    %v3938 = vunpack.c.0.s8 %v3937
    %v3939 = vlaneseq
    %v3940 = vshrl.u32 %v3939, 7
    %v3941 = vsub.s32 %v3938, %v3940
    %v3942 = vrot.slane %v3911, %v3941
    %v3943 = vcombine.low %v3935, %v3942
    %s3944 = scalar_lea.vmem [#allocation11], 192
    %v3945 = vld [vmem:[%s3944] sm:$0xf]
    %v3946 = vld [vmem:[%s3944 + $0x4] sm:$0xf]
    %v3947 = vld [vmem:[%s3944 + $0x8] sm:$0xf]
    %v3948 = vld [vmem:[%s3944 + $0xc] sm:$0xf]
    %v3949 = vld [vmem:[%s3944 + $0x10] sm:$0xf]
    %v3950 = vld [vmem:[%s3944 + $0x14] sm:$0xf]
    %v3951 = vld [vmem:[%s3944 + $0x18] sm:$0xf]
    %v3952 = vld [vmem:[%s3944 + $0x1c] sm:$0xf]
    %v3953 = vld [vmem:[%s3944 + $0x20] sm:$0xf]
    %v3954 = vld [vmem:[%s3944 + $0x24] sm:$0xf]
    %v3955 = vld [vmem:[%s3944 + $0x28] sm:$0xf]
    %v3956 = vld [vmem:[%s3944 + $0x2c] sm:$0xf]
    %v3957 = vld [vmem:[%s3944 + $0x30] sm:$0xf]
    %v3958 = vld [vmem:[%s3944 + $0x34] sm:$0xf]
    %v3959 = vld [vmem:[%s3944 + $0x38] sm:$0xf]
    %v3960 = vld [vmem:[%s3944 + $0x3c] sm:$0xf]
    %v3961 = vld [vmem:[%s3944 + $0x40] sm:$0xf]
    %v3962 = vld [vmem:[%s3944 + $0x44] sm:$0xf]
    %v3963 = vld [vmem:[%s3944 + $0x48] sm:$0xf]
    %v3964 = vld [vmem:[%s3944 + $0x4c] sm:$0xf]
    %v3965 = vld [vmem:[%s3944 + $0x50] sm:$0xf]
    %v3966 = vld [vmem:[%s3944 + $0x54] sm:$0xf]
    %v3967 = vld [vmem:[%s3944 + $0x58] sm:$0xf]
    %v3968 = vld [vmem:[%s3944 + $0x5c] sm:$0xf]
    %v3969 = vld [vmem:[%s3944 + $0x60] sm:$0xf]
    %v3970 = vld [vmem:[%s3944 + $0x64] sm:$0xf]
    %v3971 = vld [vmem:[%s3944 + $0x68] sm:$0xf]
    %v3972 = vld [vmem:[%s3944 + $0x6c] sm:$0xf]
    %v3973 = vld [vmem:[%s3944 + $0x70] sm:$0xf]
    %v3974 = vld [vmem:[%s3944 + $0x74] sm:$0xf]
    %v3975 = vld [vmem:[%s3944 + $0x78] sm:$0xf]
    %v3976 = vld [vmem:[%s3944 + $0x7c] sm:$0xf]
    %v3977 = vld [vmem:[%s3944 + $0x80] sm:$0xf]
    %v3978 = vld [vmem:[%s3944 + $0x84] sm:$0xf]
    %v3979 = vld [vmem:[%s3944 + $0x88] sm:$0xf]
    %v3980 = vld [vmem:[%s3944 + $0x8c] sm:$0xf]
    %v3981 = vld [vmem:[%s3944 + $0x90] sm:$0xf]
    %v3982 = vld [vmem:[%s3944 + $0x94] sm:$0xf]
    %v3983 = vld [vmem:[%s3944 + $0x98] sm:$0xf]
    %v3984 = vld [vmem:[%s3944 + $0x9c] sm:$0xf]
    %v3985 = vld [vmem:[%s3944 + $0xa0] sm:$0xf]
    %v3986 = vld [vmem:[%s3944 + $0xa4] sm:$0xf]
    %v3987 = vld [vmem:[%s3944 + $0xa8] sm:$0xf]
    %v3988 = vld [vmem:[%s3944 + $0xac] sm:$0xf]
    %v3989 = vld [vmem:[%s3944 + $0xb0] sm:$0xf]
    %v3990 = vld [vmem:[%s3944 + $0xb4] sm:$0xf]
    %v3991 = vld [vmem:[%s3944 + $0xb8] sm:$0xf]
    %v3992 = vld [vmem:[%s3944 + $0xbc] sm:$0xf]
    %v3993 = vcombine.low %v3663, %v3679
    %v3994 = vcombine.high %v3663, %v3679
    %v3995 = vcombine.low %v3695, %v3927
    %v3996 = vcombine.high %v3695, %v3927
    %v3998 = vunpack.c.l.s4 1983009808
    %v3999 = vunpack.c.0.s8 %v3998
    %v4000 = vlaneseq
    %v4001 = vshrl.u32 %v4000, 7
    %v4002 = vsub.s32 %v3999, %v4001
    %v4003 = vrot.slane %v3993, %v4002
    %v4005 = vunpack.c.l.s4 1983009808
    %v4006 = vunpack.c.0.s8 %v4005
    %v4007 = vlaneseq
    %v4008 = vshrl.u32 %v4007, 7
    %v4009 = vsub.s32 %v4006, %v4008
    %v4010 = vrot.slane %v3994, %v4009
    %v4012 = vunpack.c.l.s4 1983009808
    %v4013 = vunpack.c.0.s8 %v4012
    %v4014 = vlaneseq
    %v4015 = vshrl.u32 %v4014, 7
    %v4016 = vsub.s32 %v4013, %v4015
    %v4017 = vrot.slane %v3995, %v4016
    %v4019 = vunpack.c.l.s4 1983009808
    %v4020 = vunpack.c.0.s8 %v4019
    %v4021 = vlaneseq
    %v4022 = vshrl.u32 %v4021, 7
    %v4023 = vsub.s32 %v4020, %v4022
    %v4024 = vrot.slane %v3996, %v4023
    %v4025 = vcombine.low %v4003, %v4017
    %v4026 = vcombine.high %v4003, %v4017
    %v4027 = vcombine.low %v4010, %v4024
    %v4028 = vcombine.low %v3727, %v3743
    %v4029 = vcombine.high %v3727, %v3743
    %v4030 = vcombine.low %v3759, %v3943
    %v4031 = vcombine.high %v3759, %v3943
    %v4033 = vunpack.c.l.s4 1983009808
    %v4034 = vunpack.c.0.s8 %v4033
    %v4035 = vlaneseq
    %v4036 = vshrl.u32 %v4035, 7
    %v4037 = vsub.s32 %v4034, %v4036
    %v4038 = vrot.slane %v4028, %v4037
    %v4040 = vunpack.c.l.s4 1983009808
    %v4041 = vunpack.c.0.s8 %v4040
    %v4042 = vlaneseq
    %v4043 = vshrl.u32 %v4042, 7
    %v4044 = vsub.s32 %v4041, %v4043
    %v4045 = vrot.slane %v4029, %v4044
    %v4047 = vunpack.c.l.s4 1983009808
    %v4048 = vunpack.c.0.s8 %v4047
    %v4049 = vlaneseq
    %v4050 = vshrl.u32 %v4049, 7
    %v4051 = vsub.s32 %v4048, %v4050
    %v4052 = vrot.slane %v4030, %v4051
    %v4054 = vunpack.c.l.s4 1983009808
    %v4055 = vunpack.c.0.s8 %v4054
    %v4056 = vlaneseq
    %v4057 = vshrl.u32 %v4056, 7
    %v4058 = vsub.s32 %v4055, %v4057
    %v4059 = vrot.slane %v4031, %v4058
    %v4060 = vcombine.low %v4038, %v4052
    %v4061 = vcombine.high %v4038, %v4052
    %v4062 = vcombine.low %v4045, %v4059
    %v4117 = vunpack.c.l.b16 %v3945
    %v4118 = vunpack.c.l.b16 %v3946
    %v4119 = vunpack.c.l.b16 %v3947
    %v4120 = vunpack.c.l.b16 %v3948
    %v4121 = vunpack.c.l.b16 %v3949
    %v4122 = vunpack.c.l.b16 %v3950
    %v4123 = vunpack.c.l.b16 %v3951
    %v4124 = vunpack.c.l.b16 %v3952
    %v4125 = vunpack.c.l.b16 %v3953
    %v4126 = vunpack.c.l.b16 %v3954
    %v4127 = vunpack.c.l.b16 %v3955
    %v4128 = vunpack.c.l.b16 %v3956
    %v4129 = vunpack.c.l.b16 %v3957
    %v4130 = vunpack.c.l.b16 %v3958
    %v4131 = vunpack.c.l.b16 %v3959
    %v4132 = vunpack.c.l.b16 %v3960
    %v4133 = vunpack.c.l.b16 %v3961
    %v4134 = vunpack.c.l.b16 %v3962
    %v4135 = vunpack.c.l.b16 %v3963
    %v4136 = vunpack.c.l.b16 %v3964
    %v4137 = vunpack.c.l.b16 %v3965
    %v4138 = vunpack.c.l.b16 %v3966
    %v4139 = vunpack.c.l.b16 %v3967
    %v4140 = vunpack.c.l.b16 %v3968
    %v4141 = vunpack.c.l.b16 %v3969
    %v4142 = vunpack.c.l.b16 %v3970
    %v4143 = vunpack.c.l.b16 %v3971
    %v4144 = vunpack.c.l.b16 %v3972
    %v4145 = vunpack.c.l.b16 %v3973
    %v4146 = vunpack.c.l.b16 %v3974
    %v4147 = vunpack.c.l.b16 %v3975
    %v4148 = vunpack.c.l.b16 %v3976
    %v4149 = vunpack.c.l.b16 %v3977
    %v4150 = vunpack.c.l.b16 %v3978
    %v4151 = vunpack.c.l.b16 %v3979
    %v4152 = vunpack.c.l.b16 %v3980
    %v4153 = vunpack.c.l.b16 %v3981
    %v4154 = vunpack.c.l.b16 %v3982
    %v4155 = vunpack.c.l.b16 %v3983
    %v4156 = vunpack.c.l.b16 %v3984
    %v4157 = vunpack.c.l.b16 %v3985
    %v4158 = vunpack.c.l.b16 %v3986
    %v4159 = vunpack.c.l.b16 %v3987
    %v4160 = vunpack.c.l.b16 %v3988
    %v4161 = vunpack.c.l.b16 %v3989
    %v4162 = vunpack.c.l.b16 %v3990
    %v4163 = vunpack.c.l.b16 %v3991
    %v4164 = vunpack.c.l.b16 %v3992
    %v4165 = vpack.c.b16 %v4118, %v4117
    %v4166 = vpack.c.b16 %v4120, %v4119
    %v4167 = vpack.c.b16 %v4122, %v4121
    %v4168 = vpack.c.b16 %v4124, %v4123
    %v4169 = vpack.c.b16 %v4126, %v4125
    %v4170 = vpack.c.b16 %v4128, %v4127
    %v4171 = vpack.c.b16 %v4130, %v4129
    %v4172 = vpack.c.b16 %v4132, %v4131
    %v4173 = vpack.c.b16 %v4134, %v4133
    %v4174 = vpack.c.b16 %v4136, %v4135
    %v4175 = vpack.c.b16 %v4138, %v4137
    %v4176 = vpack.c.b16 %v4140, %v4139
    %v4177 = vpack.c.b16 %v4142, %v4141
    %v4178 = vpack.c.b16 %v4144, %v4143
    %v4179 = vpack.c.b16 %v4146, %v4145
    %v4180 = vpack.c.b16 %v4148, %v4147
    %v4181 = vpack.c.b16 %v4150, %v4149
    %v4182 = vpack.c.b16 %v4152, %v4151
    %v4183 = vpack.c.b16 %v4154, %v4153
    %v4184 = vpack.c.b16 %v4156, %v4155
    %v4185 = vpack.c.b16 %v4158, %v4157
    %v4186 = vpack.c.b16 %v4160, %v4159
    %v4187 = vpack.c.b16 %v4162, %v4161
    %v4188 = vpack.c.b16 %v4164, %v4163
    %4213 = vmatprep.subr.bf16.mxu0 0
    %4214 = vmatpush1.bf16.msra.mxu0 %v4165
    %4215 = vmatprep.subr.bf16.mxu0 0
    %4216 = vmatpush1.bf16.msra.mxu0 %v4166
    %4217 = vmatprep.subr.bf16.mxu0 0
    %4218 = vmatpush1.bf16.msra.mxu0 %v4167
    %4219 = vmatprep.subr.bf16.mxu0 0
    %4220 = vmatpush1.bf16.msra.mxu0 %v4168
    %4221 = vmatprep.subr.bf16.mxu0 0
    %4222 = vmatpush1.bf16.msra.mxu0 %v4169
    %4223 = vmatprep.subr.bf16.mxu0 0
    %4224 = vmatpush1.bf16.msra.mxu0 %v4170
    %4225 = vmatprep.subr.bf16.mxu0 0
    %4226 = vmatpush1.bf16.msra.mxu0 %v4171
    %4227 = vmatprep.subr.bf16.mxu0 0
    %4228 = vmatpush1.bf16.msra.mxu0 %v4172
    %4229 = vmatprep.subr.bf16.mxu0 0
    %4230 = vmatpush1.bf16.msra.mxu0 %v4173
    %4231 = vmatprep.subr.bf16.mxu0 0
    %4232 = vmatpush1.bf16.msra.mxu0 %v4174
    %4233 = vmatprep.subr.bf16.mxu0 0
    %4234 = vmatpush1.bf16.msra.mxu0 %v4175
    %4235 = vmatprep.subr.bf16.mxu0 0
    %4236 = vmatpush1.bf16.msra.mxu0 %v4176
    %4237 = vmatprep.subr.bf16.mxu0 0
    %4238 = vmatpush1.bf16.msra.mxu0 %v4177
    %4239 = vmatprep.subr.bf16.mxu0 0
    %4240 = vmatpush1.bf16.msra.mxu0 %v4178
    %4241 = vmatprep.subr.bf16.mxu0 0
    %4242 = vmatpush1.bf16.msra.mxu0 %v4179
    %4243 = vmatprep.subr.bf16.mxu0 0
    %4244 = vmatpush1.bf16.msra.mxu0 %v4180
    %4245 = vmatprep.mubr.bf16.mxu0 %v4026
    %4246 = vmatmul.mubr.bf16.gmra.mrb[0].mxu0 %v4025
    %v4247 = vpop.f32.mrb[0].mxu0
    %v4248 = vadd.f32 0.0, %v4247
    %v4249 = vpop.f32.mrb[0].mxu0
    %v4250 = vpop.f32.mrb[0].mxu0
    %v4251 = vadd.f32 0.0, %v4250
    %v4252 = vpop.f32.mrb[0].mxu0
    %4253 = vmatprep.mubr.bf16.mxu0 %v4061
    %4254 = vmatmul.mubr.bf16.gmra.mrb[0].mxu0 %v4060
    %v4255 = vpop.f32.mrb[0].mxu0
    %v4256 = vadd.f32 0.0, %v4255
    %v4257 = vpop.f32.mrb[0].mxu0
    %v4258 = vpop.f32.mrb[0].mxu0
    %v4259 = vadd.f32 0.0, %v4258
    %v4260 = vpop.f32.mrb[0].mxu0
    %4261 = vdwg.mxu0
    %4262 = vmatprep.subr.bf16.mxu0 0
    %4263 = vmatpush1.bf16.msra.mxu0 %v4181
    %4264 = vmatprep.subr.bf16.mxu0 0
    %4265 = vmatpush1.bf16.msra.mxu0 %v4182
    %4266 = vmatprep.subr.bf16.mxu0 0
    %4267 = vmatpush1.bf16.msra.mxu0 %v4183
    %4268 = vmatprep.subr.bf16.mxu0 0
    %4269 = vmatpush1.bf16.msra.mxu0 %v4184
    %4270 = vmatprep.subr.bf16.mxu0 0
    %4271 = vmatpush1.bf16.msra.mxu0 %v4185
    %4272 = vmatprep.subr.bf16.mxu0 0
    %4273 = vmatpush1.bf16.msra.mxu0 %v4186
    %4274 = vmatprep.subr.bf16.mxu0 0
    %4275 = vmatpush1.bf16.msra.mxu0 %v4187
    %4276 = vmatprep.subr.bf16.mxu0 0
    %4277 = vmatpush1.bf16.msra.mxu0 %v4188
    %4278 = vmatprep.subr.bf16.mxu0 0
    %4279 = vmatpush1.bf16.msra.mxu0 0
    %4280 = vmatprep.subr.bf16.mxu0 0
    %4281 = vmatpush1.bf16.msra.mxu0 0
    %4282 = vmatprep.subr.bf16.mxu0 0
    %4283 = vmatpush1.bf16.msra.mxu0 0
    %4284 = vmatprep.subr.bf16.mxu0 0
    %4285 = vmatpush1.bf16.msra.mxu0 0
    %4286 = vmatprep.subr.bf16.mxu0 0
    %4287 = vmatpush1.bf16.msra.mxu0 0
    %4288 = vmatprep.subr.bf16.mxu0 0
    %4289 = vmatpush1.bf16.msra.mxu0 0
    %4290 = vmatprep.subr.bf16.mxu0 0
    %4291 = vmatpush1.bf16.msra.mxu0 0
    %4292 = vmatprep.subr.bf16.mxu0 0
    %4293 = vmatpush1.bf16.msra.mxu0 0
    %4294 = vmatprep.mubr.bf16.mxu0 0
    %4295 = vmatmul.mubr.bf16.gmra.mrb[0].mxu0 %v4027
    %v4296 = vpop.f32.mrb[0].mxu0
    %v4297 = vadd.f32 %v4248, %v4296
    %v4298 = vpop.f32.mrb[0].mxu0
    %v4299 = vpop.f32.mrb[0].mxu0
    %v4300 = vadd.f32 %v4251, %v4299
    %v4301 = vpop.f32.mrb[0].mxu0
    %4302 = vmatprep.mubr.bf16.mxu0 0
    %4303 = vmatmul.mubr.bf16.gmra.mrb[0].mxu0 %v4062
    %v4304 = vpop.f32.mrb[0].mxu0
    %v4305 = vadd.f32 %v4256, %v4304
    %v4306 = vpop.f32.mrb[0].mxu0
    %v4307 = vpop.f32.mrb[0].mxu0
    %v4308 = vadd.f32 %v4259, %v4307
    %v4309 = vpop.f32.mrb[0].mxu0
    %4310 = vdwg.mxu0
    %v4311 = vcombine.low %v3647, %v3663
    %v4312 = vcombine.high %v3647, %v3663
    %v4313 = vcombine.low %v3679, %v3695
    %v4314 = vcombine.high %v3679, %v3695
    %v4316 = vunpack.c.l.s4 1983009808
    %v4317 = vunpack.c.0.s8 %v4316
    %v4318 = vlaneseq
    %v4319 = vshrl.u32 %v4318, 7
    %v4320 = vsub.s32 %v4317, %v4319
    %v4321 = vrot.slane %v4311, %v4320
    %v4323 = vunpack.c.l.s4 1983009808
    %v4324 = vunpack.c.0.s8 %v4323
    %v4325 = vlaneseq
    %v4326 = vshrl.u32 %v4325, 7
    %v4327 = vsub.s32 %v4324, %v4326
    %v4328 = vrot.slane %v4312, %v4327
    %v4330 = vunpack.c.l.s4 1983009808
    %v4331 = vunpack.c.0.s8 %v4330
    %v4332 = vlaneseq
    %v4333 = vshrl.u32 %v4332, 7
    %v4334 = vsub.s32 %v4331, %v4333
    %v4335 = vrot.slane %v4313, %v4334
    %v4337 = vunpack.c.l.s4 1983009808
    %v4338 = vunpack.c.0.s8 %v4337
    %v4339 = vlaneseq
    %v4340 = vshrl.u32 %v4339, 7
    %v4341 = vsub.s32 %v4338, %v4340
    %v4342 = vrot.slane %v4314, %v4341
    %v4343 = vcombine.low %v4321, %v4335
    %v4344 = vcombine.high %v4321, %v4335
    %v4345 = vcombine.low %v4328, %v4342
    %v4346 = vcombine.low %v3711, %v3727
    %v4347 = vcombine.high %v3711, %v3727
    %v4348 = vcombine.low %v3743, %v3759
    %v4349 = vcombine.high %v3743, %v3759
    %v4351 = vunpack.c.l.s4 1983009808
    %v4352 = vunpack.c.0.s8 %v4351
    %v4353 = vlaneseq
    %v4354 = vshrl.u32 %v4353, 7
    %v4355 = vsub.s32 %v4352, %v4354
    %v4356 = vrot.slane %v4346, %v4355
    %v4358 = vunpack.c.l.s4 1983009808
    %v4359 = vunpack.c.0.s8 %v4358
    %v4360 = vlaneseq
    %v4361 = vshrl.u32 %v4360, 7
    %v4362 = vsub.s32 %v4359, %v4361
    %v4363 = vrot.slane %v4347, %v4362
    %v4365 = vunpack.c.l.s4 1983009808
    %v4366 = vunpack.c.0.s8 %v4365
    %v4367 = vlaneseq
    %v4368 = vshrl.u32 %v4367, 7
    %v4369 = vsub.s32 %v4366, %v4368
    %v4370 = vrot.slane %v4348, %v4369
    %v4372 = vunpack.c.l.s4 1983009808
    %v4373 = vunpack.c.0.s8 %v4372
    %v4374 = vlaneseq
    %v4375 = vshrl.u32 %v4374, 7
    %v4376 = vsub.s32 %v4373, %v4375
    %v4377 = vrot.slane %v4349, %v4376
    %v4378 = vcombine.low %v4356, %v4370
    %v4379 = vcombine.high %v4356, %v4370
    %v4380 = vcombine.low %v4363, %v4377
    %v4435 = vunpack.c.l.b16 %v3760
    %v4436 = vunpack.c.l.b16 %v3761
    %v4437 = vunpack.c.l.b16 %v3762
    %v4438 = vunpack.c.l.b16 %v3763
    %v4439 = vunpack.c.l.b16 %v3764
    %v4440 = vunpack.c.l.b16 %v3765
    %v4441 = vunpack.c.l.b16 %v3766
    %v4442 = vunpack.c.l.b16 %v3767
    %v4443 = vunpack.c.l.b16 %v3768
    %v4444 = vunpack.c.l.b16 %v3769
    %v4445 = vunpack.c.l.b16 %v3770
    %v4446 = vunpack.c.l.b16 %v3771
    %v4447 = vunpack.c.l.b16 %v3772
    %v4448 = vunpack.c.l.b16 %v3773
    %v4449 = vunpack.c.l.b16 %v3774
    %v4450 = vunpack.c.l.b16 %v3775
    %v4451 = vunpack.c.l.b16 %v3776
    %v4452 = vunpack.c.l.b16 %v3777
    %v4453 = vunpack.c.l.b16 %v3778
    %v4454 = vunpack.c.l.b16 %v3779
    %v4455 = vunpack.c.l.b16 %v3780
    %v4456 = vunpack.c.l.b16 %v3781
    %v4457 = vunpack.c.l.b16 %v3782
    %v4458 = vunpack.c.l.b16 %v3783
    %v4459 = vunpack.c.l.b16 %v3784
    %v4460 = vunpack.c.l.b16 %v3785
    %v4461 = vunpack.c.l.b16 %v3786
    %v4462 = vunpack.c.l.b16 %v3787
    %v4463 = vunpack.c.l.b16 %v3788
    %v4464 = vunpack.c.l.b16 %v3789
    %v4465 = vunpack.c.l.b16 %v3790
    %v4466 = vunpack.c.l.b16 %v3791
    %v4467 = vunpack.c.l.b16 %v3792
    %v4468 = vunpack.c.l.b16 %v3793
    %v4469 = vunpack.c.l.b16 %v3794
    %v4470 = vunpack.c.l.b16 %v3795
    %v4471 = vunpack.c.l.b16 %v3796
    %v4472 = vunpack.c.l.b16 %v3797
    %v4473 = vunpack.c.l.b16 %v3798
    %v4474 = vunpack.c.l.b16 %v3799
    %v4475 = vunpack.c.l.b16 %v3800
    %v4476 = vunpack.c.l.b16 %v3801
    %v4477 = vunpack.c.l.b16 %v3802
    %v4478 = vunpack.c.l.b16 %v3803
    %v4479 = vunpack.c.l.b16 %v3804
    %v4480 = vunpack.c.l.b16 %v3805
    %v4481 = vunpack.c.l.b16 %v3806
    %v4482 = vunpack.c.l.b16 %v3807
    %v4483 = vpack.c.b16 %v4436, %v4435
    %v4484 = vpack.c.b16 %v4438, %v4437
    %v4485 = vpack.c.b16 %v4440, %v4439
    %v4486 = vpack.c.b16 %v4442, %v4441
    %v4487 = vpack.c.b16 %v4444, %v4443
    %v4488 = vpack.c.b16 %v4446, %v4445
    %v4489 = vpack.c.b16 %v4448, %v4447
    %v4490 = vpack.c.b16 %v4450, %v4449
    %v4491 = vpack.c.b16 %v4452, %v4451
    %v4492 = vpack.c.b16 %v4454, %v4453
    %v4493 = vpack.c.b16 %v4456, %v4455
    %v4494 = vpack.c.b16 %v4458, %v4457
    %v4495 = vpack.c.b16 %v4460, %v4459
    %v4496 = vpack.c.b16 %v4462, %v4461
    %v4497 = vpack.c.b16 %v4464, %v4463
    %v4498 = vpack.c.b16 %v4466, %v4465
    %v4499 = vpack.c.b16 %v4468, %v4467
    %v4500 = vpack.c.b16 %v4470, %v4469
    %v4501 = vpack.c.b16 %v4472, %v4471
    %v4502 = vpack.c.b16 %v4474, %v4473
    %v4503 = vpack.c.b16 %v4476, %v4475
    %v4504 = vpack.c.b16 %v4478, %v4477
    %v4505 = vpack.c.b16 %v4480, %v4479
    %v4506 = vpack.c.b16 %v4482, %v4481
    %4531 = vmatprep.subr.bf16.mxu0 0
    %4532 = vmatpush1.bf16.msra.mxu0 %v4483
    %4533 = vmatprep.subr.bf16.mxu0 0
    %4534 = vmatpush1.bf16.msra.mxu0 %v4484
    %4535 = vmatprep.subr.bf16.mxu0 0
    %4536 = vmatpush1.bf16.msra.mxu0 %v4485
    %4537 = vmatprep.subr.bf16.mxu0 0
    %4538 = vmatpush1.bf16.msra.mxu0 %v4486
    %4539 = vmatprep.subr.bf16.mxu0 0
    %4540 = vmatpush1.bf16.msra.mxu0 %v4487
    %4541 = vmatprep.subr.bf16.mxu0 0
    %4542 = vmatpush1.bf16.msra.mxu0 %v4488
    %4543 = vmatprep.subr.bf16.mxu0 0
    %4544 = vmatpush1.bf16.msra.mxu0 %v4489
    %4545 = vmatprep.subr.bf16.mxu0 0
    %4546 = vmatpush1.bf16.msra.mxu0 %v4490
    %4547 = vmatprep.subr.bf16.mxu0 0
    %4548 = vmatpush1.bf16.msra.mxu0 %v4491
    %4549 = vmatprep.subr.bf16.mxu0 0
    %4550 = vmatpush1.bf16.msra.mxu0 %v4492
    %4551 = vmatprep.subr.bf16.mxu0 0
    %4552 = vmatpush1.bf16.msra.mxu0 %v4493
    %4553 = vmatprep.subr.bf16.mxu0 0
    %4554 = vmatpush1.bf16.msra.mxu0 %v4494
    %4555 = vmatprep.subr.bf16.mxu0 0
    %4556 = vmatpush1.bf16.msra.mxu0 %v4495
    %4557 = vmatprep.subr.bf16.mxu0 0
    %4558 = vmatpush1.bf16.msra.mxu0 %v4496
    %4559 = vmatprep.subr.bf16.mxu0 0
    %4560 = vmatpush1.bf16.msra.mxu0 %v4497
    %4561 = vmatprep.subr.bf16.mxu0 0
    %4562 = vmatpush1.bf16.msra.mxu0 %v4498
    %4563 = vmatprep.mubr.bf16.mxu0 %v4344
    %4564 = vmatmul.mubr.bf16.gmra.mrb[0].mxu0 %v4343
    %v4565 = vpop.f32.mrb[0].mxu0
    %v4566 = vadd.f32 %v4297, %v4565
    %v4567 = vpop.f32.mrb[0].mxu0
    %v4568 = vpop.f32.mrb[0].mxu0
    %v4569 = vadd.f32 %v4300, %v4568
    %v4570 = vpop.f32.mrb[0].mxu0
    %4571 = vmatprep.mubr.bf16.mxu0 %v4379
    %4572 = vmatmul.mubr.bf16.gmra.mrb[0].mxu0 %v4378
    %v4573 = vpop.f32.mrb[0].mxu0
    %v4574 = vadd.f32 %v4305, %v4573
    %v4575 = vpop.f32.mrb[0].mxu0
    %v4576 = vpop.f32.mrb[0].mxu0
    %v4577 = vadd.f32 %v4308, %v4576
    %v4578 = vpop.f32.mrb[0].mxu0
    %4579 = vdwg.mxu0
    %4580 = vmatprep.subr.bf16.mxu0 0
    %4581 = vmatpush1.bf16.msra.mxu0 %v4499
    %4582 = vmatprep.subr.bf16.mxu0 0
    %4583 = vmatpush1.bf16.msra.mxu0 %v4500
    %4584 = vmatprep.subr.bf16.mxu0 0
    %4585 = vmatpush1.bf16.msra.mxu0 %v4501
    %4586 = vmatprep.subr.bf16.mxu0 0
    %4587 = vmatpush1.bf16.msra.mxu0 %v4502
    %4588 = vmatprep.subr.bf16.mxu0 0
    %4589 = vmatpush1.bf16.msra.mxu0 %v4503
    %4590 = vmatprep.subr.bf16.mxu0 0
    %4591 = vmatpush1.bf16.msra.mxu0 %v4504
    %4592 = vmatprep.subr.bf16.mxu0 0
    %4593 = vmatpush1.bf16.msra.mxu0 %v4505
    %4594 = vmatprep.subr.bf16.mxu0 0
    %4595 = vmatpush1.bf16.msra.mxu0 %v4506
    %4596 = vmatprep.subr.bf16.mxu0 0
    %4597 = vmatpush1.bf16.msra.mxu0 0
    %4598 = vmatprep.subr.bf16.mxu0 0
    %4599 = vmatpush1.bf16.msra.mxu0 0
    %4600 = vmatprep.subr.bf16.mxu0 0
    %4601 = vmatpush1.bf16.msra.mxu0 0
    %4602 = vmatprep.subr.bf16.mxu0 0
    %4603 = vmatpush1.bf16.msra.mxu0 0
    %4604 = vmatprep.subr.bf16.mxu0 0
    %4605 = vmatpush1.bf16.msra.mxu0 0
    %4606 = vmatprep.subr.bf16.mxu0 0
    %4607 = vmatpush1.bf16.msra.mxu0 0
    %4608 = vmatprep.subr.bf16.mxu0 0
    %4609 = vmatpush1.bf16.msra.mxu0 0
    %4610 = vmatprep.subr.bf16.mxu0 0
    %4611 = vmatpush1.bf16.msra.mxu0 0
    %4612 = vmatprep.mubr.bf16.mxu0 0
    %4613 = vmatmul.mubr.bf16.gmra.mrb[0].mxu0 %v4345
    %v4614 = vpop.f32.mrb[0].mxu0
    %v4615 = vadd.f32 %v4566, %v4614
    %v4616 = vpop.f32.mrb[0].mxu0
    %v4617 = vpop.f32.mrb[0].mxu0
    %v4618 = vadd.f32 %v4569, %v4617
    %v4619 = vpop.f32.mrb[0].mxu0
    %4620 = vmatprep.mubr.bf16.mxu0 0
    %4621 = vmatmul.mubr.bf16.gmra.mrb[0].mxu0 %v4380
    %v4622 = vpop.f32.mrb[0].mxu0
    %v4623 = vadd.f32 %v4574, %v4622
    %v4624 = vpop.f32.mrb[0].mxu0
    %v4625 = vpop.f32.mrb[0].mxu0
    %v4626 = vadd.f32 %v4577, %v4625
    %v4627 = vpop.f32.mrb[0].mxu0
    %4628 = vdwg.mxu0
    %v4629 = vcombine.low %v3093, %v3117
    %v4631 = vunpack.c.l.s4 1966171168
    %v4632 = vunpack.c.0.s8 %v4631
    %v4633 = vlaneseq
    %v4634 = vshrl.u32 %v4633, 7
    %v4635 = vsub.s32 %v4632, %v4634
    %v4636 = vrot.slane %v4629, %v4635
    %v4638 = vunpack.c.l.s4 1966171168
    %v4639 = vunpack.c.0.s8 %v4638
    %v4640 = vlaneseq
    %v4641 = vshrl.u32 %v4640, 7
    %v4642 = vsub.s32 %v4639, %v4641
    %v4643 = vrot.slane %v4636, %v4642
    %v4644 = vcombine.low %v3213, %v3214
    %v4646 = vunpack.c.l.s4 1966171168
    %v4647 = vunpack.c.0.s8 %v4646
    %v4648 = vlaneseq
    %v4649 = vshrl.u32 %v4648, 7
    %v4650 = vsub.s32 %v4647, %v4649
    %v4651 = vrot.slane %v4644, %v4650
    %v4653 = vunpack.c.l.s4 1966171168
    %v4654 = vunpack.c.0.s8 %v4653
    %v4655 = vlaneseq
    %v4656 = vshrl.u32 %v4655, 7
    %v4657 = vsub.s32 %v4654, %v4656
    %v4658 = vrot.slane %v4651, %v4657
    %v4660 = vunpack.c.l.s4 1966171168
    %v4661 = vunpack.c.0.s8 %v4660
    %v4662 = vlaneseq
    %v4663 = vshrl.u32 %v4662, 7
    %v4664 = vsub.s32 %v4661, %v4663
    %v4665 = vrot.slane %v3131, %v4664
    %v4666 = vcombine.low %v4636, %v4665
    %v4668 = vunpack.c.l.s4 1966171168
    %v4669 = vunpack.c.0.s8 %v4668
    %v4670 = vlaneseq
    %v4671 = vshrl.u32 %v4670, 7
    %v4672 = vsub.s32 %v4669, %v4671
    %v4673 = vrot.slane %v4666, %v4672
    %v4675 = vunpack.c.l.s4 1966171168
    %v4676 = vunpack.c.0.s8 %v4675
    %v4677 = vlaneseq
    %v4678 = vshrl.u32 %v4677, 7
    %v4679 = vsub.s32 %v4676, %v4678
    %v4680 = vrot.slane %v3215, %v4679
    %v4681 = vcombine.low %v4651, %v4680
    %v4683 = vunpack.c.l.s4 1966171168
    %v4684 = vunpack.c.0.s8 %v4683
    %v4685 = vlaneseq
    %v4686 = vshrl.u32 %v4685, 7
    %v4687 = vsub.s32 %v4684, %v4686
    %v4688 = vrot.slane %v4681, %v4687
    %v4690 = vshrl.u32 %v4673, 16
    %v4692 = vshll.u32 %v4673, 16
    %v4694 = vrot.slane %v4692, 1
    %v4695 = vor.u32 %v4690, %v4694
    %v4697 = vshrl.u32 %v4688, 16
    %v4699 = vshll.u32 %v4688, 16
    %v4701 = vrot.slane %v4699, 1
    %v4702 = vor.u32 %v4697, %v4701
    %v4703 = vcombine.low %v3117, %v3131
    %v4705 = vunpack.c.l.s4 1966171168
    %v4706 = vunpack.c.0.s8 %v4705
    %v4707 = vlaneseq
    %v4708 = vshrl.u32 %v4707, 7
    %v4709 = vsub.s32 %v4706, %v4708
    %v4710 = vrot.slane %v4703, %v4709
    %v4712 = vunpack.c.l.s4 1966171168
    %v4713 = vunpack.c.0.s8 %v4712
    %v4714 = vlaneseq
    %v4715 = vshrl.u32 %v4714, 7
    %v4716 = vsub.s32 %v4713, %v4715
    %v4717 = vrot.slane %v4710, %v4716
    %v4718 = vcombine.low %v3214, %v3215
    %v4720 = vunpack.c.l.s4 1966171168
    %v4721 = vunpack.c.0.s8 %v4720
    %v4722 = vlaneseq
    %v4723 = vshrl.u32 %v4722, 7
    %v4724 = vsub.s32 %v4721, %v4723
    %v4725 = vrot.slane %v4718, %v4724
    %v4727 = vunpack.c.l.s4 1966171168
    %v4728 = vunpack.c.0.s8 %v4727
    %v4729 = vlaneseq
    %v4730 = vshrl.u32 %v4729, 7
    %v4731 = vsub.s32 %v4728, %v4730
    %v4732 = vrot.slane %v4725, %v4731
    %v4733 = vcombine.low %v4643, %v4695
    %v4735 = vunpack.c.l.s4 1983009808
    %v4736 = vunpack.c.0.s8 %v4735
    %v4737 = vlaneseq
    %v4738 = vshrl.u32 %v4737, 7
    %v4739 = vsub.s32 %v4736, %v4738
    %v4740 = vrot.slane %v4733, %v4739
    %v4742 = vunpack.c.l.s4 1983009808
    %v4743 = vunpack.c.0.s8 %v4742
    %v4744 = vlaneseq
    %v4745 = vshrl.u32 %v4744, 7
    %v4746 = vsub.s32 %v4743, %v4745
    %v4747 = vrot.slane %v4717, %v4746
    %v4748 = vcombine.low %v4740, %v4747
    %v4749 = vcombine.low %v4658, %v4702
    %v4751 = vunpack.c.l.s4 1983009808
    %v4752 = vunpack.c.0.s8 %v4751
    %v4753 = vlaneseq
    %v4754 = vshrl.u32 %v4753, 7
    %v4755 = vsub.s32 %v4752, %v4754
    %v4756 = vrot.slane %v4749, %v4755
    %v4758 = vunpack.c.l.s4 1983009808
    %v4759 = vunpack.c.0.s8 %v4758
    %v4760 = vlaneseq
    %v4761 = vshrl.u32 %v4760, 7
    %v4762 = vsub.s32 %v4759, %v4761
    %v4763 = vrot.slane %v4732, %v4762
    %v4764 = vcombine.low %v4756, %v4763
    %s4765 = scalar_lea.vmem [#allocation11], 384
    %v4766 = vld [vmem:[%s4765] sm:$0xf]
    %v4767 = vld [vmem:[%s4765 + $0x4] sm:$0xf]
    %v4768 = vld [vmem:[%s4765 + $0x8] sm:$0xf]
    %v4769 = vld [vmem:[%s4765 + $0xc] sm:$0xf]
    %v4770 = vld [vmem:[%s4765 + $0x10] sm:$0xf]
    %v4771 = vld [vmem:[%s4765 + $0x14] sm:$0xf]
    %v4772 = vld [vmem:[%s4765 + $0x18] sm:$0xf]
    %v4773 = vld [vmem:[%s4765 + $0x1c] sm:$0xf]
    %v4774 = vld [vmem:[%s4765 + $0x20] sm:$0xf]
    %v4775 = vld [vmem:[%s4765 + $0x24] sm:$0xf]
    %v4776 = vld [vmem:[%s4765 + $0x28] sm:$0xf]
    %v4777 = vld [vmem:[%s4765 + $0x2c] sm:$0xf]
    %v4778 = vld [vmem:[%s4765 + $0x30] sm:$0xf]
    %v4779 = vld [vmem:[%s4765 + $0x34] sm:$0xf]
    %v4780 = vld [vmem:[%s4765 + $0x38] sm:$0xf]
    %v4781 = vld [vmem:[%s4765 + $0x3c] sm:$0xf]
    %v4782 = vld [vmem:[%s4765 + $0x40] sm:$0xf]
    %v4783 = vld [vmem:[%s4765 + $0x44] sm:$0xf]
    %v4784 = vld [vmem:[%s4765 + $0x48] sm:$0xf]
    %v4785 = vld [vmem:[%s4765 + $0x4c] sm:$0xf]
    %v4786 = vld [vmem:[%s4765 + $0x50] sm:$0xf]
    %v4787 = vld [vmem:[%s4765 + $0x54] sm:$0xf]
    %v4788 = vld [vmem:[%s4765 + $0x58] sm:$0xf]
    %v4789 = vld [vmem:[%s4765 + $0x5c] sm:$0xf]
    %v4790 = vld [vmem:[%s4765 + $0x60] sm:$0xf]
    %v4791 = vld [vmem:[%s4765 + $0x64] sm:$0xf]
    %v4792 = vld [vmem:[%s4765 + $0x68] sm:$0xf]
    %v4793 = vld [vmem:[%s4765 + $0x6c] sm:$0xf]
    %v4794 = vld [vmem:[%s4765 + $0x70] sm:$0xf]
    %v4795 = vld [vmem:[%s4765 + $0x74] sm:$0xf]
    %v4796 = vld [vmem:[%s4765 + $0x78] sm:$0xf]
    %v4797 = vld [vmem:[%s4765 + $0x7c] sm:$0xf]
    %v4798 = vld [vmem:[%s4765 + $0x80] sm:$0xf]
    %v4799 = vld [vmem:[%s4765 + $0x84] sm:$0xf]
    %v4800 = vld [vmem:[%s4765 + $0x88] sm:$0xf]
    %v4801 = vld [vmem:[%s4765 + $0x8c] sm:$0xf]
    %v4802 = vld [vmem:[%s4765 + $0x90] sm:$0xf]
    %v4803 = vld [vmem:[%s4765 + $0x94] sm:$0xf]
    %v4804 = vld [vmem:[%s4765 + $0x98] sm:$0xf]
    %v4805 = vld [vmem:[%s4765 + $0x9c] sm:$0xf]
    %v4806 = vld [vmem:[%s4765 + $0xa0] sm:$0xf]
    %v4807 = vld [vmem:[%s4765 + $0xa4] sm:$0xf]
    %v4808 = vld [vmem:[%s4765 + $0xa8] sm:$0xf]
    %v4809 = vld [vmem:[%s4765 + $0xac] sm:$0xf]
    %v4810 = vld [vmem:[%s4765 + $0xb0] sm:$0xf]
    %v4811 = vld [vmem:[%s4765 + $0xb4] sm:$0xf]
    %v4812 = vld [vmem:[%s4765 + $0xb8] sm:$0xf]
    %v4813 = vld [vmem:[%s4765 + $0xbc] sm:$0xf]
    %v4814 = vcombine.low %v3927, %v4748
    %v4815 = vcombine.high %v3927, %v4748
    %v4817 = vunpack.c.l.s4 1983009808
    %v4818 = vunpack.c.0.s8 %v4817
    %v4819 = vlaneseq
    %v4820 = vshrl.u32 %v4819, 7
    %v4821 = vsub.s32 %v4818, %v4820
    %v4822 = vrot.slane %v4814, %v4821
    %v4824 = vunpack.c.l.s4 1983009808
    %v4825 = vunpack.c.0.s8 %v4824
    %v4826 = vlaneseq
    %v4827 = vshrl.u32 %v4826, 7
    %v4828 = vsub.s32 %v4825, %v4827
    %v4829 = vrot.slane %v4815, %v4828
    %v4830 = vcombine.low %v4335, %v4822
    %v4831 = vcombine.high %v4335, %v4822
    %v4832 = vcombine.low %v4342, %v4829
    %v4833 = vcombine.low %v3943, %v4764
    %v4834 = vcombine.high %v3943, %v4764
    %v4836 = vunpack.c.l.s4 1983009808
    %v4837 = vunpack.c.0.s8 %v4836
    %v4838 = vlaneseq
    %v4839 = vshrl.u32 %v4838, 7
    %v4840 = vsub.s32 %v4837, %v4839
    %v4841 = vrot.slane %v4833, %v4840
    %v4843 = vunpack.c.l.s4 1983009808
    %v4844 = vunpack.c.0.s8 %v4843
    %v4845 = vlaneseq
    %v4846 = vshrl.u32 %v4845, 7
    %v4847 = vsub.s32 %v4844, %v4846
    %v4848 = vrot.slane %v4834, %v4847
    %v4849 = vcombine.low %v4370, %v4841
    %v4850 = vcombine.high %v4370, %v4841
    %v4851 = vcombine.low %v4377, %v4848
    %v4906 = vunpack.c.l.b16 %v4766
    %v4907 = vunpack.c.l.b16 %v4767
    %v4908 = vunpack.c.l.b16 %v4768
    %v4909 = vunpack.c.l.b16 %v4769
    %v4910 = vunpack.c.l.b16 %v4770
    %v4911 = vunpack.c.l.b16 %v4771
    %v4912 = vunpack.c.l.b16 %v4772
    %v4913 = vunpack.c.l.b16 %v4773
    %v4914 = vunpack.c.l.b16 %v4774
    %v4915 = vunpack.c.l.b16 %v4775
    %v4916 = vunpack.c.l.b16 %v4776
    %v4917 = vunpack.c.l.b16 %v4777
    %v4918 = vunpack.c.l.b16 %v4778
    %v4919 = vunpack.c.l.b16 %v4779
    %v4920 = vunpack.c.l.b16 %v4780
    %v4921 = vunpack.c.l.b16 %v4781
    %v4922 = vunpack.c.l.b16 %v4782
    %v4923 = vunpack.c.l.b16 %v4783
    %v4924 = vunpack.c.l.b16 %v4784
    %v4925 = vunpack.c.l.b16 %v4785
    %v4926 = vunpack.c.l.b16 %v4786
    %v4927 = vunpack.c.l.b16 %v4787
    %v4928 = vunpack.c.l.b16 %v4788
    %v4929 = vunpack.c.l.b16 %v4789
    %v4930 = vunpack.c.l.b16 %v4790
    %v4931 = vunpack.c.l.b16 %v4791
    %v4932 = vunpack.c.l.b16 %v4792
    %v4933 = vunpack.c.l.b16 %v4793
    %v4934 = vunpack.c.l.b16 %v4794
    %v4935 = vunpack.c.l.b16 %v4795
    %v4936 = vunpack.c.l.b16 %v4796
    %v4937 = vunpack.c.l.b16 %v4797
    %v4938 = vunpack.c.l.b16 %v4798
    %v4939 = vunpack.c.l.b16 %v4799
    %v4940 = vunpack.c.l.b16 %v4800
    %v4941 = vunpack.c.l.b16 %v4801
    %v4942 = vunpack.c.l.b16 %v4802
    %v4943 = vunpack.c.l.b16 %v4803
    %v4944 = vunpack.c.l.b16 %v4804
    %v4945 = vunpack.c.l.b16 %v4805
    %v4946 = vunpack.c.l.b16 %v4806
    %v4947 = vunpack.c.l.b16 %v4807
    %v4948 = vunpack.c.l.b16 %v4808
    %v4949 = vunpack.c.l.b16 %v4809
    %v4950 = vunpack.c.l.b16 %v4810
    %v4951 = vunpack.c.l.b16 %v4811
    %v4952 = vunpack.c.l.b16 %v4812
    %v4953 = vunpack.c.l.b16 %v4813
    %v4954 = vpack.c.b16 %v4907, %v4906
    %v4955 = vpack.c.b16 %v4909, %v4908
    %v4956 = vpack.c.b16 %v4911, %v4910
    %v4957 = vpack.c.b16 %v4913, %v4912
    %v4958 = vpack.c.b16 %v4915, %v4914
    %v4959 = vpack.c.b16 %v4917, %v4916
    %v4960 = vpack.c.b16 %v4919, %v4918
    %v4961 = vpack.c.b16 %v4921, %v4920
    %v4962 = vpack.c.b16 %v4923, %v4922
    %v4963 = vpack.c.b16 %v4925, %v4924
    %v4964 = vpack.c.b16 %v4927, %v4926
    %v4965 = vpack.c.b16 %v4929, %v4928
    %v4966 = vpack.c.b16 %v4931, %v4930
    %v4967 = vpack.c.b16 %v4933, %v4932
    %v4968 = vpack.c.b16 %v4935, %v4934
    %v4969 = vpack.c.b16 %v4937, %v4936
    %v4970 = vpack.c.b16 %v4939, %v4938
    %v4971 = vpack.c.b16 %v4941, %v4940
    %v4972 = vpack.c.b16 %v4943, %v4942
    %v4973 = vpack.c.b16 %v4945, %v4944
    %v4974 = vpack.c.b16 %v4947, %v4946
    %v4975 = vpack.c.b16 %v4949, %v4948
    %v4976 = vpack.c.b16 %v4951, %v4950
    %v4977 = vpack.c.b16 %v4953, %v4952
    %5002 = vmatprep.subr.bf16.mxu0 0
    %5003 = vmatpush1.bf16.msra.mxu0 %v4954
    %5004 = vmatprep.subr.bf16.mxu0 0
    %5005 = vmatpush1.bf16.msra.mxu0 %v4955
    %5006 = vmatprep.subr.bf16.mxu0 0
    %5007 = vmatpush1.bf16.msra.mxu0 %v4956
    %5008 = vmatprep.subr.bf16.mxu0 0
    %5009 = vmatpush1.bf16.msra.mxu0 %v4957
    %5010 = vmatprep.subr.bf16.mxu0 0
    %5011 = vmatpush1.bf16.msra.mxu0 %v4958
    %5012 = vmatprep.subr.bf16.mxu0 0
    %5013 = vmatpush1.bf16.msra.mxu0 %v4959
    %5014 = vmatprep.subr.bf16.mxu0 0
    %5015 = vmatpush1.bf16.msra.mxu0 %v4960
    %5016 = vmatprep.subr.bf16.mxu0 0
    %5017 = vmatpush1.bf16.msra.mxu0 %v4961
    %5018 = vmatprep.subr.bf16.mxu0 0
    %5019 = vmatpush1.bf16.msra.mxu0 %v4962
    %5020 = vmatprep.subr.bf16.mxu0 0
    %5021 = vmatpush1.bf16.msra.mxu0 %v4963
    %5022 = vmatprep.subr.bf16.mxu0 0
    %5023 = vmatpush1.bf16.msra.mxu0 %v4964
    %5024 = vmatprep.subr.bf16.mxu0 0
    %5025 = vmatpush1.bf16.msra.mxu0 %v4965
    %5026 = vmatprep.subr.bf16.mxu0 0
    %5027 = vmatpush1.bf16.msra.mxu0 %v4966
    %5028 = vmatprep.subr.bf16.mxu0 0
    %5029 = vmatpush1.bf16.msra.mxu0 %v4967
    %5030 = vmatprep.subr.bf16.mxu0 0
    %5031 = vmatpush1.bf16.msra.mxu0 %v4968
    %5032 = vmatprep.subr.bf16.mxu0 0
    %5033 = vmatpush1.bf16.msra.mxu0 %v4969
    %5034 = vmatprep.mubr.bf16.mxu0 %v4831
    %5035 = vmatmul.mubr.bf16.gmra.mrb[0].mxu0 %v4830
    %v5036 = vpop.f32.mrb[0].mxu0
    %v5037 = vadd.f32 0.0, %v5036
    %v5038 = vpop.f32.mrb[0].mxu0
    %v5039 = vpop.f32.mrb[0].mxu0
    %v5040 = vadd.f32 0.0, %v5039
    %v5041 = vpop.f32.mrb[0].mxu0
    %5042 = vmatprep.mubr.bf16.mxu0 %v4850
    %5043 = vmatmul.mubr.bf16.gmra.mrb[0].mxu0 %v4849
    %v5044 = vpop.f32.mrb[0].mxu0
    %v5045 = vadd.f32 0.0, %v5044
    %v5046 = vpop.f32.mrb[0].mxu0
    %v5047 = vpop.f32.mrb[0].mxu0
    %v5048 = vadd.f32 0.0, %v5047
    %v5049 = vpop.f32.mrb[0].mxu0
    %5050 = vdwg.mxu0
    %5051 = vmatprep.subr.bf16.mxu0 0
    %5052 = vmatpush1.bf16.msra.mxu0 %v4970
    %5053 = vmatprep.subr.bf16.mxu0 0
    %5054 = vmatpush1.bf16.msra.mxu0 %v4971
    %5055 = vmatprep.subr.bf16.mxu0 0
    %5056 = vmatpush1.bf16.msra.mxu0 %v4972
    %5057 = vmatprep.subr.bf16.mxu0 0
    %5058 = vmatpush1.bf16.msra.mxu0 %v4973
    %5059 = vmatprep.subr.bf16.mxu0 0
    %5060 = vmatpush1.bf16.msra.mxu0 %v4974
    %5061 = vmatprep.subr.bf16.mxu0 0
    %5062 = vmatpush1.bf16.msra.mxu0 %v4975
    %5063 = vmatprep.subr.bf16.mxu0 0
    %5064 = vmatpush1.bf16.msra.mxu0 %v4976
    %5065 = vmatprep.subr.bf16.mxu0 0
    %5066 = vmatpush1.bf16.msra.mxu0 %v4977
    %5067 = vmatprep.subr.bf16.mxu0 0
    %5068 = vmatpush1.bf16.msra.mxu0 0
    %5069 = vmatprep.subr.bf16.mxu0 0
    %5070 = vmatpush1.bf16.msra.mxu0 0
    %5071 = vmatprep.subr.bf16.mxu0 0
    %5072 = vmatpush1.bf16.msra.mxu0 0
    %5073 = vmatprep.subr.bf16.mxu0 0
    %5074 = vmatpush1.bf16.msra.mxu0 0
    %5075 = vmatprep.subr.bf16.mxu0 0
    %5076 = vmatpush1.bf16.msra.mxu0 0
    %5077 = vmatprep.subr.bf16.mxu0 0
    %5078 = vmatpush1.bf16.msra.mxu0 0
    %5079 = vmatprep.subr.bf16.mxu0 0
    %5080 = vmatpush1.bf16.msra.mxu0 0
    %5081 = vmatprep.subr.bf16.mxu0 0
    %5082 = vmatpush1.bf16.msra.mxu0 0
    %5083 = vmatprep.mubr.bf16.mxu0 0
    %5084 = vmatmul.mubr.bf16.gmra.mrb[0].mxu0 %v4832
    %v5085 = vpop.f32.mrb[0].mxu0
    %v5086 = vadd.f32 %v5037, %v5085
    %v5087 = vpop.f32.mrb[0].mxu0
    %v5088 = vpop.f32.mrb[0].mxu0
    %v5089 = vadd.f32 %v5040, %v5088
    %v5090 = vpop.f32.mrb[0].mxu0
    %5091 = vmatprep.mubr.bf16.mxu0 0
    %5092 = vmatmul.mubr.bf16.gmra.mrb[0].mxu0 %v4851
    %v5093 = vpop.f32.mrb[0].mxu0
    %v5094 = vadd.f32 %v5045, %v5093
    %v5095 = vpop.f32.mrb[0].mxu0
    %v5096 = vpop.f32.mrb[0].mxu0
    %v5097 = vadd.f32 %v5048, %v5096
    %v5098 = vpop.f32.mrb[0].mxu0
    %5099 = vdwg.mxu0
    %v5100 = vadd.f32 %v4615, %v5086
    %v5101 = vadd.f32 %v4618, %v5089
    %v5102 = vadd.f32 %v4623, %v5094
    %v5103 = vadd.f32 %v4626, %v5097
    %v5104 = vld [vmem:[#allocation13] sm:$0x1]
    %v5106 = vlaneseq
    %v5107 = vshrl.u32 %v5106, 7
    %v5108 = vsub.s32 0, %v5107
    %v5109 = vrot.slane %v5104, %v5108
    %v5111 = vadd.f32 %v5100, %v5109
    %v5112 = vadd.f32 %v5101, %v5109
    %v5113 = vadd.f32 %v5102, %v5109
    %v5114 = vadd.f32 %v5103, %v5109
    %v5115 = vmax.f32 %v5111, 0.0
    %v5116 = vmax.f32 %v5112, 0.0
    %v5117 = vmax.f32 %v5113, 0.0
    %v5118 = vmax.f32 %v5114, 0.0
    %v5119 = vpack.c.bf16 %v5116, %v5115
    %v5120 = vpack.c.bf16 %v5118, %v5117
    %v5123 = vcombine.high %v5119, %v5119
    %v5125 = vunpack.c.l.s4 1983009808
    %v5126 = vunpack.c.0.s8 %v5125
    %v5127 = vlaneseq
    %v5128 = vshrl.u32 %v5127, 7
    %v5129 = vsub.s32 %v5126, %v5128
    %v5130 = vrot.slane %v5119, %v5129
    %v5132 = vunpack.c.l.s4 1983009808
    %v5133 = vunpack.c.0.s8 %v5132
    %v5134 = vlaneseq
    %v5135 = vshrl.u32 %v5134, 7
    %v5136 = vsub.s32 %v5133, %v5135
    %v5137 = vrot.slane %v5123, %v5136
    %v5138 = vcombine.high %v5130, %v5130
    %v5139 = vcombine.high %v5137, %v5137
    %v5140 = vcombine.high %v5120, %v5120
    %v5142 = vunpack.c.l.s4 1983009808
    %v5143 = vunpack.c.0.s8 %v5142
    %v5144 = vlaneseq
    %v5145 = vshrl.u32 %v5144, 7
    %v5146 = vsub.s32 %v5143, %v5145
    %v5147 = vrot.slane %v5120, %v5146
    %v5149 = vunpack.c.l.s4 1983009808
    %v5150 = vunpack.c.0.s8 %v5149
    %v5151 = vlaneseq
    %v5152 = vshrl.u32 %v5151, 7
    %v5153 = vsub.s32 %v5150, %v5152
    %v5154 = vrot.slane %v5140, %v5153
    %v5155 = vcombine.high %v5147, %v5147
    %v5156 = vcombine.high %v5154, %v5154
    %v5158 = vunpack.c.l.s4 1983009808
    %v5159 = vunpack.c.0.s8 %v5158
    %v5160 = vlaneseq
    %v5161 = vshrl.u32 %v5160, 7
    %v5162 = vsub.s32 %v5159, %v5161
    %v5163 = vrot.slane %v5130, %v5162
    %v5165 = vunpack.c.l.s4 1983009808
    %v5166 = vunpack.c.0.s8 %v5165
    %v5167 = vlaneseq
    %v5168 = vshrl.u32 %v5167, 7
    %v5169 = vsub.s32 %v5166, %v5168
    %v5170 = vrot.slane %v5147, %v5169
    %v5171 = vunpack.c.l.b16 %v5163
    %v5172 = vunpack.c.l.b16 %v5170
    %v5173 = vrot.slane %v5172, 7
    %vm5174 = vcmask 1041409
    %v5175 = vsel %vm5174, %v5173, %v5171
    %v5176 = vpack.c.b16 %v5175, %v5175
    %v5178 = vrot.slane %v5171, 1
    %v5179 = vsel %vm5174, %v5172, %v5178
    %v5180 = vpack.c.b16 %v5179, %v5179
    %v5182 = vrot.slane %v5171, 2
    %v5183 = vrot.slane %v5172, 1
    %v5184 = vsel %vm5174, %v5183, %v5182
    %v5185 = vpack.c.b16 %v5184, %v5184
    %v5187 = vrot.slane %v5171, 3
    %v5188 = vrot.slane %v5172, 2
    %v5189 = vsel %vm5174, %v5188, %v5187
    %v5190 = vpack.c.b16 %v5189, %v5189
    %v5192 = vld [vmem:[#allocation14] sm:$0xff]
    %v5193 = vld [vmem:[#allocation14 + $0x8] sm:$0xff]
    %v5194 = vld [vmem:[#allocation14 + $0x10] sm:$0xff]
    %v5195 = vld [vmem:[#allocation14 + $0x18] sm:$0xff]
    %v5196 = vld [vmem:[#allocation14 + $0x20] sm:$0xff]
    %v5197 = vld [vmem:[#allocation14 + $0x28] sm:$0xff]
    %v5198 = vld [vmem:[#allocation14 + $0x30] sm:$0xff]
    %v5199 = vld [vmem:[#allocation14 + $0x38] sm:$0xff]
    %v5200 = vld [vmem:[#allocation14 + $0x40] sm:$0xff]
    %v5201 = vld [vmem:[#allocation14 + $0x48] sm:$0xff]
    %v5202 = vld [vmem:[#allocation14 + $0x50] sm:$0xff]
    %v5203 = vld [vmem:[#allocation14 + $0x58] sm:$0xff]
    %v5204 = vld [vmem:[#allocation14 + $0x60] sm:$0xff]
    %v5205 = vld [vmem:[#allocation14 + $0x68] sm:$0xff]
    %v5206 = vld [vmem:[#allocation14 + $0x70] sm:$0xff]
    %v5207 = vld [vmem:[#allocation14 + $0x78] sm:$0xff]
    %v5208 = vld [vmem:[#allocation14 + $0x80] sm:$0xff]
    %v5209 = vld [vmem:[#allocation14 + $0x88] sm:$0xff]
    %v5210 = vld [vmem:[#allocation14 + $0x90] sm:$0xff]
    %v5211 = vld [vmem:[#allocation14 + $0x98] sm:$0xff]
    %v5212 = vld [vmem:[#allocation14 + $0xa0] sm:$0xff]
    %v5213 = vld [vmem:[#allocation14 + $0xa8] sm:$0xff]
    %v5214 = vld [vmem:[#allocation14 + $0xb0] sm:$0xff]
    %v5215 = vld [vmem:[#allocation14 + $0xb8] sm:$0xff]
    %v5216 = vld [vmem:[#allocation14 + $0xc0] sm:$0xff]
    %v5217 = vld [vmem:[#allocation14 + $0xc8] sm:$0xff]
    %v5218 = vld [vmem:[#allocation14 + $0xd0] sm:$0xff]
    %v5219 = vld [vmem:[#allocation14 + $0xd8] sm:$0xff]
    %v5220 = vld [vmem:[#allocation14 + $0xe0] sm:$0xff]
    %v5221 = vld [vmem:[#allocation14 + $0xe8] sm:$0xff]
    %v5222 = vld [vmem:[#allocation14 + $0xf0] sm:$0xff]
    %v5223 = vld [vmem:[#allocation14 + $0xf8] sm:$0xff]
    %v5224 = vld [vmem:[#allocation14 + $0x100] sm:$0xff]
    %v5225 = vld [vmem:[#allocation14 + $0x108] sm:$0xff]
    %v5226 = vld [vmem:[#allocation14 + $0x110] sm:$0xff]
    %v5227 = vld [vmem:[#allocation14 + $0x118] sm:$0xff]
    %v5228 = vld [vmem:[#allocation14 + $0x120] sm:$0xff]
    %v5229 = vld [vmem:[#allocation14 + $0x128] sm:$0xff]
    %v5230 = vld [vmem:[#allocation14 + $0x130] sm:$0xff]
    %v5231 = vld [vmem:[#allocation14 + $0x138] sm:$0xff]
    %v5232 = vld [vmem:[#allocation14 + $0x140] sm:$0xff]
    %v5233 = vld [vmem:[#allocation14 + $0x148] sm:$0xff]
    %v5234 = vld [vmem:[#allocation14 + $0x150] sm:$0xff]
    %v5235 = vld [vmem:[#allocation14 + $0x158] sm:$0xff]
    %v5236 = vld [vmem:[#allocation14 + $0x160] sm:$0xff]
    %v5237 = vld [vmem:[#allocation14 + $0x168] sm:$0xff]
    %v5238 = vld [vmem:[#allocation14 + $0x170] sm:$0xff]
    %v5239 = vld [vmem:[#allocation14 + $0x178] sm:$0xff]
    %v5240 = vld [vmem:[#allocation14 + $0x180] sm:$0xff]
    %v5241 = vld [vmem:[#allocation14 + $0x188] sm:$0xff]
    %v5242 = vld [vmem:[#allocation14 + $0x190] sm:$0xff]
    %v5243 = vld [vmem:[#allocation14 + $0x198] sm:$0xff]
    %v5244 = vld [vmem:[#allocation14 + $0x1a0] sm:$0xff]
    %v5245 = vld [vmem:[#allocation14 + $0x1a8] sm:$0xff]
    %v5246 = vld [vmem:[#allocation14 + $0x1b0] sm:$0xff]
    %v5247 = vld [vmem:[#allocation14 + $0x1b8] sm:$0xff]
    %v5248 = vld [vmem:[#allocation14 + $0x1c0] sm:$0xff]
    %v5249 = vld [vmem:[#allocation14 + $0x1c8] sm:$0xff]
    %v5250 = vld [vmem:[#allocation14 + $0x1d0] sm:$0xff]
    %v5251 = vld [vmem:[#allocation14 + $0x1d8] sm:$0xff]
    %v5252 = vld [vmem:[#allocation14 + $0x1e0] sm:$0xff]
    %v5253 = vld [vmem:[#allocation14 + $0x1e8] sm:$0xff]
    %v5254 = vld [vmem:[#allocation14 + $0x1f0] sm:$0xff]
    %v5255 = vld [vmem:[#allocation14 + $0x1f8] sm:$0xff]
    %v5257 = vunpack.c.l.s4 1983009808
    %v5258 = vunpack.c.0.s8 %v5257
    %v5259 = vlaneseq
    %v5260 = vshrl.u32 %v5259, 7
    %v5261 = vsub.s32 %v5258, %v5260
    %v5262 = vrot.slane %v5138, %v5261
    %v5264 = vunpack.c.l.s4 1983009808
    %v5265 = vunpack.c.0.s8 %v5264
    %v5266 = vlaneseq
    %v5267 = vshrl.u32 %v5266, 7
    %v5268 = vsub.s32 %v5265, %v5267
    %v5269 = vrot.slane %v5155, %v5268
    %v5270 = vunpack.c.l.b16 %v5262
    %v5271 = vunpack.c.l.b16 %v5269
    %v5272 = vrot.slane %v5271, 7
    %v5273 = vsel %vm5174, %v5272, %v5270
    %v5274 = vpack.c.b16 %v5273, %v5273
    %v5276 = vrot.slane %v5270, 1
    %v5277 = vsel %vm5174, %v5271, %v5276
    %v5278 = vpack.c.b16 %v5277, %v5277
    %v5280 = vrot.slane %v5270, 2
    %v5281 = vrot.slane %v5271, 1
    %v5282 = vsel %vm5174, %v5281, %v5280
    %v5283 = vpack.c.b16 %v5282, %v5282
    %v5285 = vrot.slane %v5270, 3
    %v5286 = vrot.slane %v5271, 2
    %v5287 = vsel %vm5174, %v5286, %v5285
    %v5288 = vpack.c.b16 %v5287, %v5287
    %s5290 = scalar_lea.vmem [#allocation14], 512
    %v5291 = vld [vmem:[%s5290] sm:$0xff]
    %v5292 = vld [vmem:[%s5290 + $0x8] sm:$0xff]
    %v5293 = vld [vmem:[%s5290 + $0x10] sm:$0xff]
    %v5294 = vld [vmem:[%s5290 + $0x18] sm:$0xff]
    %v5295 = vld [vmem:[%s5290 + $0x20] sm:$0xff]
    %v5296 = vld [vmem:[%s5290 + $0x28] sm:$0xff]
    %v5297 = vld [vmem:[%s5290 + $0x30] sm:$0xff]
    %v5298 = vld [vmem:[%s5290 + $0x38] sm:$0xff]
    %v5299 = vld [vmem:[%s5290 + $0x40] sm:$0xff]
    %v5300 = vld [vmem:[%s5290 + $0x48] sm:$0xff]
    %v5301 = vld [vmem:[%s5290 + $0x50] sm:$0xff]
    %v5302 = vld [vmem:[%s5290 + $0x58] sm:$0xff]
    %v5303 = vld [vmem:[%s5290 + $0x60] sm:$0xff]
    %v5304 = vld [vmem:[%s5290 + $0x68] sm:$0xff]
    %v5305 = vld [vmem:[%s5290 + $0x70] sm:$0xff]
    %v5306 = vld [vmem:[%s5290 + $0x78] sm:$0xff]
    %v5307 = vld [vmem:[%s5290 + $0x80] sm:$0xff]
    %v5308 = vld [vmem:[%s5290 + $0x88] sm:$0xff]
    %v5309 = vld [vmem:[%s5290 + $0x90] sm:$0xff]
    %v5310 = vld [vmem:[%s5290 + $0x98] sm:$0xff]
    %v5311 = vld [vmem:[%s5290 + $0xa0] sm:$0xff]
    %v5312 = vld [vmem:[%s5290 + $0xa8] sm:$0xff]
    %v5313 = vld [vmem:[%s5290 + $0xb0] sm:$0xff]
    %v5314 = vld [vmem:[%s5290 + $0xb8] sm:$0xff]
    %v5315 = vld [vmem:[%s5290 + $0xc0] sm:$0xff]
    %v5316 = vld [vmem:[%s5290 + $0xc8] sm:$0xff]
    %v5317 = vld [vmem:[%s5290 + $0xd0] sm:$0xff]
    %v5318 = vld [vmem:[%s5290 + $0xd8] sm:$0xff]
    %v5319 = vld [vmem:[%s5290 + $0xe0] sm:$0xff]
    %v5320 = vld [vmem:[%s5290 + $0xe8] sm:$0xff]
    %v5321 = vld [vmem:[%s5290 + $0xf0] sm:$0xff]
    %v5322 = vld [vmem:[%s5290 + $0xf8] sm:$0xff]
    %v5323 = vld [vmem:[%s5290 + $0x100] sm:$0xff]
    %v5324 = vld [vmem:[%s5290 + $0x108] sm:$0xff]
    %v5325 = vld [vmem:[%s5290 + $0x110] sm:$0xff]
    %v5326 = vld [vmem:[%s5290 + $0x118] sm:$0xff]
    %v5327 = vld [vmem:[%s5290 + $0x120] sm:$0xff]
    %v5328 = vld [vmem:[%s5290 + $0x128] sm:$0xff]
    %v5329 = vld [vmem:[%s5290 + $0x130] sm:$0xff]
    %v5330 = vld [vmem:[%s5290 + $0x138] sm:$0xff]
    %v5331 = vld [vmem:[%s5290 + $0x140] sm:$0xff]
    %v5332 = vld [vmem:[%s5290 + $0x148] sm:$0xff]
    %v5333 = vld [vmem:[%s5290 + $0x150] sm:$0xff]
    %v5334 = vld [vmem:[%s5290 + $0x158] sm:$0xff]
    %v5335 = vld [vmem:[%s5290 + $0x160] sm:$0xff]
    %v5336 = vld [vmem:[%s5290 + $0x168] sm:$0xff]
    %v5337 = vld [vmem:[%s5290 + $0x170] sm:$0xff]
    %v5338 = vld [vmem:[%s5290 + $0x178] sm:$0xff]
    %v5339 = vld [vmem:[%s5290 + $0x180] sm:$0xff]
    %v5340 = vld [vmem:[%s5290 + $0x188] sm:$0xff]
    %v5341 = vld [vmem:[%s5290 + $0x190] sm:$0xff]
    %v5342 = vld [vmem:[%s5290 + $0x198] sm:$0xff]
    %v5343 = vld [vmem:[%s5290 + $0x1a0] sm:$0xff]
    %v5344 = vld [vmem:[%s5290 + $0x1a8] sm:$0xff]
    %v5345 = vld [vmem:[%s5290 + $0x1b0] sm:$0xff]
    %v5346 = vld [vmem:[%s5290 + $0x1b8] sm:$0xff]
    %v5347 = vld [vmem:[%s5290 + $0x1c0] sm:$0xff]
    %v5348 = vld [vmem:[%s5290 + $0x1c8] sm:$0xff]
    %v5349 = vld [vmem:[%s5290 + $0x1d0] sm:$0xff]
    %v5350 = vld [vmem:[%s5290 + $0x1d8] sm:$0xff]
    %v5351 = vld [vmem:[%s5290 + $0x1e0] sm:$0xff]
    %v5352 = vld [vmem:[%s5290 + $0x1e8] sm:$0xff]
    %v5353 = vld [vmem:[%s5290 + $0x1f0] sm:$0xff]
    %v5354 = vld [vmem:[%s5290 + $0x1f8] sm:$0xff]
    %v5419 = vunpack.c.l.b16 %v5291
    %v5420 = vunpack.c.h.b16 %v5291
    %v5421 = vunpack.c.l.b16 %v5292
    %v5422 = vunpack.c.h.b16 %v5292
    %v5423 = vunpack.c.l.b16 %v5293
    %v5424 = vunpack.c.h.b16 %v5293
    %v5425 = vunpack.c.l.b16 %v5294
    %v5426 = vunpack.c.h.b16 %v5294
    %v5427 = vunpack.c.l.b16 %v5295
    %v5428 = vunpack.c.h.b16 %v5295
    %v5429 = vunpack.c.l.b16 %v5296
    %v5430 = vunpack.c.h.b16 %v5296
    %v5431 = vunpack.c.l.b16 %v5297
    %v5432 = vunpack.c.h.b16 %v5297
    %v5433 = vunpack.c.l.b16 %v5298
    %v5434 = vunpack.c.h.b16 %v5298
    %v5435 = vunpack.c.l.b16 %v5299
    %v5436 = vunpack.c.h.b16 %v5299
    %v5437 = vunpack.c.l.b16 %v5300
    %v5438 = vunpack.c.h.b16 %v5300
    %v5439 = vunpack.c.l.b16 %v5301
    %v5440 = vunpack.c.h.b16 %v5301
    %v5441 = vunpack.c.l.b16 %v5302
    %v5442 = vunpack.c.h.b16 %v5302
    %v5443 = vunpack.c.l.b16 %v5303
    %v5444 = vunpack.c.h.b16 %v5303
    %v5445 = vunpack.c.l.b16 %v5304
    %v5446 = vunpack.c.h.b16 %v5304
    %v5447 = vunpack.c.l.b16 %v5305
    %v5448 = vunpack.c.h.b16 %v5305
    %v5449 = vunpack.c.l.b16 %v5306
    %v5450 = vunpack.c.h.b16 %v5306
    %v5451 = vunpack.c.l.b16 %v5307
    %v5452 = vunpack.c.h.b16 %v5307
    %v5453 = vunpack.c.l.b16 %v5308
    %v5454 = vunpack.c.h.b16 %v5308
    %v5455 = vunpack.c.l.b16 %v5309
    %v5456 = vunpack.c.h.b16 %v5309
    %v5457 = vunpack.c.l.b16 %v5310
    %v5458 = vunpack.c.h.b16 %v5310
    %v5459 = vunpack.c.l.b16 %v5311
    %v5460 = vunpack.c.h.b16 %v5311
    %v5461 = vunpack.c.l.b16 %v5312
    %v5462 = vunpack.c.h.b16 %v5312
    %v5463 = vunpack.c.l.b16 %v5313
    %v5464 = vunpack.c.h.b16 %v5313
    %v5465 = vunpack.c.l.b16 %v5314
    %v5466 = vunpack.c.h.b16 %v5314
    %v5467 = vunpack.c.l.b16 %v5315
    %v5468 = vunpack.c.h.b16 %v5315
    %v5469 = vunpack.c.l.b16 %v5316
    %v5470 = vunpack.c.h.b16 %v5316
    %v5471 = vunpack.c.l.b16 %v5317
    %v5472 = vunpack.c.h.b16 %v5317
    %v5473 = vunpack.c.l.b16 %v5318
    %v5474 = vunpack.c.h.b16 %v5318
    %v5475 = vunpack.c.l.b16 %v5319
    %v5476 = vunpack.c.h.b16 %v5319
    %v5477 = vunpack.c.l.b16 %v5320
    %v5478 = vunpack.c.h.b16 %v5320
    %v5479 = vunpack.c.l.b16 %v5321
    %v5480 = vunpack.c.h.b16 %v5321
    %v5481 = vunpack.c.l.b16 %v5322
    %v5482 = vunpack.c.h.b16 %v5322
    %v5483 = vunpack.c.l.b16 %v5323
    %v5484 = vunpack.c.h.b16 %v5323
    %v5485 = vunpack.c.l.b16 %v5324
    %v5486 = vunpack.c.h.b16 %v5324
    %v5487 = vunpack.c.l.b16 %v5325
    %v5488 = vunpack.c.h.b16 %v5325
    %v5489 = vunpack.c.l.b16 %v5326
    %v5490 = vunpack.c.h.b16 %v5326
    %v5491 = vunpack.c.l.b16 %v5327
    %v5492 = vunpack.c.h.b16 %v5327
    %v5493 = vunpack.c.l.b16 %v5328
    %v5494 = vunpack.c.h.b16 %v5328
    %v5495 = vunpack.c.l.b16 %v5329
    %v5496 = vunpack.c.h.b16 %v5329
    %v5497 = vunpack.c.l.b16 %v5330
    %v5498 = vunpack.c.h.b16 %v5330
    %v5499 = vunpack.c.l.b16 %v5331
    %v5500 = vunpack.c.h.b16 %v5331
    %v5501 = vunpack.c.l.b16 %v5332
    %v5502 = vunpack.c.h.b16 %v5332
    %v5503 = vunpack.c.l.b16 %v5333
    %v5504 = vunpack.c.h.b16 %v5333
    %v5505 = vunpack.c.l.b16 %v5334
    %v5506 = vunpack.c.h.b16 %v5334
    %v5507 = vunpack.c.l.b16 %v5335
    %v5508 = vunpack.c.h.b16 %v5335
    %v5509 = vunpack.c.l.b16 %v5336
    %v5510 = vunpack.c.h.b16 %v5336
    %v5511 = vunpack.c.l.b16 %v5337
    %v5512 = vunpack.c.h.b16 %v5337
    %v5513 = vunpack.c.l.b16 %v5338
    %v5514 = vunpack.c.h.b16 %v5338
    %v5515 = vunpack.c.l.b16 %v5339
    %v5516 = vunpack.c.h.b16 %v5339
    %v5517 = vunpack.c.l.b16 %v5340
    %v5518 = vunpack.c.h.b16 %v5340
    %v5519 = vunpack.c.l.b16 %v5341
    %v5520 = vunpack.c.h.b16 %v5341
    %v5521 = vunpack.c.l.b16 %v5342
    %v5522 = vunpack.c.h.b16 %v5342
    %v5523 = vunpack.c.l.b16 %v5343
    %v5524 = vunpack.c.h.b16 %v5343
    %v5525 = vunpack.c.l.b16 %v5344
    %v5526 = vunpack.c.h.b16 %v5344
    %v5527 = vunpack.c.l.b16 %v5345
    %v5528 = vunpack.c.h.b16 %v5345
    %v5529 = vunpack.c.l.b16 %v5346
    %v5530 = vunpack.c.h.b16 %v5346
    %v5531 = vunpack.c.l.b16 %v5347
    %v5532 = vunpack.c.h.b16 %v5347
    %v5533 = vunpack.c.l.b16 %v5348
    %v5534 = vunpack.c.h.b16 %v5348
    %v5535 = vunpack.c.l.b16 %v5349
    %v5536 = vunpack.c.h.b16 %v5349
    %v5537 = vunpack.c.l.b16 %v5350
    %v5538 = vunpack.c.h.b16 %v5350
    %v5539 = vunpack.c.l.b16 %v5351
    %v5540 = vunpack.c.h.b16 %v5351
    %v5541 = vunpack.c.l.b16 %v5352
    %v5542 = vunpack.c.h.b16 %v5352
    %v5543 = vunpack.c.l.b16 %v5353
    %v5544 = vunpack.c.h.b16 %v5353
    %v5545 = vunpack.c.l.b16 %v5354
    %v5546 = vunpack.c.h.b16 %v5354
    %v5547 = vpack.c.b16 %v5421, %v5419
    %v5548 = vpack.c.b16 %v5422, %v5420
    %v5549 = vpack.c.b16 %v5425, %v5423
    %v5550 = vpack.c.b16 %v5426, %v5424
    %v5551 = vpack.c.b16 %v5429, %v5427
    %v5552 = vpack.c.b16 %v5430, %v5428
    %v5553 = vpack.c.b16 %v5433, %v5431
    %v5554 = vpack.c.b16 %v5434, %v5432
    %v5555 = vpack.c.b16 %v5437, %v5435
    %v5556 = vpack.c.b16 %v5438, %v5436
    %v5557 = vpack.c.b16 %v5441, %v5439
    %v5558 = vpack.c.b16 %v5442, %v5440
    %v5559 = vpack.c.b16 %v5445, %v5443
    %v5560 = vpack.c.b16 %v5446, %v5444
    %v5561 = vpack.c.b16 %v5449, %v5447
    %v5562 = vpack.c.b16 %v5450, %v5448
    %v5563 = vpack.c.b16 %v5453, %v5451
    %v5564 = vpack.c.b16 %v5454, %v5452
    %v5565 = vpack.c.b16 %v5457, %v5455
    %v5566 = vpack.c.b16 %v5458, %v5456
    %v5567 = vpack.c.b16 %v5461, %v5459
    %v5568 = vpack.c.b16 %v5462, %v5460
    %v5569 = vpack.c.b16 %v5465, %v5463
    %v5570 = vpack.c.b16 %v5466, %v5464
    %v5571 = vpack.c.b16 %v5469, %v5467
    %v5572 = vpack.c.b16 %v5470, %v5468
    %v5573 = vpack.c.b16 %v5473, %v5471
    %v5574 = vpack.c.b16 %v5474, %v5472
    %v5575 = vpack.c.b16 %v5477, %v5475
    %v5576 = vpack.c.b16 %v5478, %v5476
    %v5577 = vpack.c.b16 %v5481, %v5479
    %v5578 = vpack.c.b16 %v5482, %v5480
    %v5579 = vpack.c.b16 %v5485, %v5483
    %v5580 = vpack.c.b16 %v5486, %v5484
    %v5581 = vpack.c.b16 %v5489, %v5487
    %v5582 = vpack.c.b16 %v5490, %v5488
    %v5583 = vpack.c.b16 %v5493, %v5491
    %v5584 = vpack.c.b16 %v5494, %v5492
    %v5585 = vpack.c.b16 %v5497, %v5495
    %v5586 = vpack.c.b16 %v5498, %v5496
    %v5587 = vpack.c.b16 %v5501, %v5499
    %v5588 = vpack.c.b16 %v5502, %v5500
    %v5589 = vpack.c.b16 %v5505, %v5503
    %v5590 = vpack.c.b16 %v5506, %v5504
    %v5591 = vpack.c.b16 %v5509, %v5507
    %v5592 = vpack.c.b16 %v5510, %v5508
    %v5593 = vpack.c.b16 %v5513, %v5511
    %v5594 = vpack.c.b16 %v5514, %v5512
    %v5595 = vpack.c.b16 %v5517, %v5515
    %v5596 = vpack.c.b16 %v5518, %v5516
    %v5597 = vpack.c.b16 %v5521, %v5519
    %v5598 = vpack.c.b16 %v5522, %v5520
    %v5599 = vpack.c.b16 %v5525, %v5523
    %v5600 = vpack.c.b16 %v5526, %v5524
    %v5601 = vpack.c.b16 %v5529, %v5527
    %v5602 = vpack.c.b16 %v5530, %v5528
    %v5603 = vpack.c.b16 %v5533, %v5531
    %v5604 = vpack.c.b16 %v5534, %v5532
    %v5605 = vpack.c.b16 %v5537, %v5535
    %v5606 = vpack.c.b16 %v5538, %v5536
    %v5607 = vpack.c.b16 %v5541, %v5539
    %v5608 = vpack.c.b16 %v5542, %v5540
    %v5609 = vpack.c.b16 %v5545, %v5543
    %v5610 = vpack.c.b16 %v5546, %v5544
    %5675 = vmatprep.subr.bf16.mxu0 %v5548
    %5676 = vmatpush1.bf16.msra.mxu0 %v5547
    %5677 = vmatprep.subr.bf16.mxu0 %v5550
    %5678 = vmatpush1.bf16.msra.mxu0 %v5549
    %5679 = vmatprep.subr.bf16.mxu0 %v5552
    %5680 = vmatpush1.bf16.msra.mxu0 %v5551
    %5681 = vmatprep.subr.bf16.mxu0 %v5554
    %5682 = vmatpush1.bf16.msra.mxu0 %v5553
    %5683 = vmatprep.subr.bf16.mxu0 %v5556
    %5684 = vmatpush1.bf16.msra.mxu0 %v5555
    %5685 = vmatprep.subr.bf16.mxu0 %v5558
    %5686 = vmatpush1.bf16.msra.mxu0 %v5557
    %5687 = vmatprep.subr.bf16.mxu0 %v5560
    %5688 = vmatpush1.bf16.msra.mxu0 %v5559
    %5689 = vmatprep.subr.bf16.mxu0 %v5562
    %5690 = vmatpush1.bf16.msra.mxu0 %v5561
    %5691 = vmatprep.subr.bf16.mxu0 %v5564
    %5692 = vmatpush1.bf16.msra.mxu0 %v5563
    %5693 = vmatprep.subr.bf16.mxu0 %v5566
    %5694 = vmatpush1.bf16.msra.mxu0 %v5565
    %5695 = vmatprep.subr.bf16.mxu0 %v5568
    %5696 = vmatpush1.bf16.msra.mxu0 %v5567
    %5697 = vmatprep.subr.bf16.mxu0 %v5570
    %5698 = vmatpush1.bf16.msra.mxu0 %v5569
    %5699 = vmatprep.subr.bf16.mxu0 %v5572
    %5700 = vmatpush1.bf16.msra.mxu0 %v5571
    %5701 = vmatprep.subr.bf16.mxu0 %v5574
    %5702 = vmatpush1.bf16.msra.mxu0 %v5573
    %5703 = vmatprep.subr.bf16.mxu0 %v5576
    %5704 = vmatpush1.bf16.msra.mxu0 %v5575
    %5705 = vmatprep.subr.bf16.mxu0 %v5578
    %5706 = vmatpush1.bf16.msra.mxu0 %v5577
    %5707 = vmatprep.mubr.bf16.mxu0 %v5278
    %5708 = vmatmul.mubr.bf16.gmra.mrb[0].mxu0 %v5274
    %v5709 = vpop.f32.mrb[0].mxu0
    %v5710 = vadd.f32 0.0, %v5709
    %v5711 = vpop.f32.mrb[0].mxu0
    %v5712 = vadd.f32 0.0, %v5711
    %v5713 = vpop.f32.mrb[0].mxu0
    %v5714 = vpop.f32.mrb[0].mxu0
    %5715 = vdwg.mxu0
    %5716 = vmatprep.subr.bf16.mxu0 %v5580
    %5717 = vmatpush1.bf16.msra.mxu0 %v5579
    %5718 = vmatprep.subr.bf16.mxu0 %v5582
    %5719 = vmatpush1.bf16.msra.mxu0 %v5581
    %5720 = vmatprep.subr.bf16.mxu0 %v5584
    %5721 = vmatpush1.bf16.msra.mxu0 %v5583
    %5722 = vmatprep.subr.bf16.mxu0 %v5586
    %5723 = vmatpush1.bf16.msra.mxu0 %v5585
    %5724 = vmatprep.subr.bf16.mxu0 %v5588
    %5725 = vmatpush1.bf16.msra.mxu0 %v5587
    %5726 = vmatprep.subr.bf16.mxu0 %v5590
    %5727 = vmatpush1.bf16.msra.mxu0 %v5589
    %5728 = vmatprep.subr.bf16.mxu0 %v5592
    %5729 = vmatpush1.bf16.msra.mxu0 %v5591
    %5730 = vmatprep.subr.bf16.mxu0 %v5594
    %5731 = vmatpush1.bf16.msra.mxu0 %v5593
    %5732 = vmatprep.subr.bf16.mxu0 %v5596
    %5733 = vmatpush1.bf16.msra.mxu0 %v5595
    %5734 = vmatprep.subr.bf16.mxu0 %v5598
    %5735 = vmatpush1.bf16.msra.mxu0 %v5597
    %5736 = vmatprep.subr.bf16.mxu0 %v5600
    %5737 = vmatpush1.bf16.msra.mxu0 %v5599
    %5738 = vmatprep.subr.bf16.mxu0 %v5602
    %5739 = vmatpush1.bf16.msra.mxu0 %v5601
    %5740 = vmatprep.subr.bf16.mxu0 %v5604
    %5741 = vmatpush1.bf16.msra.mxu0 %v5603
    %5742 = vmatprep.subr.bf16.mxu0 %v5606
    %5743 = vmatpush1.bf16.msra.mxu0 %v5605
    %5744 = vmatprep.subr.bf16.mxu0 %v5608
    %5745 = vmatpush1.bf16.msra.mxu0 %v5607
    %5746 = vmatprep.subr.bf16.mxu0 %v5610
    %5747 = vmatpush1.bf16.msra.mxu0 %v5609
    %5748 = vmatprep.mubr.bf16.mxu0 %v5288
    %5749 = vmatmul.mubr.bf16.gmra.mrb[0].mxu0 %v5283
    %v5750 = vpop.f32.mrb[0].mxu0
    %v5751 = vadd.f32 %v5710, %v5750
    %v5752 = vpop.f32.mrb[0].mxu0
    %v5753 = vadd.f32 %v5712, %v5752
    %v5754 = vpop.f32.mrb[0].mxu0
    %v5755 = vpop.f32.mrb[0].mxu0
    %5756 = vdwg.mxu0
    %v5821 = vunpack.c.l.b16 %v5192
    %v5822 = vunpack.c.h.b16 %v5192
    %v5823 = vunpack.c.l.b16 %v5193
    %v5824 = vunpack.c.h.b16 %v5193
    %v5825 = vunpack.c.l.b16 %v5194
    %v5826 = vunpack.c.h.b16 %v5194
    %v5827 = vunpack.c.l.b16 %v5195
    %v5828 = vunpack.c.h.b16 %v5195
    %v5829 = vunpack.c.l.b16 %v5196
    %v5830 = vunpack.c.h.b16 %v5196
    %v5831 = vunpack.c.l.b16 %v5197
    %v5832 = vunpack.c.h.b16 %v5197
    %v5833 = vunpack.c.l.b16 %v5198
    %v5834 = vunpack.c.h.b16 %v5198
    %v5835 = vunpack.c.l.b16 %v5199
    %v5836 = vunpack.c.h.b16 %v5199
    %v5837 = vunpack.c.l.b16 %v5200
    %v5838 = vunpack.c.h.b16 %v5200
    %v5839 = vunpack.c.l.b16 %v5201
    %v5840 = vunpack.c.h.b16 %v5201
    %v5841 = vunpack.c.l.b16 %v5202
    %v5842 = vunpack.c.h.b16 %v5202
    %v5843 = vunpack.c.l.b16 %v5203
    %v5844 = vunpack.c.h.b16 %v5203
    %v5845 = vunpack.c.l.b16 %v5204
    %v5846 = vunpack.c.h.b16 %v5204
    %v5847 = vunpack.c.l.b16 %v5205
    %v5848 = vunpack.c.h.b16 %v5205
    %v5849 = vunpack.c.l.b16 %v5206
    %v5850 = vunpack.c.h.b16 %v5206
    %v5851 = vunpack.c.l.b16 %v5207
    %v5852 = vunpack.c.h.b16 %v5207
    %v5853 = vunpack.c.l.b16 %v5208
    %v5854 = vunpack.c.h.b16 %v5208
    %v5855 = vunpack.c.l.b16 %v5209
    %v5856 = vunpack.c.h.b16 %v5209
    %v5857 = vunpack.c.l.b16 %v5210
    %v5858 = vunpack.c.h.b16 %v5210
    %v5859 = vunpack.c.l.b16 %v5211
    %v5860 = vunpack.c.h.b16 %v5211
    %v5861 = vunpack.c.l.b16 %v5212
    %v5862 = vunpack.c.h.b16 %v5212
    %v5863 = vunpack.c.l.b16 %v5213
    %v5864 = vunpack.c.h.b16 %v5213
    %v5865 = vunpack.c.l.b16 %v5214
    %v5866 = vunpack.c.h.b16 %v5214
    %v5867 = vunpack.c.l.b16 %v5215
    %v5868 = vunpack.c.h.b16 %v5215
    %v5869 = vunpack.c.l.b16 %v5216
    %v5870 = vunpack.c.h.b16 %v5216
    %v5871 = vunpack.c.l.b16 %v5217
    %v5872 = vunpack.c.h.b16 %v5217
    %v5873 = vunpack.c.l.b16 %v5218
    %v5874 = vunpack.c.h.b16 %v5218
    %v5875 = vunpack.c.l.b16 %v5219
    %v5876 = vunpack.c.h.b16 %v5219
    %v5877 = vunpack.c.l.b16 %v5220
    %v5878 = vunpack.c.h.b16 %v5220
    %v5879 = vunpack.c.l.b16 %v5221
    %v5880 = vunpack.c.h.b16 %v5221
    %v5881 = vunpack.c.l.b16 %v5222
    %v5882 = vunpack.c.h.b16 %v5222
    %v5883 = vunpack.c.l.b16 %v5223
    %v5884 = vunpack.c.h.b16 %v5223
    %v5885 = vunpack.c.l.b16 %v5224
    %v5886 = vunpack.c.h.b16 %v5224
    %v5887 = vunpack.c.l.b16 %v5225
    %v5888 = vunpack.c.h.b16 %v5225
    %v5889 = vunpack.c.l.b16 %v5226
    %v5890 = vunpack.c.h.b16 %v5226
    %v5891 = vunpack.c.l.b16 %v5227
    %v5892 = vunpack.c.h.b16 %v5227
    %v5893 = vunpack.c.l.b16 %v5228
    %v5894 = vunpack.c.h.b16 %v5228
    %v5895 = vunpack.c.l.b16 %v5229
    %v5896 = vunpack.c.h.b16 %v5229
    %v5897 = vunpack.c.l.b16 %v5230
    %v5898 = vunpack.c.h.b16 %v5230
    %v5899 = vunpack.c.l.b16 %v5231
    %v5900 = vunpack.c.h.b16 %v5231
    %v5901 = vunpack.c.l.b16 %v5232
    %v5902 = vunpack.c.h.b16 %v5232
    %v5903 = vunpack.c.l.b16 %v5233
    %v5904 = vunpack.c.h.b16 %v5233
    %v5905 = vunpack.c.l.b16 %v5234
    %v5906 = vunpack.c.h.b16 %v5234
    %v5907 = vunpack.c.l.b16 %v5235
    %v5908 = vunpack.c.h.b16 %v5235
    %v5909 = vunpack.c.l.b16 %v5236
    %v5910 = vunpack.c.h.b16 %v5236
    %v5911 = vunpack.c.l.b16 %v5237
    %v5912 = vunpack.c.h.b16 %v5237
    %v5913 = vunpack.c.l.b16 %v5238
    %v5914 = vunpack.c.h.b16 %v5238
    %v5915 = vunpack.c.l.b16 %v5239
    %v5916 = vunpack.c.h.b16 %v5239
    %v5917 = vunpack.c.l.b16 %v5240
    %v5918 = vunpack.c.h.b16 %v5240
    %v5919 = vunpack.c.l.b16 %v5241
    %v5920 = vunpack.c.h.b16 %v5241
    %v5921 = vunpack.c.l.b16 %v5242
    %v5922 = vunpack.c.h.b16 %v5242
    %v5923 = vunpack.c.l.b16 %v5243
    %v5924 = vunpack.c.h.b16 %v5243
    %v5925 = vunpack.c.l.b16 %v5244
    %v5926 = vunpack.c.h.b16 %v5244
    %v5927 = vunpack.c.l.b16 %v5245
    %v5928 = vunpack.c.h.b16 %v5245
    %v5929 = vunpack.c.l.b16 %v5246
    %v5930 = vunpack.c.h.b16 %v5246
    %v5931 = vunpack.c.l.b16 %v5247
    %v5932 = vunpack.c.h.b16 %v5247
    %v5933 = vunpack.c.l.b16 %v5248
    %v5934 = vunpack.c.h.b16 %v5248
    %v5935 = vunpack.c.l.b16 %v5249
    %v5936 = vunpack.c.h.b16 %v5249
    %v5937 = vunpack.c.l.b16 %v5250
    %v5938 = vunpack.c.h.b16 %v5250
    %v5939 = vunpack.c.l.b16 %v5251
    %v5940 = vunpack.c.h.b16 %v5251
    %v5941 = vunpack.c.l.b16 %v5252
    %v5942 = vunpack.c.h.b16 %v5252
    %v5943 = vunpack.c.l.b16 %v5253
    %v5944 = vunpack.c.h.b16 %v5253
    %v5945 = vunpack.c.l.b16 %v5254
    %v5946 = vunpack.c.h.b16 %v5254
    %v5947 = vunpack.c.l.b16 %v5255
    %v5948 = vunpack.c.h.b16 %v5255
    %v5949 = vpack.c.b16 %v5823, %v5821
    %v5950 = vpack.c.b16 %v5824, %v5822
    %v5951 = vpack.c.b16 %v5827, %v5825
    %v5952 = vpack.c.b16 %v5828, %v5826
    %v5953 = vpack.c.b16 %v5831, %v5829
    %v5954 = vpack.c.b16 %v5832, %v5830
    %v5955 = vpack.c.b16 %v5835, %v5833
    %v5956 = vpack.c.b16 %v5836, %v5834
    %v5957 = vpack.c.b16 %v5839, %v5837
    %v5958 = vpack.c.b16 %v5840, %v5838
    %v5959 = vpack.c.b16 %v5843, %v5841
    %v5960 = vpack.c.b16 %v5844, %v5842
    %v5961 = vpack.c.b16 %v5847, %v5845
    %v5962 = vpack.c.b16 %v5848, %v5846
    %v5963 = vpack.c.b16 %v5851, %v5849
    %v5964 = vpack.c.b16 %v5852, %v5850
    %v5965 = vpack.c.b16 %v5855, %v5853
    %v5966 = vpack.c.b16 %v5856, %v5854
    %v5967 = vpack.c.b16 %v5859, %v5857
    %v5968 = vpack.c.b16 %v5860, %v5858
    %v5969 = vpack.c.b16 %v5863, %v5861
    %v5970 = vpack.c.b16 %v5864, %v5862
    %v5971 = vpack.c.b16 %v5867, %v5865
    %v5972 = vpack.c.b16 %v5868, %v5866
    %v5973 = vpack.c.b16 %v5871, %v5869
    %v5974 = vpack.c.b16 %v5872, %v5870
    %v5975 = vpack.c.b16 %v5875, %v5873
    %v5976 = vpack.c.b16 %v5876, %v5874
    %v5977 = vpack.c.b16 %v5879, %v5877
    %v5978 = vpack.c.b16 %v5880, %v5878
    %v5979 = vpack.c.b16 %v5883, %v5881
    %v5980 = vpack.c.b16 %v5884, %v5882
    %v5981 = vpack.c.b16 %v5887, %v5885
    %v5982 = vpack.c.b16 %v5888, %v5886
    %v5983 = vpack.c.b16 %v5891, %v5889
    %v5984 = vpack.c.b16 %v5892, %v5890
    %v5985 = vpack.c.b16 %v5895, %v5893
    %v5986 = vpack.c.b16 %v5896, %v5894
    %v5987 = vpack.c.b16 %v5899, %v5897
    %v5988 = vpack.c.b16 %v5900, %v5898
    %v5989 = vpack.c.b16 %v5903, %v5901
    %v5990 = vpack.c.b16 %v5904, %v5902
    %v5991 = vpack.c.b16 %v5907, %v5905
    %v5992 = vpack.c.b16 %v5908, %v5906
    %v5993 = vpack.c.b16 %v5911, %v5909
    %v5994 = vpack.c.b16 %v5912, %v5910
    %v5995 = vpack.c.b16 %v5915, %v5913
    %v5996 = vpack.c.b16 %v5916, %v5914
    %v5997 = vpack.c.b16 %v5919, %v5917
    %v5998 = vpack.c.b16 %v5920, %v5918
    %v5999 = vpack.c.b16 %v5923, %v5921
    %v6000 = vpack.c.b16 %v5924, %v5922
    %v6001 = vpack.c.b16 %v5927, %v5925
    %v6002 = vpack.c.b16 %v5928, %v5926
    %v6003 = vpack.c.b16 %v5931, %v5929
    %v6004 = vpack.c.b16 %v5932, %v5930
    %v6005 = vpack.c.b16 %v5935, %v5933
    %v6006 = vpack.c.b16 %v5936, %v5934
    %v6007 = vpack.c.b16 %v5939, %v5937
    %v6008 = vpack.c.b16 %v5940, %v5938
    %v6009 = vpack.c.b16 %v5943, %v5941
    %v6010 = vpack.c.b16 %v5944, %v5942
    %v6011 = vpack.c.b16 %v5947, %v5945
    %v6012 = vpack.c.b16 %v5948, %v5946
    %6077 = vmatprep.subr.bf16.mxu0 %v5950
    %6078 = vmatpush1.bf16.msra.mxu0 %v5949
    %6079 = vmatprep.subr.bf16.mxu0 %v5952
    %6080 = vmatpush1.bf16.msra.mxu0 %v5951
    %6081 = vmatprep.subr.bf16.mxu0 %v5954
    %6082 = vmatpush1.bf16.msra.mxu0 %v5953
    %6083 = vmatprep.subr.bf16.mxu0 %v5956
    %6084 = vmatpush1.bf16.msra.mxu0 %v5955
    %6085 = vmatprep.subr.bf16.mxu0 %v5958
    %6086 = vmatpush1.bf16.msra.mxu0 %v5957
    %6087 = vmatprep.subr.bf16.mxu0 %v5960
    %6088 = vmatpush1.bf16.msra.mxu0 %v5959
    %6089 = vmatprep.subr.bf16.mxu0 %v5962
    %6090 = vmatpush1.bf16.msra.mxu0 %v5961
    %6091 = vmatprep.subr.bf16.mxu0 %v5964
    %6092 = vmatpush1.bf16.msra.mxu0 %v5963
    %6093 = vmatprep.subr.bf16.mxu0 %v5966
    %6094 = vmatpush1.bf16.msra.mxu0 %v5965
    %6095 = vmatprep.subr.bf16.mxu0 %v5968
    %6096 = vmatpush1.bf16.msra.mxu0 %v5967
    %6097 = vmatprep.subr.bf16.mxu0 %v5970
    %6098 = vmatpush1.bf16.msra.mxu0 %v5969
    %6099 = vmatprep.subr.bf16.mxu0 %v5972
    %6100 = vmatpush1.bf16.msra.mxu0 %v5971
    %6101 = vmatprep.subr.bf16.mxu0 %v5974
    %6102 = vmatpush1.bf16.msra.mxu0 %v5973
    %6103 = vmatprep.subr.bf16.mxu0 %v5976
    %6104 = vmatpush1.bf16.msra.mxu0 %v5975
    %6105 = vmatprep.subr.bf16.mxu0 %v5978
    %6106 = vmatpush1.bf16.msra.mxu0 %v5977
    %6107 = vmatprep.subr.bf16.mxu0 %v5980
    %6108 = vmatpush1.bf16.msra.mxu0 %v5979
    %6109 = vmatprep.mubr.bf16.mxu0 %v5180
    %6110 = vmatmul.mubr.bf16.gmra.mrb[0].mxu0 %v5176
    %v6111 = vpop.f32.mrb[0].mxu0
    %v6112 = vadd.f32 %v5751, %v6111
    %v6113 = vpop.f32.mrb[0].mxu0
    %v6114 = vadd.f32 %v5753, %v6113
    %v6115 = vpop.f32.mrb[0].mxu0
    %v6116 = vpop.f32.mrb[0].mxu0
    %6117 = vdwg.mxu0
    %6118 = vmatprep.subr.bf16.mxu0 %v5982
    %6119 = vmatpush1.bf16.msra.mxu0 %v5981
    %6120 = vmatprep.subr.bf16.mxu0 %v5984
    %6121 = vmatpush1.bf16.msra.mxu0 %v5983
    %6122 = vmatprep.subr.bf16.mxu0 %v5986
    %6123 = vmatpush1.bf16.msra.mxu0 %v5985
    %6124 = vmatprep.subr.bf16.mxu0 %v5988
    %6125 = vmatpush1.bf16.msra.mxu0 %v5987
    %6126 = vmatprep.subr.bf16.mxu0 %v5990
    %6127 = vmatpush1.bf16.msra.mxu0 %v5989
    %6128 = vmatprep.subr.bf16.mxu0 %v5992
    %6129 = vmatpush1.bf16.msra.mxu0 %v5991
    %6130 = vmatprep.subr.bf16.mxu0 %v5994
    %6131 = vmatpush1.bf16.msra.mxu0 %v5993
    %6132 = vmatprep.subr.bf16.mxu0 %v5996
    %6133 = vmatpush1.bf16.msra.mxu0 %v5995
    %6134 = vmatprep.subr.bf16.mxu0 %v5998
    %6135 = vmatpush1.bf16.msra.mxu0 %v5997
    %6136 = vmatprep.subr.bf16.mxu0 %v6000
    %6137 = vmatpush1.bf16.msra.mxu0 %v5999
    %6138 = vmatprep.subr.bf16.mxu0 %v6002
    %6139 = vmatpush1.bf16.msra.mxu0 %v6001
    %6140 = vmatprep.subr.bf16.mxu0 %v6004
    %6141 = vmatpush1.bf16.msra.mxu0 %v6003
    %6142 = vmatprep.subr.bf16.mxu0 %v6006
    %6143 = vmatpush1.bf16.msra.mxu0 %v6005
    %6144 = vmatprep.subr.bf16.mxu0 %v6008
    %6145 = vmatpush1.bf16.msra.mxu0 %v6007
    %6146 = vmatprep.subr.bf16.mxu0 %v6010
    %6147 = vmatpush1.bf16.msra.mxu0 %v6009
    %6148 = vmatprep.subr.bf16.mxu0 %v6012
    %6149 = vmatpush1.bf16.msra.mxu0 %v6011
    %6150 = vmatprep.mubr.bf16.mxu0 %v5190
    %6151 = vmatmul.mubr.bf16.gmra.mrb[0].mxu0 %v5185
    %v6152 = vpop.f32.mrb[0].mxu0
    %v6153 = vadd.f32 %v6112, %v6152
    %v6154 = vpop.f32.mrb[0].mxu0
    %v6155 = vadd.f32 %v6114, %v6154
    %v6156 = vpop.f32.mrb[0].mxu0
    %v6157 = vpop.f32.mrb[0].mxu0
    %6158 = vdwg.mxu0
    %v6160 = vunpack.c.l.s4 1983009808
    %v6161 = vunpack.c.0.s8 %v6160
    %v6162 = vlaneseq
    %v6163 = vshrl.u32 %v6162, 7
    %v6164 = vsub.s32 %v6161, %v6163
    %v6165 = vrot.slane %v5137, %v6164
    %v6167 = vunpack.c.l.s4 1983009808
    %v6168 = vunpack.c.0.s8 %v6167
    %v6169 = vlaneseq
    %v6170 = vshrl.u32 %v6169, 7
    %v6171 = vsub.s32 %v6168, %v6170
    %v6172 = vrot.slane %v5154, %v6171
    %v6173 = vunpack.c.l.b16 %v6165
    %v6174 = vunpack.c.l.b16 %v6172
    %v6175 = vrot.slane %v6174, 7
    %v6176 = vsel %vm5174, %v6175, %v6173
    %v6177 = vpack.c.b16 %v6176, %v6176
    %v6179 = vrot.slane %v6173, 1
    %v6180 = vsel %vm5174, %v6174, %v6179
    %v6181 = vpack.c.b16 %v6180, %v6180
    %v6183 = vrot.slane %v6173, 2
    %v6184 = vrot.slane %v6174, 1
    %v6185 = vsel %vm5174, %v6184, %v6183
    %v6186 = vpack.c.b16 %v6185, %v6185
    %v6188 = vrot.slane %v6173, 3
    %v6189 = vrot.slane %v6174, 2
    %v6190 = vsel %vm5174, %v6189, %v6188
    %v6191 = vpack.c.b16 %v6190, %v6190
    %s6193 = scalar_lea.vmem [#allocation14], 1024
    %v6194 = vld [vmem:[%s6193] sm:$0xff]
    %v6195 = vld [vmem:[%s6193 + $0x8] sm:$0xff]
    %v6196 = vld [vmem:[%s6193 + $0x10] sm:$0xff]
    %v6197 = vld [vmem:[%s6193 + $0x18] sm:$0xff]
    %v6198 = vld [vmem:[%s6193 + $0x20] sm:$0xff]
    %v6199 = vld [vmem:[%s6193 + $0x28] sm:$0xff]
    %v6200 = vld [vmem:[%s6193 + $0x30] sm:$0xff]
    %v6201 = vld [vmem:[%s6193 + $0x38] sm:$0xff]
    %v6202 = vld [vmem:[%s6193 + $0x40] sm:$0xff]
    %v6203 = vld [vmem:[%s6193 + $0x48] sm:$0xff]
    %v6204 = vld [vmem:[%s6193 + $0x50] sm:$0xff]
    %v6205 = vld [vmem:[%s6193 + $0x58] sm:$0xff]
    %v6206 = vld [vmem:[%s6193 + $0x60] sm:$0xff]
    %v6207 = vld [vmem:[%s6193 + $0x68] sm:$0xff]
    %v6208 = vld [vmem:[%s6193 + $0x70] sm:$0xff]
    %v6209 = vld [vmem:[%s6193 + $0x78] sm:$0xff]
    %v6210 = vld [vmem:[%s6193 + $0x80] sm:$0xff]
    %v6211 = vld [vmem:[%s6193 + $0x88] sm:$0xff]
    %v6212 = vld [vmem:[%s6193 + $0x90] sm:$0xff]
    %v6213 = vld [vmem:[%s6193 + $0x98] sm:$0xff]
    %v6214 = vld [vmem:[%s6193 + $0xa0] sm:$0xff]
    %v6215 = vld [vmem:[%s6193 + $0xa8] sm:$0xff]
    %v6216 = vld [vmem:[%s6193 + $0xb0] sm:$0xff]
    %v6217 = vld [vmem:[%s6193 + $0xb8] sm:$0xff]
    %v6218 = vld [vmem:[%s6193 + $0xc0] sm:$0xff]
    %v6219 = vld [vmem:[%s6193 + $0xc8] sm:$0xff]
    %v6220 = vld [vmem:[%s6193 + $0xd0] sm:$0xff]
    %v6221 = vld [vmem:[%s6193 + $0xd8] sm:$0xff]
    %v6222 = vld [vmem:[%s6193 + $0xe0] sm:$0xff]
    %v6223 = vld [vmem:[%s6193 + $0xe8] sm:$0xff]
    %v6224 = vld [vmem:[%s6193 + $0xf0] sm:$0xff]
    %v6225 = vld [vmem:[%s6193 + $0xf8] sm:$0xff]
    %v6226 = vld [vmem:[%s6193 + $0x100] sm:$0xff]
    %v6227 = vld [vmem:[%s6193 + $0x108] sm:$0xff]
    %v6228 = vld [vmem:[%s6193 + $0x110] sm:$0xff]
    %v6229 = vld [vmem:[%s6193 + $0x118] sm:$0xff]
    %v6230 = vld [vmem:[%s6193 + $0x120] sm:$0xff]
    %v6231 = vld [vmem:[%s6193 + $0x128] sm:$0xff]
    %v6232 = vld [vmem:[%s6193 + $0x130] sm:$0xff]
    %v6233 = vld [vmem:[%s6193 + $0x138] sm:$0xff]
    %v6234 = vld [vmem:[%s6193 + $0x140] sm:$0xff]
    %v6235 = vld [vmem:[%s6193 + $0x148] sm:$0xff]
    %v6236 = vld [vmem:[%s6193 + $0x150] sm:$0xff]
    %v6237 = vld [vmem:[%s6193 + $0x158] sm:$0xff]
    %v6238 = vld [vmem:[%s6193 + $0x160] sm:$0xff]
    %v6239 = vld [vmem:[%s6193 + $0x168] sm:$0xff]
    %v6240 = vld [vmem:[%s6193 + $0x170] sm:$0xff]
    %v6241 = vld [vmem:[%s6193 + $0x178] sm:$0xff]
    %v6242 = vld [vmem:[%s6193 + $0x180] sm:$0xff]
    %v6243 = vld [vmem:[%s6193 + $0x188] sm:$0xff]
    %v6244 = vld [vmem:[%s6193 + $0x190] sm:$0xff]
    %v6245 = vld [vmem:[%s6193 + $0x198] sm:$0xff]
    %v6246 = vld [vmem:[%s6193 + $0x1a0] sm:$0xff]
    %v6247 = vld [vmem:[%s6193 + $0x1a8] sm:$0xff]
    %v6248 = vld [vmem:[%s6193 + $0x1b0] sm:$0xff]
    %v6249 = vld [vmem:[%s6193 + $0x1b8] sm:$0xff]
    %v6250 = vld [vmem:[%s6193 + $0x1c0] sm:$0xff]
    %v6251 = vld [vmem:[%s6193 + $0x1c8] sm:$0xff]
    %v6252 = vld [vmem:[%s6193 + $0x1d0] sm:$0xff]
    %v6253 = vld [vmem:[%s6193 + $0x1d8] sm:$0xff]
    %v6254 = vld [vmem:[%s6193 + $0x1e0] sm:$0xff]
    %v6255 = vld [vmem:[%s6193 + $0x1e8] sm:$0xff]
    %v6256 = vld [vmem:[%s6193 + $0x1f0] sm:$0xff]
    %v6257 = vld [vmem:[%s6193 + $0x1f8] sm:$0xff]
    %v6322 = vunpack.c.l.b16 %v6194
    %v6323 = vunpack.c.h.b16 %v6194
    %v6324 = vunpack.c.l.b16 %v6195
    %v6325 = vunpack.c.h.b16 %v6195
    %v6326 = vunpack.c.l.b16 %v6196
    %v6327 = vunpack.c.h.b16 %v6196
    %v6328 = vunpack.c.l.b16 %v6197
    %v6329 = vunpack.c.h.b16 %v6197
    %v6330 = vunpack.c.l.b16 %v6198
    %v6331 = vunpack.c.h.b16 %v6198
    %v6332 = vunpack.c.l.b16 %v6199
    %v6333 = vunpack.c.h.b16 %v6199
    %v6334 = vunpack.c.l.b16 %v6200
    %v6335 = vunpack.c.h.b16 %v6200
    %v6336 = vunpack.c.l.b16 %v6201
    %v6337 = vunpack.c.h.b16 %v6201
    %v6338 = vunpack.c.l.b16 %v6202
    %v6339 = vunpack.c.h.b16 %v6202
    %v6340 = vunpack.c.l.b16 %v6203
    %v6341 = vunpack.c.h.b16 %v6203
    %v6342 = vunpack.c.l.b16 %v6204
    %v6343 = vunpack.c.h.b16 %v6204
    %v6344 = vunpack.c.l.b16 %v6205
    %v6345 = vunpack.c.h.b16 %v6205
    %v6346 = vunpack.c.l.b16 %v6206
    %v6347 = vunpack.c.h.b16 %v6206
    %v6348 = vunpack.c.l.b16 %v6207
    %v6349 = vunpack.c.h.b16 %v6207
    %v6350 = vunpack.c.l.b16 %v6208
    %v6351 = vunpack.c.h.b16 %v6208
    %v6352 = vunpack.c.l.b16 %v6209
    %v6353 = vunpack.c.h.b16 %v6209
    %v6354 = vunpack.c.l.b16 %v6210
    %v6355 = vunpack.c.h.b16 %v6210
    %v6356 = vunpack.c.l.b16 %v6211
    %v6357 = vunpack.c.h.b16 %v6211
    %v6358 = vunpack.c.l.b16 %v6212
    %v6359 = vunpack.c.h.b16 %v6212
    %v6360 = vunpack.c.l.b16 %v6213
    %v6361 = vunpack.c.h.b16 %v6213
    %v6362 = vunpack.c.l.b16 %v6214
    %v6363 = vunpack.c.h.b16 %v6214
    %v6364 = vunpack.c.l.b16 %v6215
    %v6365 = vunpack.c.h.b16 %v6215
    %v6366 = vunpack.c.l.b16 %v6216
    %v6367 = vunpack.c.h.b16 %v6216
    %v6368 = vunpack.c.l.b16 %v6217
    %v6369 = vunpack.c.h.b16 %v6217
    %v6370 = vunpack.c.l.b16 %v6218
    %v6371 = vunpack.c.h.b16 %v6218
    %v6372 = vunpack.c.l.b16 %v6219
    %v6373 = vunpack.c.h.b16 %v6219
    %v6374 = vunpack.c.l.b16 %v6220
    %v6375 = vunpack.c.h.b16 %v6220
    %v6376 = vunpack.c.l.b16 %v6221
    %v6377 = vunpack.c.h.b16 %v6221
    %v6378 = vunpack.c.l.b16 %v6222
    %v6379 = vunpack.c.h.b16 %v6222
    %v6380 = vunpack.c.l.b16 %v6223
    %v6381 = vunpack.c.h.b16 %v6223
    %v6382 = vunpack.c.l.b16 %v6224
    %v6383 = vunpack.c.h.b16 %v6224
    %v6384 = vunpack.c.l.b16 %v6225
    %v6385 = vunpack.c.h.b16 %v6225
    %v6386 = vunpack.c.l.b16 %v6226
    %v6387 = vunpack.c.h.b16 %v6226
    %v6388 = vunpack.c.l.b16 %v6227
    %v6389 = vunpack.c.h.b16 %v6227
    %v6390 = vunpack.c.l.b16 %v6228
    %v6391 = vunpack.c.h.b16 %v6228
    %v6392 = vunpack.c.l.b16 %v6229
    %v6393 = vunpack.c.h.b16 %v6229
    %v6394 = vunpack.c.l.b16 %v6230
    %v6395 = vunpack.c.h.b16 %v6230
    %v6396 = vunpack.c.l.b16 %v6231
    %v6397 = vunpack.c.h.b16 %v6231
    %v6398 = vunpack.c.l.b16 %v6232
    %v6399 = vunpack.c.h.b16 %v6232
    %v6400 = vunpack.c.l.b16 %v6233
    %v6401 = vunpack.c.h.b16 %v6233
    %v6402 = vunpack.c.l.b16 %v6234
    %v6403 = vunpack.c.h.b16 %v6234
    %v6404 = vunpack.c.l.b16 %v6235
    %v6405 = vunpack.c.h.b16 %v6235
    %v6406 = vunpack.c.l.b16 %v6236
    %v6407 = vunpack.c.h.b16 %v6236
    %v6408 = vunpack.c.l.b16 %v6237
    %v6409 = vunpack.c.h.b16 %v6237
    %v6410 = vunpack.c.l.b16 %v6238
    %v6411 = vunpack.c.h.b16 %v6238
    %v6412 = vunpack.c.l.b16 %v6239
    %v6413 = vunpack.c.h.b16 %v6239
    %v6414 = vunpack.c.l.b16 %v6240
    %v6415 = vunpack.c.h.b16 %v6240
    %v6416 = vunpack.c.l.b16 %v6241
    %v6417 = vunpack.c.h.b16 %v6241
    %v6418 = vunpack.c.l.b16 %v6242
    %v6419 = vunpack.c.h.b16 %v6242
    %v6420 = vunpack.c.l.b16 %v6243
    %v6421 = vunpack.c.h.b16 %v6243
    %v6422 = vunpack.c.l.b16 %v6244
    %v6423 = vunpack.c.h.b16 %v6244
    %v6424 = vunpack.c.l.b16 %v6245
    %v6425 = vunpack.c.h.b16 %v6245
    %v6426 = vunpack.c.l.b16 %v6246
    %v6427 = vunpack.c.h.b16 %v6246
    %v6428 = vunpack.c.l.b16 %v6247
    %v6429 = vunpack.c.h.b16 %v6247
    %v6430 = vunpack.c.l.b16 %v6248
    %v6431 = vunpack.c.h.b16 %v6248
    %v6432 = vunpack.c.l.b16 %v6249
    %v6433 = vunpack.c.h.b16 %v6249
    %v6434 = vunpack.c.l.b16 %v6250
    %v6435 = vunpack.c.h.b16 %v6250
    %v6436 = vunpack.c.l.b16 %v6251
    %v6437 = vunpack.c.h.b16 %v6251
    %v6438 = vunpack.c.l.b16 %v6252
    %v6439 = vunpack.c.h.b16 %v6252
    %v6440 = vunpack.c.l.b16 %v6253
    %v6441 = vunpack.c.h.b16 %v6253
    %v6442 = vunpack.c.l.b16 %v6254
    %v6443 = vunpack.c.h.b16 %v6254
    %v6444 = vunpack.c.l.b16 %v6255
    %v6445 = vunpack.c.h.b16 %v6255
    %v6446 = vunpack.c.l.b16 %v6256
    %v6447 = vunpack.c.h.b16 %v6256
    %v6448 = vunpack.c.l.b16 %v6257
    %v6449 = vunpack.c.h.b16 %v6257
    %v6450 = vpack.c.b16 %v6324, %v6322
    %v6451 = vpack.c.b16 %v6325, %v6323
    %v6452 = vpack.c.b16 %v6328, %v6326
    %v6453 = vpack.c.b16 %v6329, %v6327
    %v6454 = vpack.c.b16 %v6332, %v6330
    %v6455 = vpack.c.b16 %v6333, %v6331
    %v6456 = vpack.c.b16 %v6336, %v6334
    %v6457 = vpack.c.b16 %v6337, %v6335
    %v6458 = vpack.c.b16 %v6340, %v6338
    %v6459 = vpack.c.b16 %v6341, %v6339
    %v6460 = vpack.c.b16 %v6344, %v6342
    %v6461 = vpack.c.b16 %v6345, %v6343
    %v6462 = vpack.c.b16 %v6348, %v6346
    %v6463 = vpack.c.b16 %v6349, %v6347
    %v6464 = vpack.c.b16 %v6352, %v6350
    %v6465 = vpack.c.b16 %v6353, %v6351
    %v6466 = vpack.c.b16 %v6356, %v6354
    %v6467 = vpack.c.b16 %v6357, %v6355
    %v6468 = vpack.c.b16 %v6360, %v6358
    %v6469 = vpack.c.b16 %v6361, %v6359
    %v6470 = vpack.c.b16 %v6364, %v6362
    %v6471 = vpack.c.b16 %v6365, %v6363
    %v6472 = vpack.c.b16 %v6368, %v6366
    %v6473 = vpack.c.b16 %v6369, %v6367
    %v6474 = vpack.c.b16 %v6372, %v6370
    %v6475 = vpack.c.b16 %v6373, %v6371
    %v6476 = vpack.c.b16 %v6376, %v6374
    %v6477 = vpack.c.b16 %v6377, %v6375
    %v6478 = vpack.c.b16 %v6380, %v6378
    %v6479 = vpack.c.b16 %v6381, %v6379
    %v6480 = vpack.c.b16 %v6384, %v6382
    %v6481 = vpack.c.b16 %v6385, %v6383
    %v6482 = vpack.c.b16 %v6388, %v6386
    %v6483 = vpack.c.b16 %v6389, %v6387
    %v6484 = vpack.c.b16 %v6392, %v6390
    %v6485 = vpack.c.b16 %v6393, %v6391
    %v6486 = vpack.c.b16 %v6396, %v6394
    %v6487 = vpack.c.b16 %v6397, %v6395
    %v6488 = vpack.c.b16 %v6400, %v6398
    %v6489 = vpack.c.b16 %v6401, %v6399
    %v6490 = vpack.c.b16 %v6404, %v6402
    %v6491 = vpack.c.b16 %v6405, %v6403
    %v6492 = vpack.c.b16 %v6408, %v6406
    %v6493 = vpack.c.b16 %v6409, %v6407
    %v6494 = vpack.c.b16 %v6412, %v6410
    %v6495 = vpack.c.b16 %v6413, %v6411
    %v6496 = vpack.c.b16 %v6416, %v6414
    %v6497 = vpack.c.b16 %v6417, %v6415
    %v6498 = vpack.c.b16 %v6420, %v6418
    %v6499 = vpack.c.b16 %v6421, %v6419
    %v6500 = vpack.c.b16 %v6424, %v6422
    %v6501 = vpack.c.b16 %v6425, %v6423
    %v6502 = vpack.c.b16 %v6428, %v6426
    %v6503 = vpack.c.b16 %v6429, %v6427
    %v6504 = vpack.c.b16 %v6432, %v6430
    %v6505 = vpack.c.b16 %v6433, %v6431
    %v6506 = vpack.c.b16 %v6436, %v6434
    %v6507 = vpack.c.b16 %v6437, %v6435
    %v6508 = vpack.c.b16 %v6440, %v6438
    %v6509 = vpack.c.b16 %v6441, %v6439
    %v6510 = vpack.c.b16 %v6444, %v6442
    %v6511 = vpack.c.b16 %v6445, %v6443
    %v6512 = vpack.c.b16 %v6448, %v6446
    %v6513 = vpack.c.b16 %v6449, %v6447
    %6578 = vmatprep.subr.bf16.mxu0 %v6451
    %6579 = vmatpush1.bf16.msra.mxu0 %v6450
    %6580 = vmatprep.subr.bf16.mxu0 %v6453
    %6581 = vmatpush1.bf16.msra.mxu0 %v6452
    %6582 = vmatprep.subr.bf16.mxu0 %v6455
    %6583 = vmatpush1.bf16.msra.mxu0 %v6454
    %6584 = vmatprep.subr.bf16.mxu0 %v6457
    %6585 = vmatpush1.bf16.msra.mxu0 %v6456
    %6586 = vmatprep.subr.bf16.mxu0 %v6459
    %6587 = vmatpush1.bf16.msra.mxu0 %v6458
    %6588 = vmatprep.subr.bf16.mxu0 %v6461
    %6589 = vmatpush1.bf16.msra.mxu0 %v6460
    %6590 = vmatprep.subr.bf16.mxu0 %v6463
    %6591 = vmatpush1.bf16.msra.mxu0 %v6462
    %6592 = vmatprep.subr.bf16.mxu0 %v6465
    %6593 = vmatpush1.bf16.msra.mxu0 %v6464
    %6594 = vmatprep.subr.bf16.mxu0 %v6467
    %6595 = vmatpush1.bf16.msra.mxu0 %v6466
    %6596 = vmatprep.subr.bf16.mxu0 %v6469
    %6597 = vmatpush1.bf16.msra.mxu0 %v6468
    %6598 = vmatprep.subr.bf16.mxu0 %v6471
    %6599 = vmatpush1.bf16.msra.mxu0 %v6470
    %6600 = vmatprep.subr.bf16.mxu0 %v6473
    %6601 = vmatpush1.bf16.msra.mxu0 %v6472
    %6602 = vmatprep.subr.bf16.mxu0 %v6475
    %6603 = vmatpush1.bf16.msra.mxu0 %v6474
    %6604 = vmatprep.subr.bf16.mxu0 %v6477
    %6605 = vmatpush1.bf16.msra.mxu0 %v6476
    %6606 = vmatprep.subr.bf16.mxu0 %v6479
    %6607 = vmatpush1.bf16.msra.mxu0 %v6478
    %6608 = vmatprep.subr.bf16.mxu0 %v6481
    %6609 = vmatpush1.bf16.msra.mxu0 %v6480
    %6610 = vmatprep.mubr.bf16.mxu0 %v6181
    %6611 = vmatmul.mubr.bf16.gmra.mrb[0].mxu0 %v6177
    %v6612 = vpop.f32.mrb[0].mxu0
    %v6613 = vadd.f32 0.0, %v6612
    %v6614 = vpop.f32.mrb[0].mxu0
    %v6615 = vadd.f32 0.0, %v6614
    %v6616 = vpop.f32.mrb[0].mxu0
    %v6617 = vpop.f32.mrb[0].mxu0
    %6618 = vdwg.mxu0
    %6619 = vmatprep.subr.bf16.mxu0 %v6483
    %6620 = vmatpush1.bf16.msra.mxu0 %v6482
    %6621 = vmatprep.subr.bf16.mxu0 %v6485
    %6622 = vmatpush1.bf16.msra.mxu0 %v6484
    %6623 = vmatprep.subr.bf16.mxu0 %v6487
    %6624 = vmatpush1.bf16.msra.mxu0 %v6486
    %6625 = vmatprep.subr.bf16.mxu0 %v6489
    %6626 = vmatpush1.bf16.msra.mxu0 %v6488
    %6627 = vmatprep.subr.bf16.mxu0 %v6491
    %6628 = vmatpush1.bf16.msra.mxu0 %v6490
    %6629 = vmatprep.subr.bf16.mxu0 %v6493
    %6630 = vmatpush1.bf16.msra.mxu0 %v6492
    %6631 = vmatprep.subr.bf16.mxu0 %v6495
    %6632 = vmatpush1.bf16.msra.mxu0 %v6494
    %6633 = vmatprep.subr.bf16.mxu0 %v6497
    %6634 = vmatpush1.bf16.msra.mxu0 %v6496
    %6635 = vmatprep.subr.bf16.mxu0 %v6499
    %6636 = vmatpush1.bf16.msra.mxu0 %v6498
    %6637 = vmatprep.subr.bf16.mxu0 %v6501
    %6638 = vmatpush1.bf16.msra.mxu0 %v6500
    %6639 = vmatprep.subr.bf16.mxu0 %v6503
    %6640 = vmatpush1.bf16.msra.mxu0 %v6502
    %6641 = vmatprep.subr.bf16.mxu0 %v6505
    %6642 = vmatpush1.bf16.msra.mxu0 %v6504
    %6643 = vmatprep.subr.bf16.mxu0 %v6507
    %6644 = vmatpush1.bf16.msra.mxu0 %v6506
    %6645 = vmatprep.subr.bf16.mxu0 %v6509
    %6646 = vmatpush1.bf16.msra.mxu0 %v6508
    %6647 = vmatprep.subr.bf16.mxu0 %v6511
    %6648 = vmatpush1.bf16.msra.mxu0 %v6510
    %6649 = vmatprep.subr.bf16.mxu0 %v6513
    %6650 = vmatpush1.bf16.msra.mxu0 %v6512
    %6651 = vmatprep.mubr.bf16.mxu0 %v6191
    %6652 = vmatmul.mubr.bf16.gmra.mrb[0].mxu0 %v6186
    %v6653 = vpop.f32.mrb[0].mxu0
    %v6654 = vadd.f32 %v6613, %v6653
    %v6655 = vpop.f32.mrb[0].mxu0
    %v6656 = vadd.f32 %v6615, %v6655
    %v6657 = vpop.f32.mrb[0].mxu0
    %v6658 = vpop.f32.mrb[0].mxu0
    %6659 = vdwg.mxu0
    %v6660 = vadd.f32 %v6153, %v6654
    %v6661 = vadd.f32 %v6155, %v6656
    %v6663 = vunpack.c.l.s4 1983009808
    %v6664 = vunpack.c.0.s8 %v6663
    %v6665 = vlaneseq
    %v6666 = vshrl.u32 %v6665, 7
    %v6667 = vsub.s32 %v6664, %v6666
    %v6668 = vrot.slane %v5139, %v6667
    %v6670 = vunpack.c.l.s4 1983009808
    %v6671 = vunpack.c.0.s8 %v6670
    %v6672 = vlaneseq
    %v6673 = vshrl.u32 %v6672, 7
    %v6674 = vsub.s32 %v6671, %v6673
    %v6675 = vrot.slane %v5156, %v6674
    %v6676 = vunpack.c.l.b16 %v6668
    %v6677 = vunpack.c.l.b16 %v6675
    %v6678 = vrot.slane %v6677, 7
    %v6679 = vsel %vm5174, %v6678, %v6676
    %v6680 = vpack.c.b16 %v6679, %v6679
    %v6682 = vrot.slane %v6676, 1
    %v6683 = vsel %vm5174, %v6677, %v6682
    %v6684 = vpack.c.b16 %v6683, %v6683
    %v6686 = vrot.slane %v6676, 2
    %v6687 = vrot.slane %v6677, 1
    %v6688 = vsel %vm5174, %v6687, %v6686
    %v6689 = vpack.c.b16 %v6688, %v6688
    %v6691 = vrot.slane %v6676, 3
    %v6692 = vrot.slane %v6677, 2
    %v6693 = vsel %vm5174, %v6692, %v6691
    %v6694 = vpack.c.b16 %v6693, %v6693
    %s6696 = scalar_lea.vmem [#allocation14], 1536
    %v6697 = vld [vmem:[%s6696] sm:$0xff]
    %v6698 = vld [vmem:[%s6696 + $0x8] sm:$0xff]
    %v6699 = vld [vmem:[%s6696 + $0x10] sm:$0xff]
    %v6700 = vld [vmem:[%s6696 + $0x18] sm:$0xff]
    %v6701 = vld [vmem:[%s6696 + $0x20] sm:$0xff]
    %v6702 = vld [vmem:[%s6696 + $0x28] sm:$0xff]
    %v6703 = vld [vmem:[%s6696 + $0x30] sm:$0xff]
    %v6704 = vld [vmem:[%s6696 + $0x38] sm:$0xff]
    %v6705 = vld [vmem:[%s6696 + $0x40] sm:$0xff]
    %v6706 = vld [vmem:[%s6696 + $0x48] sm:$0xff]
    %v6707 = vld [vmem:[%s6696 + $0x50] sm:$0xff]
    %v6708 = vld [vmem:[%s6696 + $0x58] sm:$0xff]
    %v6709 = vld [vmem:[%s6696 + $0x60] sm:$0xff]
    %v6710 = vld [vmem:[%s6696 + $0x68] sm:$0xff]
    %v6711 = vld [vmem:[%s6696 + $0x70] sm:$0xff]
    %v6712 = vld [vmem:[%s6696 + $0x78] sm:$0xff]
    %v6713 = vld [vmem:[%s6696 + $0x80] sm:$0xff]
    %v6714 = vld [vmem:[%s6696 + $0x88] sm:$0xff]
    %v6715 = vld [vmem:[%s6696 + $0x90] sm:$0xff]
    %v6716 = vld [vmem:[%s6696 + $0x98] sm:$0xff]
    %v6717 = vld [vmem:[%s6696 + $0xa0] sm:$0xff]
    %v6718 = vld [vmem:[%s6696 + $0xa8] sm:$0xff]
    %v6719 = vld [vmem:[%s6696 + $0xb0] sm:$0xff]
    %v6720 = vld [vmem:[%s6696 + $0xb8] sm:$0xff]
    %v6721 = vld [vmem:[%s6696 + $0xc0] sm:$0xff]
    %v6722 = vld [vmem:[%s6696 + $0xc8] sm:$0xff]
    %v6723 = vld [vmem:[%s6696 + $0xd0] sm:$0xff]
    %v6724 = vld [vmem:[%s6696 + $0xd8] sm:$0xff]
    %v6725 = vld [vmem:[%s6696 + $0xe0] sm:$0xff]
    %v6726 = vld [vmem:[%s6696 + $0xe8] sm:$0xff]
    %v6727 = vld [vmem:[%s6696 + $0xf0] sm:$0xff]
    %v6728 = vld [vmem:[%s6696 + $0xf8] sm:$0xff]
    %v6729 = vld [vmem:[%s6696 + $0x100] sm:$0xff]
    %v6730 = vld [vmem:[%s6696 + $0x108] sm:$0xff]
    %v6731 = vld [vmem:[%s6696 + $0x110] sm:$0xff]
    %v6732 = vld [vmem:[%s6696 + $0x118] sm:$0xff]
    %v6733 = vld [vmem:[%s6696 + $0x120] sm:$0xff]
    %v6734 = vld [vmem:[%s6696 + $0x128] sm:$0xff]
    %v6735 = vld [vmem:[%s6696 + $0x130] sm:$0xff]
    %v6736 = vld [vmem:[%s6696 + $0x138] sm:$0xff]
    %v6737 = vld [vmem:[%s6696 + $0x140] sm:$0xff]
    %v6738 = vld [vmem:[%s6696 + $0x148] sm:$0xff]
    %v6739 = vld [vmem:[%s6696 + $0x150] sm:$0xff]
    %v6740 = vld [vmem:[%s6696 + $0x158] sm:$0xff]
    %v6741 = vld [vmem:[%s6696 + $0x160] sm:$0xff]
    %v6742 = vld [vmem:[%s6696 + $0x168] sm:$0xff]
    %v6743 = vld [vmem:[%s6696 + $0x170] sm:$0xff]
    %v6744 = vld [vmem:[%s6696 + $0x178] sm:$0xff]
    %v6745 = vld [vmem:[%s6696 + $0x180] sm:$0xff]
    %v6746 = vld [vmem:[%s6696 + $0x188] sm:$0xff]
    %v6747 = vld [vmem:[%s6696 + $0x190] sm:$0xff]
    %v6748 = vld [vmem:[%s6696 + $0x198] sm:$0xff]
    %v6749 = vld [vmem:[%s6696 + $0x1a0] sm:$0xff]
    %v6750 = vld [vmem:[%s6696 + $0x1a8] sm:$0xff]
    %v6751 = vld [vmem:[%s6696 + $0x1b0] sm:$0xff]
    %v6752 = vld [vmem:[%s6696 + $0x1b8] sm:$0xff]
    %v6753 = vld [vmem:[%s6696 + $0x1c0] sm:$0xff]
    %v6754 = vld [vmem:[%s6696 + $0x1c8] sm:$0xff]
    %v6755 = vld [vmem:[%s6696 + $0x1d0] sm:$0xff]
    %v6756 = vld [vmem:[%s6696 + $0x1d8] sm:$0xff]
    %v6757 = vld [vmem:[%s6696 + $0x1e0] sm:$0xff]
    %v6758 = vld [vmem:[%s6696 + $0x1e8] sm:$0xff]
    %v6759 = vld [vmem:[%s6696 + $0x1f0] sm:$0xff]
    %v6760 = vld [vmem:[%s6696 + $0x1f8] sm:$0xff]
    %v6825 = vunpack.c.l.b16 %v6697
    %v6826 = vunpack.c.h.b16 %v6697
    %v6827 = vunpack.c.l.b16 %v6698
    %v6828 = vunpack.c.h.b16 %v6698
    %v6829 = vunpack.c.l.b16 %v6699
    %v6830 = vunpack.c.h.b16 %v6699
    %v6831 = vunpack.c.l.b16 %v6700
    %v6832 = vunpack.c.h.b16 %v6700
    %v6833 = vunpack.c.l.b16 %v6701
    %v6834 = vunpack.c.h.b16 %v6701
    %v6835 = vunpack.c.l.b16 %v6702
    %v6836 = vunpack.c.h.b16 %v6702
    %v6837 = vunpack.c.l.b16 %v6703
    %v6838 = vunpack.c.h.b16 %v6703
    %v6839 = vunpack.c.l.b16 %v6704
    %v6840 = vunpack.c.h.b16 %v6704
    %v6841 = vunpack.c.l.b16 %v6705
    %v6842 = vunpack.c.h.b16 %v6705
    %v6843 = vunpack.c.l.b16 %v6706
    %v6844 = vunpack.c.h.b16 %v6706
    %v6845 = vunpack.c.l.b16 %v6707
    %v6846 = vunpack.c.h.b16 %v6707
    %v6847 = vunpack.c.l.b16 %v6708
    %v6848 = vunpack.c.h.b16 %v6708
    %v6849 = vunpack.c.l.b16 %v6709
    %v6850 = vunpack.c.h.b16 %v6709
    %v6851 = vunpack.c.l.b16 %v6710
    %v6852 = vunpack.c.h.b16 %v6710
    %v6853 = vunpack.c.l.b16 %v6711
    %v6854 = vunpack.c.h.b16 %v6711
    %v6855 = vunpack.c.l.b16 %v6712
    %v6856 = vunpack.c.h.b16 %v6712
    %v6857 = vunpack.c.l.b16 %v6713
    %v6858 = vunpack.c.h.b16 %v6713
    %v6859 = vunpack.c.l.b16 %v6714
    %v6860 = vunpack.c.h.b16 %v6714
    %v6861 = vunpack.c.l.b16 %v6715
    %v6862 = vunpack.c.h.b16 %v6715
    %v6863 = vunpack.c.l.b16 %v6716
    %v6864 = vunpack.c.h.b16 %v6716
    %v6865 = vunpack.c.l.b16 %v6717
    %v6866 = vunpack.c.h.b16 %v6717
    %v6867 = vunpack.c.l.b16 %v6718
    %v6868 = vunpack.c.h.b16 %v6718
    %v6869 = vunpack.c.l.b16 %v6719
    %v6870 = vunpack.c.h.b16 %v6719
    %v6871 = vunpack.c.l.b16 %v6720
    %v6872 = vunpack.c.h.b16 %v6720
    %v6873 = vunpack.c.l.b16 %v6721
    %v6874 = vunpack.c.h.b16 %v6721
    %v6875 = vunpack.c.l.b16 %v6722
    %v6876 = vunpack.c.h.b16 %v6722
    %v6877 = vunpack.c.l.b16 %v6723
    %v6878 = vunpack.c.h.b16 %v6723
    %v6879 = vunpack.c.l.b16 %v6724
    %v6880 = vunpack.c.h.b16 %v6724
    %v6881 = vunpack.c.l.b16 %v6725
    %v6882 = vunpack.c.h.b16 %v6725
    %v6883 = vunpack.c.l.b16 %v6726
    %v6884 = vunpack.c.h.b16 %v6726
    %v6885 = vunpack.c.l.b16 %v6727
    %v6886 = vunpack.c.h.b16 %v6727
    %v6887 = vunpack.c.l.b16 %v6728
    %v6888 = vunpack.c.h.b16 %v6728
    %v6889 = vunpack.c.l.b16 %v6729
    %v6890 = vunpack.c.h.b16 %v6729
    %v6891 = vunpack.c.l.b16 %v6730
    %v6892 = vunpack.c.h.b16 %v6730
    %v6893 = vunpack.c.l.b16 %v6731
    %v6894 = vunpack.c.h.b16 %v6731
    %v6895 = vunpack.c.l.b16 %v6732
    %v6896 = vunpack.c.h.b16 %v6732
    %v6897 = vunpack.c.l.b16 %v6733
    %v6898 = vunpack.c.h.b16 %v6733
    %v6899 = vunpack.c.l.b16 %v6734
    %v6900 = vunpack.c.h.b16 %v6734
    %v6901 = vunpack.c.l.b16 %v6735
    %v6902 = vunpack.c.h.b16 %v6735
    %v6903 = vunpack.c.l.b16 %v6736
    %v6904 = vunpack.c.h.b16 %v6736
    %v6905 = vunpack.c.l.b16 %v6737
    %v6906 = vunpack.c.h.b16 %v6737
    %v6907 = vunpack.c.l.b16 %v6738
    %v6908 = vunpack.c.h.b16 %v6738
    %v6909 = vunpack.c.l.b16 %v6739
    %v6910 = vunpack.c.h.b16 %v6739
    %v6911 = vunpack.c.l.b16 %v6740
    %v6912 = vunpack.c.h.b16 %v6740
    %v6913 = vunpack.c.l.b16 %v6741
    %v6914 = vunpack.c.h.b16 %v6741
    %v6915 = vunpack.c.l.b16 %v6742
    %v6916 = vunpack.c.h.b16 %v6742
    %v6917 = vunpack.c.l.b16 %v6743
    %v6918 = vunpack.c.h.b16 %v6743
    %v6919 = vunpack.c.l.b16 %v6744
    %v6920 = vunpack.c.h.b16 %v6744
    %v6921 = vunpack.c.l.b16 %v6745
    %v6922 = vunpack.c.h.b16 %v6745
    %v6923 = vunpack.c.l.b16 %v6746
    %v6924 = vunpack.c.h.b16 %v6746
    %v6925 = vunpack.c.l.b16 %v6747
    %v6926 = vunpack.c.h.b16 %v6747
    %v6927 = vunpack.c.l.b16 %v6748
    %v6928 = vunpack.c.h.b16 %v6748
    %v6929 = vunpack.c.l.b16 %v6749
    %v6930 = vunpack.c.h.b16 %v6749
    %v6931 = vunpack.c.l.b16 %v6750
    %v6932 = vunpack.c.h.b16 %v6750
    %v6933 = vunpack.c.l.b16 %v6751
    %v6934 = vunpack.c.h.b16 %v6751
    %v6935 = vunpack.c.l.b16 %v6752
    %v6936 = vunpack.c.h.b16 %v6752
    %v6937 = vunpack.c.l.b16 %v6753
    %v6938 = vunpack.c.h.b16 %v6753
    %v6939 = vunpack.c.l.b16 %v6754
    %v6940 = vunpack.c.h.b16 %v6754
    %v6941 = vunpack.c.l.b16 %v6755
    %v6942 = vunpack.c.h.b16 %v6755
    %v6943 = vunpack.c.l.b16 %v6756
    %v6944 = vunpack.c.h.b16 %v6756
    %v6945 = vunpack.c.l.b16 %v6757
    %v6946 = vunpack.c.h.b16 %v6757
    %v6947 = vunpack.c.l.b16 %v6758
    %v6948 = vunpack.c.h.b16 %v6758
    %v6949 = vunpack.c.l.b16 %v6759
    %v6950 = vunpack.c.h.b16 %v6759
    %v6951 = vunpack.c.l.b16 %v6760
    %v6952 = vunpack.c.h.b16 %v6760
    %v6953 = vpack.c.b16 %v6827, %v6825
    %v6954 = vpack.c.b16 %v6828, %v6826
    %v6955 = vpack.c.b16 %v6831, %v6829
    %v6956 = vpack.c.b16 %v6832, %v6830
    %v6957 = vpack.c.b16 %v6835, %v6833
    %v6958 = vpack.c.b16 %v6836, %v6834
    %v6959 = vpack.c.b16 %v6839, %v6837
    %v6960 = vpack.c.b16 %v6840, %v6838
    %v6961 = vpack.c.b16 %v6843, %v6841
    %v6962 = vpack.c.b16 %v6844, %v6842
    %v6963 = vpack.c.b16 %v6847, %v6845
    %v6964 = vpack.c.b16 %v6848, %v6846
    %v6965 = vpack.c.b16 %v6851, %v6849
    %v6966 = vpack.c.b16 %v6852, %v6850
    %v6967 = vpack.c.b16 %v6855, %v6853
    %v6968 = vpack.c.b16 %v6856, %v6854
    %v6969 = vpack.c.b16 %v6859, %v6857
    %v6970 = vpack.c.b16 %v6860, %v6858
    %v6971 = vpack.c.b16 %v6863, %v6861
    %v6972 = vpack.c.b16 %v6864, %v6862
    %v6973 = vpack.c.b16 %v6867, %v6865
    %v6974 = vpack.c.b16 %v6868, %v6866
    %v6975 = vpack.c.b16 %v6871, %v6869
    %v6976 = vpack.c.b16 %v6872, %v6870
    %v6977 = vpack.c.b16 %v6875, %v6873
    %v6978 = vpack.c.b16 %v6876, %v6874
    %v6979 = vpack.c.b16 %v6879, %v6877
    %v6980 = vpack.c.b16 %v6880, %v6878
    %v6981 = vpack.c.b16 %v6883, %v6881
    %v6982 = vpack.c.b16 %v6884, %v6882
    %v6983 = vpack.c.b16 %v6887, %v6885
    %v6984 = vpack.c.b16 %v6888, %v6886
    %v6985 = vpack.c.b16 %v6891, %v6889
    %v6986 = vpack.c.b16 %v6892, %v6890
    %v6987 = vpack.c.b16 %v6895, %v6893
    %v6988 = vpack.c.b16 %v6896, %v6894
    %v6989 = vpack.c.b16 %v6899, %v6897
    %v6990 = vpack.c.b16 %v6900, %v6898
    %v6991 = vpack.c.b16 %v6903, %v6901
    %v6992 = vpack.c.b16 %v6904, %v6902
    %v6993 = vpack.c.b16 %v6907, %v6905
    %v6994 = vpack.c.b16 %v6908, %v6906
    %v6995 = vpack.c.b16 %v6911, %v6909
    %v6996 = vpack.c.b16 %v6912, %v6910
    %v6997 = vpack.c.b16 %v6915, %v6913
    %v6998 = vpack.c.b16 %v6916, %v6914
    %v6999 = vpack.c.b16 %v6919, %v6917
    %v7000 = vpack.c.b16 %v6920, %v6918
    %v7001 = vpack.c.b16 %v6923, %v6921
    %v7002 = vpack.c.b16 %v6924, %v6922
    %v7003 = vpack.c.b16 %v6927, %v6925
    %v7004 = vpack.c.b16 %v6928, %v6926
    %v7005 = vpack.c.b16 %v6931, %v6929
    %v7006 = vpack.c.b16 %v6932, %v6930
    %v7007 = vpack.c.b16 %v6935, %v6933
    %v7008 = vpack.c.b16 %v6936, %v6934
    %v7009 = vpack.c.b16 %v6939, %v6937
    %v7010 = vpack.c.b16 %v6940, %v6938
    %v7011 = vpack.c.b16 %v6943, %v6941
    %v7012 = vpack.c.b16 %v6944, %v6942
    %v7013 = vpack.c.b16 %v6947, %v6945
    %v7014 = vpack.c.b16 %v6948, %v6946
    %v7015 = vpack.c.b16 %v6951, %v6949
    %v7016 = vpack.c.b16 %v6952, %v6950
    %7081 = vmatprep.subr.bf16.mxu0 %v6954
    %7082 = vmatpush1.bf16.msra.mxu0 %v6953
    %7083 = vmatprep.subr.bf16.mxu0 %v6956
    %7084 = vmatpush1.bf16.msra.mxu0 %v6955
    %7085 = vmatprep.subr.bf16.mxu0 %v6958
    %7086 = vmatpush1.bf16.msra.mxu0 %v6957
    %7087 = vmatprep.subr.bf16.mxu0 %v6960
    %7088 = vmatpush1.bf16.msra.mxu0 %v6959
    %7089 = vmatprep.subr.bf16.mxu0 %v6962
    %7090 = vmatpush1.bf16.msra.mxu0 %v6961
    %7091 = vmatprep.subr.bf16.mxu0 %v6964
    %7092 = vmatpush1.bf16.msra.mxu0 %v6963
    %7093 = vmatprep.subr.bf16.mxu0 %v6966
    %7094 = vmatpush1.bf16.msra.mxu0 %v6965
    %7095 = vmatprep.subr.bf16.mxu0 %v6968
    %7096 = vmatpush1.bf16.msra.mxu0 %v6967
    %7097 = vmatprep.subr.bf16.mxu0 %v6970
    %7098 = vmatpush1.bf16.msra.mxu0 %v6969
    %7099 = vmatprep.subr.bf16.mxu0 %v6972
    %7100 = vmatpush1.bf16.msra.mxu0 %v6971
    %7101 = vmatprep.subr.bf16.mxu0 %v6974
    %7102 = vmatpush1.bf16.msra.mxu0 %v6973
    %7103 = vmatprep.subr.bf16.mxu0 %v6976
    %7104 = vmatpush1.bf16.msra.mxu0 %v6975
    %7105 = vmatprep.subr.bf16.mxu0 %v6978
    %7106 = vmatpush1.bf16.msra.mxu0 %v6977
    %7107 = vmatprep.subr.bf16.mxu0 %v6980
    %7108 = vmatpush1.bf16.msra.mxu0 %v6979
    %7109 = vmatprep.subr.bf16.mxu0 %v6982
    %7110 = vmatpush1.bf16.msra.mxu0 %v6981
    %7111 = vmatprep.subr.bf16.mxu0 %v6984
    %7112 = vmatpush1.bf16.msra.mxu0 %v6983
    %7113 = vmatprep.mubr.bf16.mxu0 %v6684
    %7114 = vmatmul.mubr.bf16.gmra.mrb[0].mxu0 %v6680
    %v7115 = vpop.f32.mrb[0].mxu0
    %v7116 = vadd.f32 0.0, %v7115
    %v7117 = vpop.f32.mrb[0].mxu0
    %v7118 = vadd.f32 0.0, %v7117
    %v7119 = vpop.f32.mrb[0].mxu0
    %v7120 = vpop.f32.mrb[0].mxu0
    %7121 = vdwg.mxu0
    %7122 = vmatprep.subr.bf16.mxu0 %v6986
    %7123 = vmatpush1.bf16.msra.mxu0 %v6985
    %7124 = vmatprep.subr.bf16.mxu0 %v6988
    %7125 = vmatpush1.bf16.msra.mxu0 %v6987
    %7126 = vmatprep.subr.bf16.mxu0 %v6990
    %7127 = vmatpush1.bf16.msra.mxu0 %v6989
    %7128 = vmatprep.subr.bf16.mxu0 %v6992
    %7129 = vmatpush1.bf16.msra.mxu0 %v6991
    %7130 = vmatprep.subr.bf16.mxu0 %v6994
    %7131 = vmatpush1.bf16.msra.mxu0 %v6993
    %7132 = vmatprep.subr.bf16.mxu0 %v6996
    %7133 = vmatpush1.bf16.msra.mxu0 %v6995
    %7134 = vmatprep.subr.bf16.mxu0 %v6998
    %7135 = vmatpush1.bf16.msra.mxu0 %v6997
    %7136 = vmatprep.subr.bf16.mxu0 %v7000
    %7137 = vmatpush1.bf16.msra.mxu0 %v6999
    %7138 = vmatprep.subr.bf16.mxu0 %v7002
    %7139 = vmatpush1.bf16.msra.mxu0 %v7001
    %7140 = vmatprep.subr.bf16.mxu0 %v7004
    %7141 = vmatpush1.bf16.msra.mxu0 %v7003
    %7142 = vmatprep.subr.bf16.mxu0 %v7006
    %7143 = vmatpush1.bf16.msra.mxu0 %v7005
    %7144 = vmatprep.subr.bf16.mxu0 %v7008
    %7145 = vmatpush1.bf16.msra.mxu0 %v7007
    %7146 = vmatprep.subr.bf16.mxu0 %v7010
    %7147 = vmatpush1.bf16.msra.mxu0 %v7009
    %7148 = vmatprep.subr.bf16.mxu0 %v7012
    %7149 = vmatpush1.bf16.msra.mxu0 %v7011
    %7150 = vmatprep.subr.bf16.mxu0 %v7014
    %7151 = vmatpush1.bf16.msra.mxu0 %v7013
    %7152 = vmatprep.subr.bf16.mxu0 %v7016
    %7153 = vmatpush1.bf16.msra.mxu0 %v7015
    %7154 = vmatprep.mubr.bf16.mxu0 %v6694
    %7155 = vmatmul.mubr.bf16.gmra.mrb[0].mxu0 %v6689
    %v7156 = vpop.f32.mrb[0].mxu0
    %v7157 = vadd.f32 %v7116, %v7156
    %v7158 = vpop.f32.mrb[0].mxu0
    %v7159 = vadd.f32 %v7118, %v7158
    %v7160 = vpop.f32.mrb[0].mxu0
    %v7161 = vpop.f32.mrb[0].mxu0
    %7162 = vdwg.mxu0
    %v7163 = vadd.f32 %v6660, %v7157
    %v7164 = vadd.f32 %v6661, %v7159
    %v7165 = vld [vmem:[#allocation16] sm:$0x3]
    %v7167 = vlaneseq
    %v7168 = vshrl.u32 %v7167, 7
    %v7169 = vsub.s32 0, %v7168
    %v7170 = vrot.slane %v7165, %v7169
    %v7171 = vlaneseq
    %v7172 = vshrl.u32 %v7171, 7
    %v7173 = vsub.s32 1, %v7172
    %v7174 = vrot.slane %v7165, %v7173
    %v7177 = vadd.f32 %v7163, %v7170
    %v7178 = vadd.f32 %v7164, %v7174
    %v7179 = vmax.f32 %v7177, 0.0
    %v7180 = vmax.f32 %v7178, 0.0
    %v7181 = vpack.c.bf16 %v7179, %v7179
    %v7182 = vpack.c.bf16 %v7180, %v7180
    %v7183 = vld [vmem:[#allocation17] sm:$0xf]
    %v7184 = vld [vmem:[#allocation17 + $0x4] sm:$0xf]
    %v7185 = vld [vmem:[#allocation17 + $0x8] sm:$0xf]
    %v7186 = vld [vmem:[#allocation17 + $0xc] sm:$0xf]
    %v7187 = vld [vmem:[#allocation17 + $0x10] sm:$0xf]
    %v7188 = vld [vmem:[#allocation17 + $0x14] sm:$0xf]
    %v7189 = vld [vmem:[#allocation17 + $0x18] sm:$0xf]
    %v7190 = vld [vmem:[#allocation17 + $0x1c] sm:$0xf]
    %v7191 = vld [vmem:[#allocation17 + $0x20] sm:$0xf]
    %v7192 = vld [vmem:[#allocation17 + $0x24] sm:$0xf]
    %v7193 = vld [vmem:[#allocation17 + $0x28] sm:$0xf]
    %v7194 = vld [vmem:[#allocation17 + $0x2c] sm:$0xf]
    %v7195 = vld [vmem:[#allocation17 + $0x30] sm:$0xf]
    %v7196 = vld [vmem:[#allocation17 + $0x34] sm:$0xf]
    %v7197 = vld [vmem:[#allocation17 + $0x38] sm:$0xf]
    %v7198 = vld [vmem:[#allocation17 + $0x3c] sm:$0xf]
    %v7199 = vld [vmem:[#allocation17 + $0x40] sm:$0xf]
    %v7200 = vld [vmem:[#allocation17 + $0x44] sm:$0xf]
    %v7201 = vld [vmem:[#allocation17 + $0x48] sm:$0xf]
    %v7202 = vld [vmem:[#allocation17 + $0x4c] sm:$0xf]
    %v7203 = vld [vmem:[#allocation17 + $0x50] sm:$0xf]
    %v7204 = vld [vmem:[#allocation17 + $0x54] sm:$0xf]
    %v7205 = vld [vmem:[#allocation17 + $0x58] sm:$0xf]
    %v7206 = vld [vmem:[#allocation17 + $0x5c] sm:$0xf]
    %v7207 = vld [vmem:[#allocation17 + $0x60] sm:$0xf]
    %v7208 = vld [vmem:[#allocation17 + $0x64] sm:$0xf]
    %v7209 = vld [vmem:[#allocation17 + $0x68] sm:$0xf]
    %v7210 = vld [vmem:[#allocation17 + $0x6c] sm:$0xf]
    %v7211 = vld [vmem:[#allocation17 + $0x70] sm:$0xf]
    %v7212 = vld [vmem:[#allocation17 + $0x74] sm:$0xf]
    %v7213 = vld [vmem:[#allocation17 + $0x78] sm:$0xf]
    %v7214 = vld [vmem:[#allocation17 + $0x7c] sm:$0xf]
    %v7215 = vld [vmem:[#allocation19] sm:$0x1]
    %v7217 = vlaneseq
    %v7218 = vshrl.u32 %v7217, 7
    %v7219 = vsub.s32 0, %v7218
    %v7220 = vrot.slane %v7215, %v7219
    %v7254 = vunpack.c.l.b16 %v7183
    %v7255 = vunpack.c.l.b16 %v7184
    %v7256 = vunpack.c.l.b16 %v7185
    %v7257 = vunpack.c.l.b16 %v7186
    %v7258 = vunpack.c.l.b16 %v7187
    %v7259 = vunpack.c.l.b16 %v7188
    %v7260 = vunpack.c.l.b16 %v7189
    %v7261 = vunpack.c.l.b16 %v7190
    %v7262 = vunpack.c.l.b16 %v7191
    %v7263 = vunpack.c.l.b16 %v7192
    %v7264 = vunpack.c.l.b16 %v7193
    %v7265 = vunpack.c.l.b16 %v7194
    %v7266 = vunpack.c.l.b16 %v7195
    %v7267 = vunpack.c.l.b16 %v7196
    %v7268 = vunpack.c.l.b16 %v7197
    %v7269 = vunpack.c.l.b16 %v7198
    %v7270 = vunpack.c.l.b16 %v7199
    %v7271 = vunpack.c.l.b16 %v7200
    %v7272 = vunpack.c.l.b16 %v7201
    %v7273 = vunpack.c.l.b16 %v7202
    %v7274 = vunpack.c.l.b16 %v7203
    %v7275 = vunpack.c.l.b16 %v7204
    %v7276 = vunpack.c.l.b16 %v7205
    %v7277 = vunpack.c.l.b16 %v7206
    %v7278 = vunpack.c.l.b16 %v7207
    %v7279 = vunpack.c.l.b16 %v7208
    %v7280 = vunpack.c.l.b16 %v7209
    %v7281 = vunpack.c.l.b16 %v7210
    %v7282 = vunpack.c.l.b16 %v7211
    %v7283 = vunpack.c.l.b16 %v7212
    %v7284 = vunpack.c.l.b16 %v7213
    %v7285 = vunpack.c.l.b16 %v7214
    %v7286 = vpack.c.b16 %v7255, %v7254
    %v7287 = vpack.c.b16 %v7257, %v7256
    %v7288 = vpack.c.b16 %v7259, %v7258
    %v7289 = vpack.c.b16 %v7261, %v7260
    %v7290 = vpack.c.b16 %v7263, %v7262
    %v7291 = vpack.c.b16 %v7265, %v7264
    %v7292 = vpack.c.b16 %v7267, %v7266
    %v7293 = vpack.c.b16 %v7269, %v7268
    %v7294 = vpack.c.b16 %v7271, %v7270
    %v7295 = vpack.c.b16 %v7273, %v7272
    %v7296 = vpack.c.b16 %v7275, %v7274
    %v7297 = vpack.c.b16 %v7277, %v7276
    %v7298 = vpack.c.b16 %v7279, %v7278
    %v7299 = vpack.c.b16 %v7281, %v7280
    %v7300 = vpack.c.b16 %v7283, %v7282
    %v7301 = vpack.c.b16 %v7285, %v7284
    %7318 = vmatprep.subr.bf16.mxu0 0
    %7319 = vmatpush1.bf16.msra.mxu0 %v7286
    %7320 = vmatprep.subr.bf16.mxu0 0
    %7321 = vmatpush1.bf16.msra.mxu0 %v7287
    %7322 = vmatprep.subr.bf16.mxu0 0
    %7323 = vmatpush1.bf16.msra.mxu0 %v7288
    %7324 = vmatprep.subr.bf16.mxu0 0
    %7325 = vmatpush1.bf16.msra.mxu0 %v7289
    %7326 = vmatprep.subr.bf16.mxu0 0
    %7327 = vmatpush1.bf16.msra.mxu0 %v7290
    %7328 = vmatprep.subr.bf16.mxu0 0
    %7329 = vmatpush1.bf16.msra.mxu0 %v7291
    %7330 = vmatprep.subr.bf16.mxu0 0
    %7331 = vmatpush1.bf16.msra.mxu0 %v7292
    %7332 = vmatprep.subr.bf16.mxu0 0
    %7333 = vmatpush1.bf16.msra.mxu0 %v7293
    %7334 = vmatprep.subr.bf16.mxu0 0
    %7335 = vmatpush1.bf16.msra.mxu0 %v7294
    %7336 = vmatprep.subr.bf16.mxu0 0
    %7337 = vmatpush1.bf16.msra.mxu0 %v7295
    %7338 = vmatprep.subr.bf16.mxu0 0
    %7339 = vmatpush1.bf16.msra.mxu0 %v7296
    %7340 = vmatprep.subr.bf16.mxu0 0
    %7341 = vmatpush1.bf16.msra.mxu0 %v7297
    %7342 = vmatprep.subr.bf16.mxu0 0
    %7343 = vmatpush1.bf16.msra.mxu0 %v7298
    %7344 = vmatprep.subr.bf16.mxu0 0
    %7345 = vmatpush1.bf16.msra.mxu0 %v7299
    %7346 = vmatprep.subr.bf16.mxu0 0
    %7347 = vmatpush1.bf16.msra.mxu0 %v7300
    %7348 = vmatprep.subr.bf16.mxu0 0
    %7349 = vmatpush1.bf16.msra.mxu0 %v7301
    %7350 = vmatprep.mubr.bf16.mxu0 %v7182
    %7351 = vmatmul.mubr.bf16.gmra.mrb[0].mxu0 %v7181
    %v7352 = vpop.f32.mrb[0].mxu0
    %v7353 = vadd.f32 %v7220, %v7352
    %v7354 = vpop.f32.mrb[0].mxu0
    %v7355 = vpop.f32.mrb[0].mxu0
    %v7356 = vpop.f32.mrb[0].mxu0
    %7357 = vdwg.mxu0
    %7358 = vst [vmem:[#allocation20] sm:$0x3] %v7353
    // Predicated region
    $region90: #{net_forward.1} parent=1 // pred_check
      _
    $region91: #{net_forward.1} parent=1 // pred_check_branch
      %7360 = sbr.rel (0) target = $region93
    $region92: #{net_forward.1} parent=1 // pred_region
      %s7362 = ssub.s32 32, 32
      %7363 = vsyncadd [#allocation4], %s7362
      %s7365 = sshll.u32 [#allocation20], 4
      %s7366 = int_to_ptr.vmem [resolvable:$true] %s7365
      %7368 = dma.vmem_to_hbm [thread:$0]  %s7366, 32, %s11, [#allocation4]
    $region93: #{net_forward.1} parent=1 // pred_fallthru
      _
    // Predicated region
    $region94: #{net_forward.1} parent=1 // pred_check
      _
    $region95: #{net_forward.1} parent=1 // pred_check_branch
      %7370 = sbr.rel (0) target = $region97
    $region96: #{net_forward.1} parent=1 // pred_region
      %7371 = dma.done [#allocation4], 32
    $region97: #{net_forward.1} parent=1 // pred_fallthru
      _
    %7372 = vsyncpa [#allocation3], 1
    %7373 = vsyncpa [#allocation6], 1
    %7374 = vsyncpa [#allocation9], 1
    %7375 = vsyncpa [#allocation12], 1
    %7376 = vsyncpa [#allocation15], 1
    %7377 = vsyncpa [#allocation18], 1
    %7378 = vsyncpa [#allocation4], 1

</llo_original>
